<compile_context>
chip_gen: v7x
topology: tpu7x:2x2x1
jax: 0.10.0
libtpu: 0.0.40
codegen_flags: <defaults>
</compile_context>

<pallas_src>
import functools

import numpy as np

import jax
import jax.numpy as jnp
from jax import lax
from jax.experimental import pallas as pl
from jax.experimental.pallas import tpu as pltpu

EPS = 1e-3


def _fused_kernel(x_ref, w1_ref, g1_ref, b1_ref, w2s_ref, g2_ref, b2_ref,
                  masks_ref, o_ref, act_pad_ref, *, P, Pp, KW, Cout):
    pad = (KW - 1) // 2
    inv_p = 1.0 / P  # BatchNorm divisor uses the true pixel count

    # ---- conv1 (1x1): channel-major bf16 matmul on the MXU, f32 accum ----
    y1 = jnp.dot(w1_ref[...], x_ref[...],
                 preferred_element_type=jnp.float32)            # (Cmid, P)

    # ---- BN1 (batch stats, biased centered variance) + ReLU ----
    m1 = jnp.sum(y1, axis=1, keepdims=True) * inv_p
    d1 = y1 - m1
    v1 = jnp.sum(d1 * d1, axis=1, keepdims=True) * inv_p
    s1 = g1_ref[...] * lax.rsqrt(v1 + EPS)
    act = jnp.maximum(d1 * s1 + b1_ref[...], 0.0).astype(jnp.bfloat16)

    # Zero-pad the activation along the lane axis to Pp (multiple of 128) so
    # the conv2 width shifts are lane rotations on a lane-dense array.
    act_pad_ref[...] = jnp.zeros(act_pad_ref.shape, act_pad_ref.dtype)
    act_pad_ref[:, :P] = act

    # ---- conv2 (1x7, pad 3): one stacked matmul ... ----
    t_all = jnp.dot(w2s_ref[...], act_pad_ref[...],
                    preferred_element_type=jnp.float32)         # (KW*Cout, Pp)

    # ... then roll-after-matmul accumulation in f32:
    #   y2[:, p] = sum_kw T_kw[:, p + dw] * mask_kw[p],  dw = kw - pad.
    # Precomputed masks zero out-of-row taps and all padded columns.
    y2 = t_all[pad * Cout:(pad + 1) * Cout, :] * masks_ref[pad:pad + 1, :]
    for kw in range(KW):
        if kw == pad:
            continue
        dw = kw - pad
        t_kw = t_all[kw * Cout:(kw + 1) * Cout, :]
        shifted = pltpu.roll(t_kw, shift=(-dw) % Pp, axis=1)   # out[p]=t[p+dw]
        y2 = y2 + shifted * masks_ref[kw:kw + 1, :]

    # ---- BN2 (padded columns of y2 are exactly zero; divide by true P) ----
    valid = masks_ref[pad:pad + 1, :]
    m2 = jnp.sum(y2, axis=1, keepdims=True) * inv_p
    d2 = (y2 - m2) * valid
    v2 = jnp.sum(d2 * d2, axis=1, keepdims=True) * inv_p
    s2 = g2_ref[...] * lax.rsqrt(v2 + EPS)
    o_ref[...] = (d2 * s2 + b2_ref[...])[:, :P]


def make_fused_forward(w1, g1, b1, w2, g2, b2, input_shape):
    """Preprocess weights/constants ONCE and return a jitted forward(x_nchw)."""
    N, Cin, H, W = input_shape
    Cmid = w1.shape[0]
    Cout, _, _, KW = w2.shape
    pad = (KW - 1) // 2
    P = N * H * W
    Pp = ((P + 127) // 128) * 128            # lane-dense padded width

    # ---- one-time weight preprocessing (hoisted off the hot path) ----
    w1m = jnp.asarray(w1).reshape(Cmid, Cin).astype(jnp.bfloat16)
    # w2s[kw*Cout + o, c] = w2[o, c, 0, kw]
    w2s = (jnp.transpose(jnp.asarray(w2)[:, :, 0, :], (2, 0, 1))
           .reshape(KW * Cout, Cmid).astype(jnp.bfloat16))
    g1c = jnp.asarray(g1, jnp.float32).reshape(Cmid, 1)
    b1c = jnp.asarray(b1, jnp.float32).reshape(Cmid, 1)
    g2c = jnp.asarray(g2, jnp.float32).reshape(Cout, 1)
    b2c = jnp.asarray(b2, jnp.float32).reshape(Cout, 1)

    # Boundary masks: masks[kw, p] = 1 iff p < P and 0 <= (p mod W) + dw < W.
    p_idx = np.arange(Pp)
    w_of_p = p_idx % W
    in_range = p_idx < P
    masks_np = np.zeros((KW, Pp), np.float32)
    for kw in range(KW):
        dw = kw - pad
        masks_np[kw] = (in_range & (w_of_p + dw >= 0)
                        & (w_of_p + dw < W)).astype(np.float32)
    masks = jnp.asarray(masks_np)

    flops = 2 * Cmid * Cin * P + 2 * (KW * Cout) * Cmid * Pp
    bytes_accessed = (Cin * P * 2 + w1m.size * 2 + w2s.size * 2
                      + masks.size * 4 + 2 * (Cmid + Cout) * 4 + Cout * P * 4)

    vmem = pl.BlockSpec(memory_space=pltpu.MemorySpace.VMEM)
    call = pl.pallas_call(
        functools.partial(_fused_kernel, P=P, Pp=Pp, KW=KW, Cout=Cout),
        out_shape=jax.ShapeDtypeStruct((Cout, P), jnp.float32),
        in_specs=[vmem] * 8,
        out_specs=vmem,
        scratch_shapes=[pltpu.VMEM((Cmid, Pp), jnp.bfloat16)],
        cost_estimate=pl.CostEstimate(flops=flops,
                                      transcendentals=Cmid + Cout,
                                      bytes_accessed=bytes_accessed),
    )

    def forward(x_nchw):
        # Channel-major flattening: for N == 1 this is a pure reshape of NCHW.
        if N == 1:
            x2d = x_nchw.reshape(Cin, P)
        else:
            x2d = jnp.transpose(x_nchw, (1, 0, 2, 3)).reshape(Cin, P)
        out2d = call(x2d.astype(jnp.bfloat16),
                     w1m, g1c, b1c, w2s, g2c, b2c, masks)
        if N == 1:
            return out2d.reshape(1, Cout, H, W)
        return jnp.transpose(out2d.reshape(Cout, N, H, W), (1, 0, 2, 3))

    return jax.jit(forward)


def fused_forward(x_nchw, w1, g1, b1, w2, g2, b2):
    """One-shot convenience wrapper.  For repeated calls with fixed weights use
    make_fused_forward() so the weight preprocessing happens only once."""
    return make_fused_forward(w1, g1, b1, w2, g2, b2, x_nchw.shape)(x_nchw)


def _reference(x, w1, g1, b1, w2, g2, b2):
    """Pure-JAX reference for the module forward (training-mode BatchNorm)."""
    dn = ('NCHW', 'OIHW', 'NCHW')

    def bn(y, g, b):
        m = jnp.mean(y, axis=(0, 2, 3), keepdims=True)
        v = jnp.mean((y - m) ** 2, axis=(0, 2, 3), keepdims=True)
        return ((y - m) * lax.rsqrt(v + EPS) * g.reshape(1, -1, 1, 1)
                + b.reshape(1, -1, 1, 1))

    padw = (w2.shape[-1] - 1) // 2
    y1 = lax.conv_general_dilated(x, w1, (1, 1), [(0, 0), (0, 0)],
                                  dimension_numbers=dn)
    y1 = jnp.maximum(bn(y1, g1, b1), 0.0)
    y2 = lax.conv_general_dilated(y1, w2, (1, 1), [(0, 0), (padw, padw)],
                                  dimension_numbers=dn)
    return bn(y2, g2, b2)


if __name__ == "__main__":
    key = jax.random.PRNGKey(0)
    ks = jax.random.split(key, 7)

    N, Cin, H, W = 1, 768, 12, 12        # matches the module's input x177
    Cmid, Cout, KW = 160, 160, 7

    x = jax.random.normal(ks[0], (N, Cin, H, W), jnp.float32)
    # Deterministic synthetic parameters (shapes from the module __init__).
    w1 = 0.02 * jax.random.normal(ks[1], (Cmid, Cin, 1, 1), jnp.float32)
    g1 = 1.0 + 0.1 * jax.random.normal(ks[2], (Cmid,), jnp.float32)
    b1 = 0.1 * jax.random.normal(ks[3], (Cmid,), jnp.float32)
    w2 = 0.02 * jax.random.normal(ks[4], (Cout, Cmid, 1, KW), jnp.float32)
    g2 = 1.0 + 0.1 * jax.random.normal(ks[5], (Cout,), jnp.float32)
    b2 = 0.1 * jax.random.normal(ks[6], (Cout,), jnp.float32)

    fwd = make_fused_forward(w1, g1, b1, w2, g2, b2, x.shape)
    out = fwd(x)
    jax.block_until_ready(out)
    assert out.shape == (N, Cout, H, W), out.shape
    assert out.dtype == jnp.float32

    # Loose sanity check against a pure-JAX reference (bf16 MXU operands mean
    # ~1e-2-level deviations are expected and accepted).
    ref = _reference(x, w1, g1, b1, w2, g2, b2)
    max_err = float(jnp.max(jnp.abs(out - ref)))
    mean_err = float(jnp.mean(jnp.abs(out - ref)))
    assert max_err < 0.5 and mean_err < 0.1, (max_err, mean_err)

    print("KERNEL_OK")
</pallas_src>

<mosaic_0001>
module attributes {stable_mosaic.version = 11 : i64} {
  func.func @_fused_kernel(%arg0: memref<768x144xbf16, #tpu.memory_space<vmem>>, %arg1: memref<160x768xbf16, #tpu.memory_space<vmem>>, %arg2: memref<160x1xf32, #tpu.memory_space<vmem>>, %arg3: memref<160x1xf32, #tpu.memory_space<vmem>>, %arg4: memref<1120x160xbf16, #tpu.memory_space<vmem>>, %arg5: memref<160x1xf32, #tpu.memory_space<vmem>>, %arg6: memref<160x1xf32, #tpu.memory_space<vmem>>, %arg7: memref<7x256xf32, #tpu.memory_space<vmem>>, %arg8: memref<160x144xf32, #tpu.memory_space<vmem>>, %arg9: memref<160x256xbf16, #tpu.memory_space<vmem>>) attributes {dimension_semantics = [], scalar_prefetch = 0 : i64, scratch_operands = 1 : i64, tpu.core_type = #tpu.core_type<tc>} {
    %c0 = arith.constant 0 : index
    %c0_0 = arith.constant 0 : index
    %0 = vector.load %arg1[%c0, %c0_0] : memref<160x768xbf16, #tpu.memory_space<vmem>>, vector<160x768xbf16>
    %c0_1 = arith.constant 0 : index
    %c0_2 = arith.constant 0 : index
    %1 = vector.load %arg0[%c0_1, %c0_2] : memref<768x144xbf16, #tpu.memory_space<vmem>>, vector<768x144xbf16>
    %cst = arith.constant dense<0.000000e+00> : vector<160x144xf32>
    %2 = tpu.matmul %0, %1, %cst {dimension_numbers = #tpu.dot_dimension_numbers<[1], [0], [0], [1], [0, 0, 1, 1], [], []>} : vector<160x768xbf16>, vector<768x144xbf16>, vector<160x144xf32> -> vector<160x144xf32>
    %cst_3 = arith.constant dense<0.000000e+00> : vector<160xf32>
    %3 = vector.multi_reduction <add>, %2, %cst_3 [1] : vector<160x144xf32> to vector<160xf32>
    %4 = vector.shape_cast %3 : vector<160xf32> to vector<160x1xf32>
    %cst_4 = arith.constant 0.0069444445 : f32
    %5 = vector.broadcast %cst_4 : f32 to vector<160x1xf32>
    %6 = arith.mulf %4, %5 : vector<160x1xf32>
    %7 = vector.broadcast %6 : vector<160x1xf32> to vector<160x144xf32>
    %8 = arith.subf %2, %7 : vector<160x144xf32>
    %9 = arith.mulf %8, %8 : vector<160x144xf32>
    %cst_5 = arith.constant dense<0.000000e+00> : vector<160xf32>
    %10 = vector.multi_reduction <add>, %9, %cst_5 [1] : vector<160x144xf32> to vector<160xf32>
    %11 = vector.shape_cast %10 : vector<160xf32> to vector<160x1xf32>
    %cst_6 = arith.constant 0.0069444445 : f32
    %12 = vector.broadcast %cst_6 : f32 to vector<160x1xf32>
    %13 = arith.mulf %11, %12 : vector<160x1xf32>
    %c0_7 = arith.constant 0 : index
    %c0_8 = arith.constant 0 : index
    %14 = vector.load %arg2[%c0_7, %c0_8] : memref<160x1xf32, #tpu.memory_space<vmem>>, vector<160x1xf32>
    %cst_9 = arith.constant 1.000000e-03 : f32
    %15 = vector.broadcast %cst_9 : f32 to vector<160x1xf32>
    %16 = arith.addf %13, %15 : vector<160x1xf32>
    %17 = math.rsqrt %16 : vector<160x1xf32>
    %18 = arith.mulf %14, %17 : vector<160x1xf32>
    %19 = vector.broadcast %18 : vector<160x1xf32> to vector<160x144xf32>
    %20 = arith.mulf %8, %19 : vector<160x144xf32>
    %c0_10 = arith.constant 0 : index
    %c0_11 = arith.constant 0 : index
    %21 = vector.load %arg3[%c0_10, %c0_11] : memref<160x1xf32, #tpu.memory_space<vmem>>, vector<160x1xf32>
    %22 = vector.broadcast %21 : vector<160x1xf32> to vector<160x144xf32>
    %23 = arith.addf %20, %22 : vector<160x144xf32>
    %cst_12 = arith.constant 0.000000e+00 : f32
    %24 = vector.broadcast %cst_12 : f32 to vector<160x144xf32>
    %25 = arith.maximumf %23, %24 : vector<160x144xf32>
    %26 = arith.truncf %25 : vector<160x144xf32> to vector<160x144xbf16>
    %cst_13 = arith.constant 0.000000e+00 : bf16
    %27 = vector.broadcast %cst_13 : bf16 to vector<160x256xbf16>
    %c0_14 = arith.constant 0 : index
    %c0_15 = arith.constant 0 : index
    %28 = vector.load %arg9[%c0_14, %c0_15] : memref<160x256xbf16, #tpu.memory_space<vmem>>, vector<160x256xbf16>
    tpu.vector_store %arg9[%c0_14, %c0_15], %27 {strides = array<i32>} : memref<160x256xbf16, #tpu.memory_space<vmem>>, vector<160x256xbf16>,
    %c0_16 = arith.constant 0 : index
    %c0_17 = arith.constant 0 : index
    %29 = vector.load %arg9[%c0_16, %c0_17] : memref<160x256xbf16, #tpu.memory_space<vmem>>, vector<160x144xbf16>
    tpu.vector_store %arg9[%c0_16, %c0_17], %26 {strides = array<i32>} : memref<160x256xbf16, #tpu.memory_space<vmem>>, vector<160x144xbf16>,
    %c0_18 = arith.constant 0 : index
    %c0_19 = arith.constant 0 : index
    %30 = vector.load %arg4[%c0_18, %c0_19] : memref<1120x160xbf16, #tpu.memory_space<vmem>>, vector<1120x160xbf16>
    %c0_20 = arith.constant 0 : index
    %c0_21 = arith.constant 0 : index
    %31 = vector.load %arg9[%c0_20, %c0_21] : memref<160x256xbf16, #tpu.memory_space<vmem>>, vector<160x256xbf16>
    %cst_22 = arith.constant dense<0.000000e+00> : vector<1120x256xf32>
    %32 = tpu.matmul %30, %31, %cst_22 {dimension_numbers = #tpu.dot_dimension_numbers<[1], [0], [0], [1], [0, 0, 1, 1], [], []>} : vector<1120x160xbf16>, vector<160x256xbf16>, vector<1120x256xf32> -> vector<1120x256xf32>
    %33 = vector.extract_strided_slice %32 {offsets = [480, 0], sizes = [160, 256], strides = [1, 1]} : vector<1120x256xf32> to vector<160x256xf32>
    %c3 = arith.constant 3 : index
    %c0_23 = arith.constant 0 : index
    %34 = vector.load %arg7[%c3, %c0_23] : memref<7x256xf32, #tpu.memory_space<vmem>>, vector<1x256xf32>
    %35 = vector.broadcast %34 : vector<1x256xf32> to vector<160x256xf32>
    %36 = arith.mulf %33, %35 : vector<160x256xf32>
    %37 = vector.extract_strided_slice %32 {offsets = [0, 0], sizes = [160, 256], strides = [1, 1]} : vector<1120x256xf32> to vector<160x256xf32>
    %c3_i32 = arith.constant 3 : i32
    %38 = tpu.dynamic_rotate %37 by %c3_i32 dim 1 : vector<160x256xf32>, i32 -> vector<160x256xf32>
    %c0_24 = arith.constant 0 : index
    %c0_25 = arith.constant 0 : index
    %39 = vector.load %arg7[%c0_24, %c0_25] : memref<7x256xf32, #tpu.memory_space<vmem>>, vector<1x256xf32>
    %40 = vector.broadcast %39 : vector<1x256xf32> to vector<160x256xf32>
    %41 = arith.mulf %38, %40 : vector<160x256xf32>
    %42 = arith.addf %36, %41 : vector<160x256xf32>
    %43 = vector.extract_strided_slice %32 {offsets = [160, 0], sizes = [160, 256], strides = [1, 1]} : vector<1120x256xf32> to vector<160x256xf32>
    %c2_i32 = arith.constant 2 : i32
    %44 = tpu.dynamic_rotate %43 by %c2_i32 dim 1 : vector<160x256xf32>, i32 -> vector<160x256xf32>
    %c1 = arith.constant 1 : index
    %c0_26 = arith.constant 0 : index
    %45 = vector.load %arg7[%c1, %c0_26] : memref<7x256xf32, #tpu.memory_space<vmem>>, vector<1x256xf32>
    %46 = vector.broadcast %45 : vector<1x256xf32> to vector<160x256xf32>
    %47 = arith.mulf %44, %46 : vector<160x256xf32>
    %48 = arith.addf %42, %47 : vector<160x256xf32>
    %49 = vector.extract_strided_slice %32 {offsets = [320, 0], sizes = [160, 256], strides = [1, 1]} : vector<1120x256xf32> to vector<160x256xf32>
    %c1_i32 = arith.constant 1 : i32
    %50 = tpu.dynamic_rotate %49 by %c1_i32 dim 1 : vector<160x256xf32>, i32 -> vector<160x256xf32>
    %c2 = arith.constant 2 : index
    %c0_27 = arith.constant 0 : index
    %51 = vector.load %arg7[%c2, %c0_27] : memref<7x256xf32, #tpu.memory_space<vmem>>, vector<1x256xf32>
    %52 = vector.broadcast %51 : vector<1x256xf32> to vector<160x256xf32>
    %53 = arith.mulf %50, %52 : vector<160x256xf32>
    %54 = arith.addf %48, %53 : vector<160x256xf32>
    %55 = vector.extract_strided_slice %32 {offsets = [640, 0], sizes = [160, 256], strides = [1, 1]} : vector<1120x256xf32> to vector<160x256xf32>
    %c255_i32 = arith.constant 255 : i32
    %56 = tpu.dynamic_rotate %55 by %c255_i32 dim 1 : vector<160x256xf32>, i32 -> vector<160x256xf32>
    %c4 = arith.constant 4 : index
    %c0_28 = arith.constant 0 : index
    %57 = vector.load %arg7[%c4, %c0_28] : memref<7x256xf32, #tpu.memory_space<vmem>>, vector<1x256xf32>
    %58 = vector.broadcast %57 : vector<1x256xf32> to vector<160x256xf32>
    %59 = arith.mulf %56, %58 : vector<160x256xf32>
    %60 = arith.addf %54, %59 : vector<160x256xf32>
    %61 = vector.extract_strided_slice %32 {offsets = [800, 0], sizes = [160, 256], strides = [1, 1]} : vector<1120x256xf32> to vector<160x256xf32>
    %c254_i32 = arith.constant 254 : i32
    %62 = tpu.dynamic_rotate %61 by %c254_i32 dim 1 : vector<160x256xf32>, i32 -> vector<160x256xf32>
    %c5 = arith.constant 5 : index
    %c0_29 = arith.constant 0 : index
    %63 = vector.load %arg7[%c5, %c0_29] : memref<7x256xf32, #tpu.memory_space<vmem>>, vector<1x256xf32>
    %64 = vector.broadcast %63 : vector<1x256xf32> to vector<160x256xf32>
    %65 = arith.mulf %62, %64 : vector<160x256xf32>
    %66 = arith.addf %60, %65 : vector<160x256xf32>
    %67 = vector.extract_strided_slice %32 {offsets = [960, 0], sizes = [160, 256], strides = [1, 1]} : vector<1120x256xf32> to vector<160x256xf32>
    %c253_i32 = arith.constant 253 : i32
    %68 = tpu.dynamic_rotate %67 by %c253_i32 dim 1 : vector<160x256xf32>, i32 -> vector<160x256xf32>
    %c6 = arith.constant 6 : index
    %c0_30 = arith.constant 0 : index
    %69 = vector.load %arg7[%c6, %c0_30] : memref<7x256xf32, #tpu.memory_space<vmem>>, vector<1x256xf32>
    %70 = vector.broadcast %69 : vector<1x256xf32> to vector<160x256xf32>
    %71 = arith.mulf %68, %70 : vector<160x256xf32>
    %72 = arith.addf %66, %71 : vector<160x256xf32>
    %c3_31 = arith.constant 3 : index
    %c0_32 = arith.constant 0 : index
    %73 = vector.load %arg7[%c3_31, %c0_32] : memref<7x256xf32, #tpu.memory_space<vmem>>, vector<1x256xf32>
    %cst_33 = arith.constant dense<0.000000e+00> : vector<160xf32>
    %74 = vector.multi_reduction <add>, %72, %cst_33 [1] : vector<160x256xf32> to vector<160xf32>
    %75 = vector.shape_cast %74 : vector<160xf32> to vector<160x1xf32>
    %cst_34 = arith.constant 0.0069444445 : f32
    %76 = vector.broadcast %cst_34 : f32 to vector<160x1xf32>
    %77 = arith.mulf %75, %76 : vector<160x1xf32>
    %78 = vector.broadcast %77 : vector<160x1xf32> to vector<160x256xf32>
    %79 = arith.subf %72, %78 : vector<160x256xf32>
    %80 = vector.broadcast %73 : vector<1x256xf32> to vector<160x256xf32>
    %81 = arith.mulf %79, %80 : vector<160x256xf32>
    %82 = arith.mulf %81, %81 : vector<160x256xf32>
    %cst_35 = arith.constant dense<0.000000e+00> : vector<160xf32>
    %83 = vector.multi_reduction <add>, %82, %cst_35 [1] : vector<160x256xf32> to vector<160xf32>
    %84 = vector.shape_cast %83 : vector<160xf32> to vector<160x1xf32>
    %cst_36 = arith.constant 0.0069444445 : f32
    %85 = vector.broadcast %cst_36 : f32 to vector<160x1xf32>
    %86 = arith.mulf %84, %85 : vector<160x1xf32>
    %c0_37 = arith.constant 0 : index
    %c0_38 = arith.constant 0 : index
    %87 = vector.load %arg5[%c0_37, %c0_38] : memref<160x1xf32, #tpu.memory_space<vmem>>, vector<160x1xf32>
    %cst_39 = arith.constant 1.000000e-03 : f32
    %88 = vector.broadcast %cst_39 : f32 to vector<160x1xf32>
    %89 = arith.addf %86, %88 : vector<160x1xf32>
    %90 = math.rsqrt %89 : vector<160x1xf32>
    %91 = arith.mulf %87, %90 : vector<160x1xf32>
    %92 = vector.broadcast %91 : vector<160x1xf32> to vector<160x256xf32>
    %93 = arith.mulf %81, %92 : vector<160x256xf32>
    %c0_40 = arith.constant 0 : index
    %c0_41 = arith.constant 0 : index
    %94 = vector.load %arg6[%c0_40, %c0_41] : memref<160x1xf32, #tpu.memory_space<vmem>>, vector<160x1xf32>
    %95 = vector.broadcast %94 : vector<160x1xf32> to vector<160x256xf32>
    %96 = arith.addf %93, %95 : vector<160x256xf32>
    %97 = vector.extract_strided_slice %96 {offsets = [0, 0], sizes = [160, 144], strides = [1, 1]} : vector<160x256xf32> to vector<160x144xf32>
    %c0_42 = arith.constant 0 : index
    %c0_43 = arith.constant 0 : index
    %98 = vector.load %arg8[%c0_42, %c0_43] : memref<160x144xf32, #tpu.memory_space<vmem>>, vector<160x144xf32>
    tpu.vector_store %arg8[%c0_42, %c0_43], %97 {strides = array<i32>} : memref<160x144xf32, #tpu.memory_space<vmem>>, vector<160x144xf32>,
    return
  }
}

</mosaic_0001>

<llo_original>
// kernel: forward.1
$region0: #{forward.1}
  #allocation0 [shape = 'u32[]', space=smem, size = 0x4, offset = 0x4, fixed_abs, tag = 'smem constant byte address 0x4 - core index']
  #allocation1 [shape = 'u32[144,128]{1,0:T(1,128)}', space=vmem, size = 0x12000, scoped, tag = 'internal scratch']
  #allocation2 [shape = 'bf16[160,256]{1,0:T(16,128)(2,1)}', space=vmem, size = 0x14000, scoped, tag = 'scratch operand']
  %s0 = inlined_call_operand.vmem [shape: bf16[768,144], index: 0, kind: input, shape index: {}]
  %s1 = inlined_call_operand.vmem [shape: bf16[160,768], index: 1, kind: input, shape index: {}]
  %s2 = inlined_call_operand.vmem [shape: f32[160,1], index: 2, kind: input, shape index: {}]
  %s3 = inlined_call_operand.vmem [shape: f32[160,1], index: 3, kind: input, shape index: {}]
  %s4 = inlined_call_operand.vmem [shape: bf16[1120,160], index: 4, kind: input, shape index: {}]
  %s5 = inlined_call_operand.vmem [shape: f32[160,1], index: 5, kind: input, shape index: {}]
  %s6 = inlined_call_operand.vmem [shape: f32[160,1], index: 6, kind: input, shape index: {}]
  %s7 = inlined_call_operand.vmem [shape: f32[7,256], index: 7, kind: input, shape index: {}]
  %s8 = inlined_call_operand.vmem [shape: f32[160,144], index: 8, kind: output, shape index: {}]
  %s9 = sld [smem:[#allocation0]]
  $region42: #{forward.1} parent=0
    _
  %s11 = ssub.s32 1, %s9
  %s12 = scalar_select 0, %s11, %s9
  // Predicated region
  $region2: #{forward.1} parent=0 // pred_check
    _
  $region3: #{forward.1} parent=0 // pred_check_branch
    %14 = sbr.rel (0) target = $region5
  $region4: #{forward.1} parent=0 // pred_region
    _
  $region5: #{forward.1} parent=0 // pred_fallthru
    _
  // Predicated region
  $region6: #{forward.1} parent=0 // pred_check
    _
  $region7: #{forward.1} parent=0 // pred_check_branch
    %16 = sbr.rel (0) target = $region9
  $region8: #{forward.1} parent=0 // pred_region
    _
  $region9: #{forward.1} parent=0 // pred_fallthru
    _
  // Predicated region
  $region10: #{forward.1} parent=0 // pred_check
    _
  $region11: #{forward.1} parent=0 // pred_check_branch
    %18 = sbr.rel (0) target = $region13
  $region12: #{forward.1} parent=0 // pred_region
    _
  $region13: #{forward.1} parent=0 // pred_fallthru
    _
  // Predicated region
  $region14: #{forward.1} parent=0 // pred_check
    _
  $region15: #{forward.1} parent=0 // pred_check_branch
    %20 = sbr.rel (0) target = $region17
  $region16: #{forward.1} parent=0 // pred_region
    _
  $region17: #{forward.1} parent=0 // pred_fallthru
    _
  // Predicated region
  $region18: #{forward.1} parent=0 // pred_check
    _
  $region19: #{forward.1} parent=0 // pred_check_branch
    %22 = sbr.rel (0) target = $region21
  $region20: #{forward.1} parent=0 // pred_region
    _
  $region21: #{forward.1} parent=0 // pred_fallthru
    _
  // Predicated region
  $region22: #{forward.1} parent=0 // pred_check
    _
  $region23: #{forward.1} parent=0 // pred_check_branch
    %24 = sbr.rel (0) target = $region25
  $region24: #{forward.1} parent=0 // pred_region
    _
  $region25: #{forward.1} parent=0 // pred_fallthru
    _
  // Predicated region
  $region26: #{forward.1} parent=0 // pred_check
    _
  $region27: #{forward.1} parent=0 // pred_check_branch
    %26 = sbr.rel (0) target = $region29
  $region28: #{forward.1} parent=0 // pred_region
    _
  $region29: #{forward.1} parent=0 // pred_fallthru
    _
  // Predicated region
  $region30: #{forward.1} parent=0 // pred_check
    _
  $region31: #{forward.1} parent=0 // pred_check_branch
    %28 = sbr.rel (0) target = $region33
  $region32: #{forward.1} parent=0 // pred_region
    _
  $region33: #{forward.1} parent=0 // pred_fallthru
    _
  %v30 = vld [vmem:[%s1] sm:$0xff]
  %v31 = vld [vmem:[%s1 + $0x8] sm:$0xff]
  %v32 = vld [vmem:[%s1 + $0x10] sm:$0xff]
  %v33 = vld [vmem:[%s1 + $0x18] sm:$0xff]
  %v34 = vld [vmem:[%s1 + $0x20] sm:$0xff]
  %v35 = vld [vmem:[%s1 + $0x28] sm:$0xff]
  %v36 = vld [vmem:[%s1 + $0x30] sm:$0xff]
  %v37 = vld [vmem:[%s1 + $0x38] sm:$0xff]
  %v38 = vld [vmem:[%s1 + $0x40] sm:$0xff]
  %v39 = vld [vmem:[%s1 + $0x48] sm:$0xff]
  %v40 = vld [vmem:[%s1 + $0x50] sm:$0xff]
  %v41 = vld [vmem:[%s1 + $0x58] sm:$0xff]
  %v42 = vld [vmem:[%s1 + $0x60] sm:$0xff]
  %v43 = vld [vmem:[%s1 + $0x68] sm:$0xff]
  %v44 = vld [vmem:[%s1 + $0x70] sm:$0xff]
  %v45 = vld [vmem:[%s1 + $0x78] sm:$0xff]
  %v46 = vld [vmem:[%s1 + $0x80] sm:$0xff]
  %v47 = vld [vmem:[%s1 + $0x88] sm:$0xff]
  %v48 = vld [vmem:[%s1 + $0x90] sm:$0xff]
  %v49 = vld [vmem:[%s1 + $0x98] sm:$0xff]
  %v50 = vld [vmem:[%s1 + $0xa0] sm:$0xff]
  %v51 = vld [vmem:[%s1 + $0xa8] sm:$0xff]
  %v52 = vld [vmem:[%s1 + $0xb0] sm:$0xff]
  %v53 = vld [vmem:[%s1 + $0xb8] sm:$0xff]
  %v54 = vld [vmem:[%s1 + $0xc0] sm:$0xff]
  %v55 = vld [vmem:[%s1 + $0xc8] sm:$0xff]
  %v56 = vld [vmem:[%s1 + $0xd0] sm:$0xff]
  %v57 = vld [vmem:[%s1 + $0xd8] sm:$0xff]
  %v58 = vld [vmem:[%s1 + $0xe0] sm:$0xff]
  %v59 = vld [vmem:[%s1 + $0xe8] sm:$0xff]
  %v60 = vld [vmem:[%s1 + $0xf0] sm:$0xff]
  %v61 = vld [vmem:[%s1 + $0xf8] sm:$0xff]
  %v62 = vld [vmem:[%s1 + $0x100] sm:$0xff]
  %v63 = vld [vmem:[%s1 + $0x108] sm:$0xff]
  %v64 = vld [vmem:[%s1 + $0x110] sm:$0xff]
  %v65 = vld [vmem:[%s1 + $0x118] sm:$0xff]
  %v66 = vld [vmem:[%s1 + $0x120] sm:$0xff]
  %v67 = vld [vmem:[%s1 + $0x128] sm:$0xff]
  %v68 = vld [vmem:[%s1 + $0x130] sm:$0xff]
  %v69 = vld [vmem:[%s1 + $0x138] sm:$0xff]
  %v70 = vld [vmem:[%s1 + $0x140] sm:$0xff]
  %v71 = vld [vmem:[%s1 + $0x148] sm:$0xff]
  %v72 = vld [vmem:[%s1 + $0x150] sm:$0xff]
  %v73 = vld [vmem:[%s1 + $0x158] sm:$0xff]
  %v74 = vld [vmem:[%s1 + $0x160] sm:$0xff]
  %v75 = vld [vmem:[%s1 + $0x168] sm:$0xff]
  %v76 = vld [vmem:[%s1 + $0x170] sm:$0xff]
  %v77 = vld [vmem:[%s1 + $0x178] sm:$0xff]
  %v78 = vld [vmem:[%s1 + $0x180] sm:$0xff]
  %v79 = vld [vmem:[%s1 + $0x188] sm:$0xff]
  %v80 = vld [vmem:[%s1 + $0x190] sm:$0xff]
  %v81 = vld [vmem:[%s1 + $0x198] sm:$0xff]
  %v82 = vld [vmem:[%s1 + $0x1a0] sm:$0xff]
  %v83 = vld [vmem:[%s1 + $0x1a8] sm:$0xff]
  %v84 = vld [vmem:[%s1 + $0x1b0] sm:$0xff]
  %v85 = vld [vmem:[%s1 + $0x1b8] sm:$0xff]
  %v86 = vld [vmem:[%s1 + $0x1c0] sm:$0xff]
  %v87 = vld [vmem:[%s1 + $0x1c8] sm:$0xff]
  %v88 = vld [vmem:[%s1 + $0x1d0] sm:$0xff]
  %v89 = vld [vmem:[%s1 + $0x1d8] sm:$0xff]
  %v90 = vld [vmem:[%s0] sm:$0xff]
  %v91 = vld [vmem:[%s0 + $0x8] sm:$0xff]
  %v92 = vld [vmem:[%s0 + $0x10] sm:$0xff]
  %v93 = vld [vmem:[%s0 + $0x18] sm:$0xff]
  %v94 = vld [vmem:[%s0 + $0x20] sm:$0xff]
  %v95 = vld [vmem:[%s0 + $0x28] sm:$0xff]
  %v96 = vld [vmem:[%s0 + $0x30] sm:$0xff]
  %v97 = vld [vmem:[%s0 + $0x38] sm:$0xff]
  %v98 = vld [vmem:[%s0 + $0x40] sm:$0xff]
  %v99 = vld [vmem:[%s0 + $0x48] sm:$0xff]
  %v100 = vld [vmem:[%s0 + $0x50] sm:$0xff]
  %v101 = vld [vmem:[%s0 + $0x58] sm:$0xff]
  %v102 = vld [vmem:[%s0 + $0x60] sm:$0xff]
  %v103 = vld [vmem:[%s0 + $0x68] sm:$0xff]
  %v104 = vld [vmem:[%s0 + $0x70] sm:$0xff]
  %v105 = vld [vmem:[%s0 + $0x78] sm:$0xff]
  %v106 = vld [vmem:[%s0 + $0x80] sm:$0xff]
  %v107 = vld [vmem:[%s0 + $0x88] sm:$0xff]
  %v108 = vld [vmem:[%s0 + $0x90] sm:$0xff]
  %v109 = vld [vmem:[%s0 + $0x98] sm:$0xff]
  %v110 = vld [vmem:[%s0 + $0xa0] sm:$0xff]
  %v111 = vld [vmem:[%s0 + $0xa8] sm:$0xff]
  %v112 = vld [vmem:[%s0 + $0xb0] sm:$0xff]
  %v113 = vld [vmem:[%s0 + $0xb8] sm:$0xff]
  %v114 = vld [vmem:[%s0 + $0xc0] sm:$0xff]
  %v115 = vld [vmem:[%s0 + $0xc8] sm:$0xff]
  %v116 = vld [vmem:[%s0 + $0xd0] sm:$0xff]
  %v117 = vld [vmem:[%s0 + $0xd8] sm:$0xff]
  %v118 = vld [vmem:[%s0 + $0xe0] sm:$0xff]
  %v119 = vld [vmem:[%s0 + $0xe8] sm:$0xff]
  %v120 = vld [vmem:[%s0 + $0xf0] sm:$0xff]
  %v121 = vld [vmem:[%s0 + $0xf8] sm:$0xff]
  %v122 = vld [vmem:[%s0 + $0x100] sm:$0xff]
  %v123 = vld [vmem:[%s0 + $0x108] sm:$0xff]
  %v124 = vld [vmem:[%s0 + $0x110] sm:$0xff]
  %v125 = vld [vmem:[%s0 + $0x118] sm:$0xff]
  %v126 = vld [vmem:[%s0 + $0x120] sm:$0xff]
  %v127 = vld [vmem:[%s0 + $0x128] sm:$0xff]
  %v128 = vld [vmem:[%s0 + $0x130] sm:$0xff]
  %v129 = vld [vmem:[%s0 + $0x138] sm:$0xff]
  %v130 = vld [vmem:[%s0 + $0x140] sm:$0xff]
  %v131 = vld [vmem:[%s0 + $0x148] sm:$0xff]
  %v132 = vld [vmem:[%s0 + $0x150] sm:$0xff]
  %v133 = vld [vmem:[%s0 + $0x158] sm:$0xff]
  %v134 = vld [vmem:[%s0 + $0x160] sm:$0xff]
  %v135 = vld [vmem:[%s0 + $0x168] sm:$0xff]
  %v136 = vld [vmem:[%s0 + $0x170] sm:$0xff]
  %v137 = vld [vmem:[%s0 + $0x178] sm:$0xff]
  %v138 = vld [vmem:[%s0 + $0x180] sm:$0xff]
  %v139 = vld [vmem:[%s0 + $0x188] sm:$0xff]
  %v140 = vld [vmem:[%s0 + $0x190] sm:$0xff]
  %v141 = vld [vmem:[%s0 + $0x198] sm:$0xff]
  %v142 = vld [vmem:[%s0 + $0x1a0] sm:$0xff]
  %v143 = vld [vmem:[%s0 + $0x1a8] sm:$0xff]
  %v144 = vld [vmem:[%s0 + $0x1b0] sm:$0xff]
  %v145 = vld [vmem:[%s0 + $0x1b8] sm:$0xff]
  %v146 = vld [vmem:[%s0 + $0x1c0] sm:$0xff]
  %v147 = vld [vmem:[%s0 + $0x1c8] sm:$0xff]
  %v148 = vld [vmem:[%s0 + $0x1d0] sm:$0xff]
  %v149 = vld [vmem:[%s0 + $0x1d8] sm:$0xff]
  %v150 = vld [vmem:[%s0 + $0x1e0] sm:$0xff]
  %v151 = vld [vmem:[%s0 + $0x1e8] sm:$0xff]
  %v152 = vld [vmem:[%s0 + $0x1f0] sm:$0xff]
  %v153 = vld [vmem:[%s0 + $0x1f8] sm:$0xff]
  %v154 = vld [vmem:[%s0 + $0x200] sm:$0xff]
  %v155 = vld [vmem:[%s0 + $0x208] sm:$0xff]
  %v156 = vld [vmem:[%s0 + $0x210] sm:$0xff]
  %v157 = vld [vmem:[%s0 + $0x218] sm:$0xff]
  %v158 = vld [vmem:[%s0 + $0x220] sm:$0xff]
  %v159 = vld [vmem:[%s0 + $0x228] sm:$0xff]
  %v160 = vld [vmem:[%s0 + $0x230] sm:$0xff]
  %v161 = vld [vmem:[%s0 + $0x238] sm:$0xff]
  %v162 = vld [vmem:[%s0 + $0x240] sm:$0xff]
  %v163 = vld [vmem:[%s0 + $0x248] sm:$0xff]
  %v164 = vld [vmem:[%s0 + $0x250] sm:$0xff]
  %v165 = vld [vmem:[%s0 + $0x258] sm:$0xff]
  %v166 = vld [vmem:[%s0 + $0x260] sm:$0xff]
  %v167 = vld [vmem:[%s0 + $0x268] sm:$0xff]
  %v168 = vld [vmem:[%s0 + $0x270] sm:$0xff]
  %v169 = vld [vmem:[%s0 + $0x278] sm:$0xff]
  %v170 = vld [vmem:[%s0 + $0x280] sm:$0xff]
  %v171 = vld [vmem:[%s0 + $0x288] sm:$0xff]
  %v172 = vld [vmem:[%s0 + $0x290] sm:$0xff]
  %v173 = vld [vmem:[%s0 + $0x298] sm:$0xff]
  %v174 = vld [vmem:[%s0 + $0x2a0] sm:$0xff]
  %v175 = vld [vmem:[%s0 + $0x2a8] sm:$0xff]
  %v176 = vld [vmem:[%s0 + $0x2b0] sm:$0xff]
  %v177 = vld [vmem:[%s0 + $0x2b8] sm:$0xff]
  %v178 = vld [vmem:[%s0 + $0x2c0] sm:$0xff]
  %v179 = vld [vmem:[%s0 + $0x2c8] sm:$0xff]
  %v180 = vld [vmem:[%s0 + $0x2d0] sm:$0xff]
  %v181 = vld [vmem:[%s0 + $0x2d8] sm:$0xff]
  %v182 = vld [vmem:[%s0 + $0x2e0] sm:$0xff]
  %v183 = vld [vmem:[%s0 + $0x2e8] sm:$0xff]
  %v184 = vld [vmem:[%s0 + $0x2f0] sm:$0xff]
  %v185 = vld [vmem:[%s0 + $0x2f8] sm:$0xff]
  %v246 = vunpack.c.l.b16 %v30
  %v247 = vunpack.c.h.b16 %v30
  %v248 = vunpack.c.l.b16 %v31
  %v249 = vunpack.c.h.b16 %v31
  %v250 = vunpack.c.l.b16 %v32
  %v251 = vunpack.c.h.b16 %v32
  %v252 = vunpack.c.l.b16 %v33
  %v253 = vunpack.c.h.b16 %v33
  %v254 = vunpack.c.l.b16 %v34
  %v255 = vunpack.c.h.b16 %v34
  %v256 = vunpack.c.l.b16 %v35
  %v257 = vunpack.c.h.b16 %v35
  %v258 = vunpack.c.l.b16 %v36
  %v259 = vunpack.c.h.b16 %v36
  %v260 = vunpack.c.l.b16 %v37
  %v261 = vunpack.c.h.b16 %v37
  %v262 = vunpack.c.l.b16 %v38
  %v263 = vunpack.c.h.b16 %v38
  %v264 = vunpack.c.l.b16 %v39
  %v265 = vunpack.c.h.b16 %v39
  %v266 = vunpack.c.l.b16 %v40
  %v267 = vunpack.c.h.b16 %v40
  %v268 = vunpack.c.l.b16 %v41
  %v269 = vunpack.c.h.b16 %v41
  %v270 = vunpack.c.l.b16 %v42
  %v271 = vunpack.c.h.b16 %v42
  %v272 = vunpack.c.l.b16 %v43
  %v273 = vunpack.c.h.b16 %v43
  %v274 = vunpack.c.l.b16 %v44
  %v275 = vunpack.c.h.b16 %v44
  %v276 = vunpack.c.l.b16 %v45
  %v277 = vunpack.c.h.b16 %v45
  %v278 = vunpack.c.l.b16 %v46
  %v279 = vunpack.c.h.b16 %v46
  %v280 = vunpack.c.l.b16 %v47
  %v281 = vunpack.c.h.b16 %v47
  %v282 = vunpack.c.l.b16 %v48
  %v283 = vunpack.c.h.b16 %v48
  %v284 = vunpack.c.l.b16 %v49
  %v285 = vunpack.c.h.b16 %v49
  %v286 = vunpack.c.l.b16 %v50
  %v287 = vunpack.c.h.b16 %v50
  %v288 = vunpack.c.l.b16 %v51
  %v289 = vunpack.c.h.b16 %v51
  %v290 = vunpack.c.l.b16 %v52
  %v291 = vunpack.c.h.b16 %v52
  %v292 = vunpack.c.l.b16 %v53
  %v293 = vunpack.c.h.b16 %v53
  %v294 = vunpack.c.l.b16 %v54
  %v295 = vunpack.c.h.b16 %v54
  %v296 = vunpack.c.l.b16 %v55
  %v297 = vunpack.c.h.b16 %v55
  %v298 = vunpack.c.l.b16 %v56
  %v299 = vunpack.c.h.b16 %v56
  %v300 = vunpack.c.l.b16 %v57
  %v301 = vunpack.c.h.b16 %v57
  %v302 = vunpack.c.l.b16 %v58
  %v303 = vunpack.c.h.b16 %v58
  %v304 = vunpack.c.l.b16 %v59
  %v305 = vunpack.c.h.b16 %v59
  %v306 = vunpack.c.l.b16 %v60
  %v307 = vunpack.c.h.b16 %v60
  %v308 = vunpack.c.l.b16 %v61
  %v309 = vunpack.c.h.b16 %v61
  %v310 = vunpack.c.l.b16 %v62
  %v311 = vunpack.c.h.b16 %v62
  %v312 = vunpack.c.l.b16 %v63
  %v313 = vunpack.c.h.b16 %v63
  %v314 = vunpack.c.l.b16 %v64
  %v315 = vunpack.c.h.b16 %v64
  %v316 = vunpack.c.l.b16 %v65
  %v317 = vunpack.c.h.b16 %v65
  %v318 = vunpack.c.l.b16 %v66
  %v319 = vunpack.c.h.b16 %v66
  %v320 = vunpack.c.l.b16 %v67
  %v321 = vunpack.c.h.b16 %v67
  %v322 = vunpack.c.l.b16 %v68
  %v323 = vunpack.c.h.b16 %v68
  %v324 = vunpack.c.l.b16 %v69
  %v325 = vunpack.c.h.b16 %v69
  %v326 = vunpack.c.l.b16 %v70
  %v327 = vunpack.c.h.b16 %v70
  %v328 = vunpack.c.l.b16 %v71
  %v329 = vunpack.c.h.b16 %v71
  %v330 = vunpack.c.l.b16 %v72
  %v331 = vunpack.c.h.b16 %v72
  %v332 = vunpack.c.l.b16 %v73
  %v333 = vunpack.c.h.b16 %v73
  %v334 = vunpack.c.l.b16 %v74
  %v335 = vunpack.c.h.b16 %v74
  %v336 = vunpack.c.l.b16 %v75
  %v337 = vunpack.c.h.b16 %v75
  %v338 = vunpack.c.l.b16 %v76
  %v339 = vunpack.c.h.b16 %v76
  %v340 = vunpack.c.l.b16 %v77
  %v341 = vunpack.c.h.b16 %v77
  %v342 = vunpack.c.l.b16 %v78
  %v343 = vunpack.c.h.b16 %v78
  %v344 = vunpack.c.l.b16 %v79
  %v345 = vunpack.c.h.b16 %v79
  %v346 = vunpack.c.l.b16 %v80
  %v347 = vunpack.c.h.b16 %v80
  %v348 = vunpack.c.l.b16 %v81
  %v349 = vunpack.c.h.b16 %v81
  %v350 = vunpack.c.l.b16 %v82
  %v351 = vunpack.c.h.b16 %v82
  %v352 = vunpack.c.l.b16 %v83
  %v353 = vunpack.c.h.b16 %v83
  %v354 = vunpack.c.l.b16 %v84
  %v355 = vunpack.c.h.b16 %v84
  %v356 = vunpack.c.l.b16 %v85
  %v357 = vunpack.c.h.b16 %v85
  %v358 = vunpack.c.l.b16 %v86
  %v359 = vunpack.c.h.b16 %v86
  %v360 = vunpack.c.l.b16 %v87
  %v361 = vunpack.c.h.b16 %v87
  %v362 = vunpack.c.l.b16 %v88
  %v363 = vunpack.c.h.b16 %v88
  %v364 = vunpack.c.l.b16 %v89
  %v365 = vunpack.c.h.b16 %v89
  %v366 = vpack.c.b16 %v252, %v246
  %v367 = vpack.c.b16 %v253, %v247
  %v368 = vpack.c.b16 %v254, %v248
  %v369 = vpack.c.b16 %v255, %v249
  %v370 = vpack.c.b16 %v256, %v250
  %v371 = vpack.c.b16 %v257, %v251
  %v372 = vpack.c.b16 %v264, %v258
  %v373 = vpack.c.b16 %v265, %v259
  %v374 = vpack.c.b16 %v266, %v260
  %v375 = vpack.c.b16 %v267, %v261
  %v376 = vpack.c.b16 %v268, %v262
  %v377 = vpack.c.b16 %v269, %v263
  %v378 = vpack.c.b16 %v276, %v270
  %v379 = vpack.c.b16 %v277, %v271
  %v380 = vpack.c.b16 %v278, %v272
  %v381 = vpack.c.b16 %v279, %v273
  %v382 = vpack.c.b16 %v280, %v274
  %v383 = vpack.c.b16 %v281, %v275
  %v384 = vpack.c.b16 %v288, %v282
  %v385 = vpack.c.b16 %v289, %v283
  %v386 = vpack.c.b16 %v290, %v284
  %v387 = vpack.c.b16 %v291, %v285
  %v388 = vpack.c.b16 %v292, %v286
  %v389 = vpack.c.b16 %v293, %v287
  %v390 = vpack.c.b16 %v300, %v294
  %v391 = vpack.c.b16 %v301, %v295
  %v392 = vpack.c.b16 %v302, %v296
  %v393 = vpack.c.b16 %v303, %v297
  %v394 = vpack.c.b16 %v304, %v298
  %v395 = vpack.c.b16 %v305, %v299
  %v396 = vpack.c.b16 %v312, %v306
  %v397 = vpack.c.b16 %v313, %v307
  %v398 = vpack.c.b16 %v314, %v308
  %v399 = vpack.c.b16 %v315, %v309
  %v400 = vpack.c.b16 %v316, %v310
  %v401 = vpack.c.b16 %v317, %v311
  %v402 = vpack.c.b16 %v324, %v318
  %v403 = vpack.c.b16 %v325, %v319
  %v404 = vpack.c.b16 %v326, %v320
  %v405 = vpack.c.b16 %v327, %v321
  %v406 = vpack.c.b16 %v328, %v322
  %v407 = vpack.c.b16 %v329, %v323
  %v408 = vpack.c.b16 %v336, %v330
  %v409 = vpack.c.b16 %v337, %v331
  %v410 = vpack.c.b16 %v338, %v332
  %v411 = vpack.c.b16 %v339, %v333
  %v412 = vpack.c.b16 %v340, %v334
  %v413 = vpack.c.b16 %v341, %v335
  %v414 = vpack.c.b16 %v348, %v342
  %v415 = vpack.c.b16 %v349, %v343
  %v416 = vpack.c.b16 %v350, %v344
  %v417 = vpack.c.b16 %v351, %v345
  %v418 = vpack.c.b16 %v352, %v346
  %v419 = vpack.c.b16 %v353, %v347
  %v420 = vpack.c.b16 %v360, %v354
  %v421 = vpack.c.b16 %v361, %v355
  %v422 = vpack.c.b16 %v362, %v356
  %v423 = vpack.c.b16 %v363, %v357
  %v424 = vpack.c.b16 %v364, %v358
  %v425 = vpack.c.b16 %v365, %v359
  %v582 = vunpack.c.l.b16 %v90
  %v583 = vunpack.c.h.b16 %v90
  %v584 = vunpack.c.l.b16 %v91
  %v585 = vunpack.c.h.b16 %v91
  %v586 = vunpack.c.l.b16 %v92
  %v587 = vunpack.c.h.b16 %v92
  %v588 = vunpack.c.l.b16 %v93
  %v589 = vunpack.c.h.b16 %v93
  %v590 = vunpack.c.l.b16 %v94
  %v591 = vunpack.c.h.b16 %v94
  %v592 = vunpack.c.l.b16 %v95
  %v593 = vunpack.c.h.b16 %v95
  %v594 = vunpack.c.l.b16 %v96
  %v595 = vunpack.c.h.b16 %v96
  %v596 = vunpack.c.l.b16 %v97
  %v597 = vunpack.c.h.b16 %v97
  %v598 = vunpack.c.l.b16 %v98
  %v599 = vunpack.c.h.b16 %v98
  %v600 = vunpack.c.l.b16 %v99
  %v601 = vunpack.c.h.b16 %v99
  %v602 = vunpack.c.l.b16 %v100
  %v603 = vunpack.c.h.b16 %v100
  %v604 = vunpack.c.l.b16 %v101
  %v605 = vunpack.c.h.b16 %v101
  %v606 = vunpack.c.l.b16 %v102
  %v607 = vunpack.c.h.b16 %v102
  %v608 = vunpack.c.l.b16 %v103
  %v609 = vunpack.c.h.b16 %v103
  %v610 = vunpack.c.l.b16 %v104
  %v611 = vunpack.c.h.b16 %v104
  %v612 = vunpack.c.l.b16 %v105
  %v613 = vunpack.c.h.b16 %v105
  %v614 = vunpack.c.l.b16 %v106
  %v615 = vunpack.c.h.b16 %v106
  %v616 = vunpack.c.l.b16 %v107
  %v617 = vunpack.c.h.b16 %v107
  %v618 = vunpack.c.l.b16 %v108
  %v619 = vunpack.c.h.b16 %v108
  %v620 = vunpack.c.l.b16 %v109
  %v621 = vunpack.c.h.b16 %v109
  %v622 = vunpack.c.l.b16 %v110
  %v623 = vunpack.c.h.b16 %v110
  %v624 = vunpack.c.l.b16 %v111
  %v625 = vunpack.c.h.b16 %v111
  %v626 = vunpack.c.l.b16 %v112
  %v627 = vunpack.c.h.b16 %v112
  %v628 = vunpack.c.l.b16 %v113
  %v629 = vunpack.c.h.b16 %v113
  %v630 = vunpack.c.l.b16 %v114
  %v631 = vunpack.c.h.b16 %v114
  %v632 = vunpack.c.l.b16 %v115
  %v633 = vunpack.c.h.b16 %v115
  %v634 = vunpack.c.l.b16 %v116
  %v635 = vunpack.c.h.b16 %v116
  %v636 = vunpack.c.l.b16 %v117
  %v637 = vunpack.c.h.b16 %v117
  %v638 = vunpack.c.l.b16 %v118
  %v639 = vunpack.c.h.b16 %v118
  %v640 = vunpack.c.l.b16 %v119
  %v641 = vunpack.c.h.b16 %v119
  %v642 = vunpack.c.l.b16 %v120
  %v643 = vunpack.c.h.b16 %v120
  %v644 = vunpack.c.l.b16 %v121
  %v645 = vunpack.c.h.b16 %v121
  %v646 = vunpack.c.l.b16 %v122
  %v647 = vunpack.c.h.b16 %v122
  %v648 = vunpack.c.l.b16 %v123
  %v649 = vunpack.c.h.b16 %v123
  %v650 = vunpack.c.l.b16 %v124
  %v651 = vunpack.c.h.b16 %v124
  %v652 = vunpack.c.l.b16 %v125
  %v653 = vunpack.c.h.b16 %v125
  %v654 = vunpack.c.l.b16 %v126
  %v655 = vunpack.c.h.b16 %v126
  %v656 = vunpack.c.l.b16 %v127
  %v657 = vunpack.c.h.b16 %v127
  %v658 = vunpack.c.l.b16 %v128
  %v659 = vunpack.c.h.b16 %v128
  %v660 = vunpack.c.l.b16 %v129
  %v661 = vunpack.c.h.b16 %v129
  %v662 = vunpack.c.l.b16 %v130
  %v663 = vunpack.c.h.b16 %v130
  %v664 = vunpack.c.l.b16 %v131
  %v665 = vunpack.c.h.b16 %v131
  %v666 = vunpack.c.l.b16 %v132
  %v667 = vunpack.c.h.b16 %v132
  %v668 = vunpack.c.l.b16 %v133
  %v669 = vunpack.c.h.b16 %v133
  %v670 = vunpack.c.l.b16 %v134
  %v671 = vunpack.c.h.b16 %v134
  %v672 = vunpack.c.l.b16 %v135
  %v673 = vunpack.c.h.b16 %v135
  %v674 = vunpack.c.l.b16 %v136
  %v675 = vunpack.c.h.b16 %v136
  %v676 = vunpack.c.l.b16 %v137
  %v677 = vunpack.c.h.b16 %v137
  %v678 = vunpack.c.l.b16 %v138
  %v679 = vunpack.c.h.b16 %v138
  %v680 = vunpack.c.l.b16 %v139
  %v681 = vunpack.c.h.b16 %v139
  %v682 = vunpack.c.l.b16 %v140
  %v683 = vunpack.c.h.b16 %v140
  %v684 = vunpack.c.l.b16 %v141
  %v685 = vunpack.c.h.b16 %v141
  %v686 = vunpack.c.l.b16 %v142
  %v687 = vunpack.c.h.b16 %v142
  %v688 = vunpack.c.l.b16 %v143
  %v689 = vunpack.c.h.b16 %v143
  %v690 = vunpack.c.l.b16 %v144
  %v691 = vunpack.c.h.b16 %v144
  %v692 = vunpack.c.l.b16 %v145
  %v693 = vunpack.c.h.b16 %v145
  %v694 = vunpack.c.l.b16 %v146
  %v695 = vunpack.c.h.b16 %v146
  %v696 = vunpack.c.l.b16 %v147
  %v697 = vunpack.c.h.b16 %v147
  %v698 = vunpack.c.l.b16 %v148
  %v699 = vunpack.c.h.b16 %v148
  %v700 = vunpack.c.l.b16 %v149
  %v701 = vunpack.c.h.b16 %v149
  %v702 = vunpack.c.l.b16 %v150
  %v703 = vunpack.c.h.b16 %v150
  %v704 = vunpack.c.l.b16 %v151
  %v705 = vunpack.c.h.b16 %v151
  %v706 = vunpack.c.l.b16 %v152
  %v707 = vunpack.c.h.b16 %v152
  %v708 = vunpack.c.l.b16 %v153
  %v709 = vunpack.c.h.b16 %v153
  %v710 = vunpack.c.l.b16 %v154
  %v711 = vunpack.c.h.b16 %v154
  %v712 = vunpack.c.l.b16 %v155
  %v713 = vunpack.c.h.b16 %v155
  %v714 = vunpack.c.l.b16 %v156
  %v715 = vunpack.c.h.b16 %v156
  %v716 = vunpack.c.l.b16 %v157
  %v717 = vunpack.c.h.b16 %v157
  %v718 = vunpack.c.l.b16 %v158
  %v719 = vunpack.c.h.b16 %v158
  %v720 = vunpack.c.l.b16 %v159
  %v721 = vunpack.c.h.b16 %v159
  %v722 = vunpack.c.l.b16 %v160
  %v723 = vunpack.c.h.b16 %v160
  %v724 = vunpack.c.l.b16 %v161
  %v725 = vunpack.c.h.b16 %v161
  %v726 = vunpack.c.l.b16 %v162
  %v727 = vunpack.c.h.b16 %v162
  %v728 = vunpack.c.l.b16 %v163
  %v729 = vunpack.c.h.b16 %v163
  %v730 = vunpack.c.l.b16 %v164
  %v731 = vunpack.c.h.b16 %v164
  %v732 = vunpack.c.l.b16 %v165
  %v733 = vunpack.c.h.b16 %v165
  %v734 = vunpack.c.l.b16 %v166
  %v735 = vunpack.c.h.b16 %v166
  %v736 = vunpack.c.l.b16 %v167
  %v737 = vunpack.c.h.b16 %v167
  %v738 = vunpack.c.l.b16 %v168
  %v739 = vunpack.c.h.b16 %v168
  %v740 = vunpack.c.l.b16 %v169
  %v741 = vunpack.c.h.b16 %v169
  %v742 = vunpack.c.l.b16 %v170
  %v743 = vunpack.c.h.b16 %v170
  %v744 = vunpack.c.l.b16 %v171
  %v745 = vunpack.c.h.b16 %v171
  %v746 = vunpack.c.l.b16 %v172
  %v747 = vunpack.c.h.b16 %v172
  %v748 = vunpack.c.l.b16 %v173
  %v749 = vunpack.c.h.b16 %v173
  %v750 = vunpack.c.l.b16 %v174
  %v751 = vunpack.c.h.b16 %v174
  %v752 = vunpack.c.l.b16 %v175
  %v753 = vunpack.c.h.b16 %v175
  %v754 = vunpack.c.l.b16 %v176
  %v755 = vunpack.c.h.b16 %v176
  %v756 = vunpack.c.l.b16 %v177
  %v757 = vunpack.c.h.b16 %v177
  %v758 = vunpack.c.l.b16 %v178
  %v759 = vunpack.c.h.b16 %v178
  %v760 = vunpack.c.l.b16 %v179
  %v761 = vunpack.c.h.b16 %v179
  %v762 = vunpack.c.l.b16 %v180
  %v763 = vunpack.c.h.b16 %v180
  %v764 = vunpack.c.l.b16 %v181
  %v765 = vunpack.c.h.b16 %v181
  %v766 = vunpack.c.l.b16 %v182
  %v767 = vunpack.c.h.b16 %v182
  %v768 = vunpack.c.l.b16 %v183
  %v769 = vunpack.c.h.b16 %v183
  %v770 = vunpack.c.l.b16 %v184
  %v771 = vunpack.c.h.b16 %v184
  %v772 = vunpack.c.l.b16 %v185
  %v773 = vunpack.c.h.b16 %v185
  %v774 = vpack.c.b16 %v584, %v582
  %v775 = vpack.c.b16 %v585, %v583
  %v776 = vpack.c.b16 %v588, %v586
  %v777 = vpack.c.b16 %v589, %v587
  %v778 = vpack.c.b16 %v592, %v590
  %v779 = vpack.c.b16 %v593, %v591
  %v780 = vpack.c.b16 %v596, %v594
  %v781 = vpack.c.b16 %v597, %v595
  %v782 = vpack.c.b16 %v600, %v598
  %v783 = vpack.c.b16 %v601, %v599
  %v784 = vpack.c.b16 %v604, %v602
  %v785 = vpack.c.b16 %v605, %v603
  %v786 = vpack.c.b16 %v608, %v606
  %v787 = vpack.c.b16 %v609, %v607
  %v788 = vpack.c.b16 %v612, %v610
  %v789 = vpack.c.b16 %v613, %v611
  %v790 = vpack.c.b16 %v616, %v614
  %v791 = vpack.c.b16 %v617, %v615
  %v792 = vpack.c.b16 %v620, %v618
  %v793 = vpack.c.b16 %v621, %v619
  %v794 = vpack.c.b16 %v624, %v622
  %v795 = vpack.c.b16 %v625, %v623
  %v796 = vpack.c.b16 %v628, %v626
  %v797 = vpack.c.b16 %v629, %v627
  %v798 = vpack.c.b16 %v632, %v630
  %v799 = vpack.c.b16 %v633, %v631
  %v800 = vpack.c.b16 %v636, %v634
  %v801 = vpack.c.b16 %v637, %v635
  %v802 = vpack.c.b16 %v640, %v638
  %v803 = vpack.c.b16 %v641, %v639
  %v804 = vpack.c.b16 %v644, %v642
  %v805 = vpack.c.b16 %v645, %v643
  %v806 = vpack.c.b16 %v648, %v646
  %v807 = vpack.c.b16 %v649, %v647
  %v808 = vpack.c.b16 %v652, %v650
  %v809 = vpack.c.b16 %v653, %v651
  %v810 = vpack.c.b16 %v656, %v654
  %v811 = vpack.c.b16 %v657, %v655
  %v812 = vpack.c.b16 %v660, %v658
  %v813 = vpack.c.b16 %v661, %v659
  %v814 = vpack.c.b16 %v664, %v662
  %v815 = vpack.c.b16 %v665, %v663
  %v816 = vpack.c.b16 %v668, %v666
  %v817 = vpack.c.b16 %v669, %v667
  %v818 = vpack.c.b16 %v672, %v670
  %v819 = vpack.c.b16 %v673, %v671
  %v820 = vpack.c.b16 %v676, %v674
  %v821 = vpack.c.b16 %v677, %v675
  %v822 = vpack.c.b16 %v680, %v678
  %v823 = vpack.c.b16 %v681, %v679
  %v824 = vpack.c.b16 %v684, %v682
  %v825 = vpack.c.b16 %v685, %v683
  %v826 = vpack.c.b16 %v688, %v686
  %v827 = vpack.c.b16 %v689, %v687
  %v828 = vpack.c.b16 %v692, %v690
  %v829 = vpack.c.b16 %v693, %v691
  %v830 = vpack.c.b16 %v696, %v694
  %v831 = vpack.c.b16 %v697, %v695
  %v832 = vpack.c.b16 %v700, %v698
  %v833 = vpack.c.b16 %v701, %v699
  %v834 = vpack.c.b16 %v704, %v702
  %v835 = vpack.c.b16 %v705, %v703
  %v836 = vpack.c.b16 %v708, %v706
  %v837 = vpack.c.b16 %v709, %v707
  %v838 = vpack.c.b16 %v712, %v710
  %v839 = vpack.c.b16 %v713, %v711
  %v840 = vpack.c.b16 %v716, %v714
  %v841 = vpack.c.b16 %v717, %v715
  %v842 = vpack.c.b16 %v720, %v718
  %v843 = vpack.c.b16 %v721, %v719
  %v844 = vpack.c.b16 %v724, %v722
  %v845 = vpack.c.b16 %v725, %v723
  %v846 = vpack.c.b16 %v728, %v726
  %v847 = vpack.c.b16 %v729, %v727
  %v848 = vpack.c.b16 %v732, %v730
  %v849 = vpack.c.b16 %v733, %v731
  %v850 = vpack.c.b16 %v736, %v734
  %v851 = vpack.c.b16 %v737, %v735
  %v852 = vpack.c.b16 %v740, %v738
  %v853 = vpack.c.b16 %v741, %v739
  %v854 = vpack.c.b16 %v744, %v742
  %v855 = vpack.c.b16 %v745, %v743
  %v856 = vpack.c.b16 %v748, %v746
  %v857 = vpack.c.b16 %v749, %v747
  %v858 = vpack.c.b16 %v752, %v750
  %v859 = vpack.c.b16 %v753, %v751
  %v860 = vpack.c.b16 %v756, %v754
  %v861 = vpack.c.b16 %v757, %v755
  %v862 = vpack.c.b16 %v760, %v758
  %v863 = vpack.c.b16 %v761, %v759
  %v864 = vpack.c.b16 %v764, %v762
  %v865 = vpack.c.b16 %v765, %v763
  %v866 = vpack.c.b16 %v768, %v766
  %v867 = vpack.c.b16 %v769, %v767
  %v868 = vpack.c.b16 %v772, %v770
  %v869 = vpack.c.b16 %v773, %v771
  %966 = vmatprep.subr.bf16.mxu0 %v775
  %967 = vmatpush1.bf16.msra.mxu0 %v774
  %968 = vmatprep.subr.bf16.mxu0 %v777
  %969 = vmatpush1.bf16.msra.mxu0 %v776
  %970 = vmatprep.subr.bf16.mxu0 %v779
  %971 = vmatpush1.bf16.msra.mxu0 %v778
  %972 = vmatprep.subr.bf16.mxu0 %v781
  %973 = vmatpush1.bf16.msra.mxu0 %v780
  %974 = vmatprep.subr.bf16.mxu0 %v783
  %975 = vmatpush1.bf16.msra.mxu0 %v782
  %976 = vmatprep.subr.bf16.mxu0 %v785
  %977 = vmatpush1.bf16.msra.mxu0 %v784
  %978 = vmatprep.subr.bf16.mxu0 %v787
  %979 = vmatpush1.bf16.msra.mxu0 %v786
  %980 = vmatprep.subr.bf16.mxu0 %v789
  %981 = vmatpush1.bf16.msra.mxu0 %v788
  %982 = vmatprep.subr.bf16.mxu0 %v791
  %983 = vmatpush1.bf16.msra.mxu0 %v790
  %984 = vmatprep.subr.bf16.mxu0 %v793
  %985 = vmatpush1.bf16.msra.mxu0 %v792
  %986 = vmatprep.subr.bf16.mxu0 %v795
  %987 = vmatpush1.bf16.msra.mxu0 %v794
  %988 = vmatprep.subr.bf16.mxu0 %v797
  %989 = vmatpush1.bf16.msra.mxu0 %v796
  %990 = vmatprep.subr.bf16.mxu0 %v799
  %991 = vmatpush1.bf16.msra.mxu0 %v798
  %992 = vmatprep.subr.bf16.mxu0 %v801
  %993 = vmatpush1.bf16.msra.mxu0 %v800
  %994 = vmatprep.subr.bf16.mxu0 %v803
  %995 = vmatpush1.bf16.msra.mxu0 %v802
  %996 = vmatprep.subr.bf16.mxu0 %v805
  %997 = vmatpush1.bf16.msra.mxu0 %v804
  %998 = vmatprep.mubr.bf16.mxu0 %v367
  %999 = vmatmul.mubr.bf16.gmra.mrb[0].mxu0 %v366
  %v1000 = vpop.f32.mrb[0].mxu0
  %v1001 = vadd.f32 0.0, %v1000
  %v1002 = vpop.f32.mrb[0].mxu0
  %v1003 = vadd.f32 0.0, %v1002
  %v1004 = vpop.f32.mrb[0].mxu0
  %v1005 = vadd.f32 0.0, %v1004
  %v1006 = vpop.f32.mrb[0].mxu0
  %v1007 = vadd.f32 0.0, %v1006
  %1008 = vmatprep.mubr.bf16.mxu0 %v373
  %1009 = vmatmul.mubr.bf16.gmra.mrb[0].mxu0 %v372
  %v1010 = vpop.f32.mrb[0].mxu0
  %v1011 = vadd.f32 0.0, %v1010
  %v1012 = vpop.f32.mrb[0].mxu0
  %v1013 = vadd.f32 0.0, %v1012
  %v1014 = vpop.f32.mrb[0].mxu0
  %v1015 = vadd.f32 0.0, %v1014
  %v1016 = vpop.f32.mrb[0].mxu0
  %v1017 = vadd.f32 0.0, %v1016
  %1018 = vmatprep.mubr.bf16.mxu0 %v379
  %1019 = vmatmul.mubr.bf16.gmra.mrb[0].mxu0 %v378
  %v1020 = vpop.f32.mrb[0].mxu0
  %v1021 = vadd.f32 0.0, %v1020
  %v1022 = vpop.f32.mrb[0].mxu0
  %v1023 = vadd.f32 0.0, %v1022
  %v1024 = vpop.f32.mrb[0].mxu0
  %v1025 = vadd.f32 0.0, %v1024
  %v1026 = vpop.f32.mrb[0].mxu0
  %v1027 = vadd.f32 0.0, %v1026
  %1028 = vmatprep.mubr.bf16.mxu0 %v385
  %1029 = vmatmul.mubr.bf16.gmra.mrb[0].mxu0 %v384
  %v1030 = vpop.f32.mrb[0].mxu0
  %v1031 = vadd.f32 0.0, %v1030
  %v1032 = vpop.f32.mrb[0].mxu0
  %v1033 = vadd.f32 0.0, %v1032
  %v1034 = vpop.f32.mrb[0].mxu0
  %v1035 = vadd.f32 0.0, %v1034
  %v1036 = vpop.f32.mrb[0].mxu0
  %v1037 = vadd.f32 0.0, %v1036
  %1038 = vmatprep.mubr.bf16.mxu0 %v391
  %1039 = vmatmul.mubr.bf16.gmra.mrb[0].mxu0 %v390
  %v1040 = vpop.f32.mrb[0].mxu0
  %v1041 = vadd.f32 0.0, %v1040
  %v1042 = vpop.f32.mrb[0].mxu0
  %v1043 = vadd.f32 0.0, %v1042
  %v1044 = vpop.f32.mrb[0].mxu0
  %v1045 = vadd.f32 0.0, %v1044
  %v1046 = vpop.f32.mrb[0].mxu0
  %v1047 = vadd.f32 0.0, %v1046
  %1048 = vmatprep.mubr.bf16.mxu0 %v397
  %1049 = vmatmul.mubr.bf16.gmra.mrb[0].mxu0 %v396
  %v1050 = vpop.f32.mrb[0].mxu0
  %v1051 = vadd.f32 0.0, %v1050
  %v1052 = vpop.f32.mrb[0].mxu0
  %v1053 = vadd.f32 0.0, %v1052
  %v1054 = vpop.f32.mrb[0].mxu0
  %v1055 = vadd.f32 0.0, %v1054
  %v1056 = vpop.f32.mrb[0].mxu0
  %v1057 = vadd.f32 0.0, %v1056
  %1058 = vmatprep.mubr.bf16.mxu0 %v403
  %1059 = vmatmul.mubr.bf16.gmra.mrb[0].mxu0 %v402
  %v1060 = vpop.f32.mrb[0].mxu0
  %v1061 = vadd.f32 0.0, %v1060
  %v1062 = vpop.f32.mrb[0].mxu0
  %v1063 = vadd.f32 0.0, %v1062
  %v1064 = vpop.f32.mrb[0].mxu0
  %v1065 = vadd.f32 0.0, %v1064
  %v1066 = vpop.f32.mrb[0].mxu0
  %v1067 = vadd.f32 0.0, %v1066
  %1068 = vmatprep.mubr.bf16.mxu0 %v409
  %1069 = vmatmul.mubr.bf16.gmra.mrb[0].mxu0 %v408
  %v1070 = vpop.f32.mrb[0].mxu0
  %v1071 = vadd.f32 0.0, %v1070
  %v1072 = vpop.f32.mrb[0].mxu0
  %v1073 = vadd.f32 0.0, %v1072
  %v1074 = vpop.f32.mrb[0].mxu0
  %v1075 = vadd.f32 0.0, %v1074
  %v1076 = vpop.f32.mrb[0].mxu0
  %v1077 = vadd.f32 0.0, %v1076
  %1078 = vmatprep.mubr.bf16.mxu0 %v415
  %1079 = vmatmul.mubr.bf16.gmra.mrb[0].mxu0 %v414
  %v1080 = vpop.f32.mrb[0].mxu0
  %v1081 = vadd.f32 0.0, %v1080
  %v1082 = vpop.f32.mrb[0].mxu0
  %v1083 = vadd.f32 0.0, %v1082
  %v1084 = vpop.f32.mrb[0].mxu0
  %v1085 = vadd.f32 0.0, %v1084
  %v1086 = vpop.f32.mrb[0].mxu0
  %v1087 = vadd.f32 0.0, %v1086
  %1088 = vmatprep.mubr.bf16.mxu0 %v421
  %1089 = vmatmul.mubr.bf16.gmra.mrb[0].mxu0 %v420
  %v1090 = vpop.f32.mrb[0].mxu0
  %v1091 = vadd.f32 0.0, %v1090
  %v1092 = vpop.f32.mrb[0].mxu0
  %v1093 = vadd.f32 0.0, %v1092
  %v1094 = vpop.f32.mrb[0].mxu0
  %v1095 = vadd.f32 0.0, %v1094
  %v1096 = vpop.f32.mrb[0].mxu0
  %v1097 = vadd.f32 0.0, %v1096
  %1098 = vdwg.mxu0
  %1099 = vmatprep.subr.bf16.mxu0 %v807
  %1100 = vmatpush1.bf16.msra.mxu0 %v806
  %1101 = vmatprep.subr.bf16.mxu0 %v809
  %1102 = vmatpush1.bf16.msra.mxu0 %v808
  %1103 = vmatprep.subr.bf16.mxu0 %v811
  %1104 = vmatpush1.bf16.msra.mxu0 %v810
  %1105 = vmatprep.subr.bf16.mxu0 %v813
  %1106 = vmatpush1.bf16.msra.mxu0 %v812
  %1107 = vmatprep.subr.bf16.mxu0 %v815
  %1108 = vmatpush1.bf16.msra.mxu0 %v814
  %1109 = vmatprep.subr.bf16.mxu0 %v817
  %1110 = vmatpush1.bf16.msra.mxu0 %v816
  %1111 = vmatprep.subr.bf16.mxu0 %v819
  %1112 = vmatpush1.bf16.msra.mxu0 %v818
  %1113 = vmatprep.subr.bf16.mxu0 %v821
  %1114 = vmatpush1.bf16.msra.mxu0 %v820
  %1115 = vmatprep.subr.bf16.mxu0 %v823
  %1116 = vmatpush1.bf16.msra.mxu0 %v822
  %1117 = vmatprep.subr.bf16.mxu0 %v825
  %1118 = vmatpush1.bf16.msra.mxu0 %v824
  %1119 = vmatprep.subr.bf16.mxu0 %v827
  %1120 = vmatpush1.bf16.msra.mxu0 %v826
  %1121 = vmatprep.subr.bf16.mxu0 %v829
  %1122 = vmatpush1.bf16.msra.mxu0 %v828
  %1123 = vmatprep.subr.bf16.mxu0 %v831
  %1124 = vmatpush1.bf16.msra.mxu0 %v830
  %1125 = vmatprep.subr.bf16.mxu0 %v833
  %1126 = vmatpush1.bf16.msra.mxu0 %v832
  %1127 = vmatprep.subr.bf16.mxu0 %v835
  %1128 = vmatpush1.bf16.msra.mxu0 %v834
  %1129 = vmatprep.subr.bf16.mxu0 %v837
  %1130 = vmatpush1.bf16.msra.mxu0 %v836
  %1131 = vmatprep.mubr.bf16.mxu0 %v369
  %1132 = vmatmul.mubr.bf16.gmra.mrb[0].mxu0 %v368
  %v1133 = vpop.f32.mrb[0].mxu0
  %v1134 = vadd.f32 %v1001, %v1133
  %v1135 = vpop.f32.mrb[0].mxu0
  %v1136 = vadd.f32 %v1003, %v1135
  %v1137 = vpop.f32.mrb[0].mxu0
  %v1138 = vadd.f32 %v1005, %v1137
  %v1139 = vpop.f32.mrb[0].mxu0
  %v1140 = vadd.f32 %v1007, %v1139
  %1141 = vmatprep.mubr.bf16.mxu0 %v375
  %1142 = vmatmul.mubr.bf16.gmra.mrb[0].mxu0 %v374
  %v1143 = vpop.f32.mrb[0].mxu0
  %v1144 = vadd.f32 %v1011, %v1143
  %v1145 = vpop.f32.mrb[0].mxu0
  %v1146 = vadd.f32 %v1013, %v1145
  %v1147 = vpop.f32.mrb[0].mxu0
  %v1148 = vadd.f32 %v1015, %v1147
  %v1149 = vpop.f32.mrb[0].mxu0
  %v1150 = vadd.f32 %v1017, %v1149
  %1151 = vmatprep.mubr.bf16.mxu0 %v381
  %1152 = vmatmul.mubr.bf16.gmra.mrb[0].mxu0 %v380
  %v1153 = vpop.f32.mrb[0].mxu0
  %v1154 = vadd.f32 %v1021, %v1153
  %v1155 = vpop.f32.mrb[0].mxu0
  %v1156 = vadd.f32 %v1023, %v1155
  %v1157 = vpop.f32.mrb[0].mxu0
  %v1158 = vadd.f32 %v1025, %v1157
  %v1159 = vpop.f32.mrb[0].mxu0
  %v1160 = vadd.f32 %v1027, %v1159
  %1161 = vmatprep.mubr.bf16.mxu0 %v387
  %1162 = vmatmul.mubr.bf16.gmra.mrb[0].mxu0 %v386
  %v1163 = vpop.f32.mrb[0].mxu0
  %v1164 = vadd.f32 %v1031, %v1163
  %v1165 = vpop.f32.mrb[0].mxu0
  %v1166 = vadd.f32 %v1033, %v1165
  %v1167 = vpop.f32.mrb[0].mxu0
  %v1168 = vadd.f32 %v1035, %v1167
  %v1169 = vpop.f32.mrb[0].mxu0
  %v1170 = vadd.f32 %v1037, %v1169
  %1171 = vmatprep.mubr.bf16.mxu0 %v393
  %1172 = vmatmul.mubr.bf16.gmra.mrb[0].mxu0 %v392
  %v1173 = vpop.f32.mrb[0].mxu0
  %v1174 = vadd.f32 %v1041, %v1173
  %v1175 = vpop.f32.mrb[0].mxu0
  %v1176 = vadd.f32 %v1043, %v1175
  %v1177 = vpop.f32.mrb[0].mxu0
  %v1178 = vadd.f32 %v1045, %v1177
  %v1179 = vpop.f32.mrb[0].mxu0
  %v1180 = vadd.f32 %v1047, %v1179
  %1181 = vmatprep.mubr.bf16.mxu0 %v399
  %1182 = vmatmul.mubr.bf16.gmra.mrb[0].mxu0 %v398
  %v1183 = vpop.f32.mrb[0].mxu0
  %v1184 = vadd.f32 %v1051, %v1183
  %v1185 = vpop.f32.mrb[0].mxu0
  %v1186 = vadd.f32 %v1053, %v1185
  %v1187 = vpop.f32.mrb[0].mxu0
  %v1188 = vadd.f32 %v1055, %v1187
  %v1189 = vpop.f32.mrb[0].mxu0
  %v1190 = vadd.f32 %v1057, %v1189
  %1191 = vmatprep.mubr.bf16.mxu0 %v405
  %1192 = vmatmul.mubr.bf16.gmra.mrb[0].mxu0 %v404
  %v1193 = vpop.f32.mrb[0].mxu0
  %v1194 = vadd.f32 %v1061, %v1193
  %v1195 = vpop.f32.mrb[0].mxu0
  %v1196 = vadd.f32 %v1063, %v1195
  %v1197 = vpop.f32.mrb[0].mxu0
  %v1198 = vadd.f32 %v1065, %v1197
  %v1199 = vpop.f32.mrb[0].mxu0
  %v1200 = vadd.f32 %v1067, %v1199
  %1201 = vmatprep.mubr.bf16.mxu0 %v411
  %1202 = vmatmul.mubr.bf16.gmra.mrb[0].mxu0 %v410
  %v1203 = vpop.f32.mrb[0].mxu0
  %v1204 = vadd.f32 %v1071, %v1203
  %v1205 = vpop.f32.mrb[0].mxu0
  %v1206 = vadd.f32 %v1073, %v1205
  %v1207 = vpop.f32.mrb[0].mxu0
  %v1208 = vadd.f32 %v1075, %v1207
  %v1209 = vpop.f32.mrb[0].mxu0
  %v1210 = vadd.f32 %v1077, %v1209
  %1211 = vmatprep.mubr.bf16.mxu0 %v417
  %1212 = vmatmul.mubr.bf16.gmra.mrb[0].mxu0 %v416
  %v1213 = vpop.f32.mrb[0].mxu0
  %v1214 = vadd.f32 %v1081, %v1213
  %v1215 = vpop.f32.mrb[0].mxu0
  %v1216 = vadd.f32 %v1083, %v1215
  %v1217 = vpop.f32.mrb[0].mxu0
  %v1218 = vadd.f32 %v1085, %v1217
  %v1219 = vpop.f32.mrb[0].mxu0
  %v1220 = vadd.f32 %v1087, %v1219
  %1221 = vmatprep.mubr.bf16.mxu0 %v423
  %1222 = vmatmul.mubr.bf16.gmra.mrb[0].mxu0 %v422
  %v1223 = vpop.f32.mrb[0].mxu0
  %v1224 = vadd.f32 %v1091, %v1223
  %v1225 = vpop.f32.mrb[0].mxu0
  %v1226 = vadd.f32 %v1093, %v1225
  %v1227 = vpop.f32.mrb[0].mxu0
  %v1228 = vadd.f32 %v1095, %v1227
  %v1229 = vpop.f32.mrb[0].mxu0
  %v1230 = vadd.f32 %v1097, %v1229
  %1231 = vdwg.mxu0
  %1232 = vmatprep.subr.bf16.mxu0 %v839
  %1233 = vmatpush1.bf16.msra.mxu0 %v838
  %1234 = vmatprep.subr.bf16.mxu0 %v841
  %1235 = vmatpush1.bf16.msra.mxu0 %v840
  %1236 = vmatprep.subr.bf16.mxu0 %v843
  %1237 = vmatpush1.bf16.msra.mxu0 %v842
  %1238 = vmatprep.subr.bf16.mxu0 %v845
  %1239 = vmatpush1.bf16.msra.mxu0 %v844
  %1240 = vmatprep.subr.bf16.mxu0 %v847
  %1241 = vmatpush1.bf16.msra.mxu0 %v846
  %1242 = vmatprep.subr.bf16.mxu0 %v849
  %1243 = vmatpush1.bf16.msra.mxu0 %v848
  %1244 = vmatprep.subr.bf16.mxu0 %v851
  %1245 = vmatpush1.bf16.msra.mxu0 %v850
  %1246 = vmatprep.subr.bf16.mxu0 %v853
  %1247 = vmatpush1.bf16.msra.mxu0 %v852
  %1248 = vmatprep.subr.bf16.mxu0 %v855
  %1249 = vmatpush1.bf16.msra.mxu0 %v854
  %1250 = vmatprep.subr.bf16.mxu0 %v857
  %1251 = vmatpush1.bf16.msra.mxu0 %v856
  %1252 = vmatprep.subr.bf16.mxu0 %v859
  %1253 = vmatpush1.bf16.msra.mxu0 %v858
  %1254 = vmatprep.subr.bf16.mxu0 %v861
  %1255 = vmatpush1.bf16.msra.mxu0 %v860
  %1256 = vmatprep.subr.bf16.mxu0 %v863
  %1257 = vmatpush1.bf16.msra.mxu0 %v862
  %1258 = vmatprep.subr.bf16.mxu0 %v865
  %1259 = vmatpush1.bf16.msra.mxu0 %v864
  %1260 = vmatprep.subr.bf16.mxu0 %v867
  %1261 = vmatpush1.bf16.msra.mxu0 %v866
  %1262 = vmatprep.subr.bf16.mxu0 %v869
  %1263 = vmatpush1.bf16.msra.mxu0 %v868
  %1264 = vmatprep.mubr.bf16.mxu0 %v371
  %1265 = vmatmul.mubr.bf16.gmra.mrb[0].mxu0 %v370
  %v1266 = vpop.f32.mrb[0].mxu0
  %v1267 = vadd.f32 %v1134, %v1266
  %v1268 = vpop.f32.mrb[0].mxu0
  %v1269 = vadd.f32 %v1136, %v1268
  %v1270 = vpop.f32.mrb[0].mxu0
  %v1271 = vadd.f32 %v1138, %v1270
  %v1272 = vpop.f32.mrb[0].mxu0
  %v1273 = vadd.f32 %v1140, %v1272
  %1274 = vmatprep.mubr.bf16.mxu0 %v377
  %1275 = vmatmul.mubr.bf16.gmra.mrb[0].mxu0 %v376
  %v1276 = vpop.f32.mrb[0].mxu0
  %v1277 = vadd.f32 %v1144, %v1276
  %v1278 = vpop.f32.mrb[0].mxu0
  %v1279 = vadd.f32 %v1146, %v1278
  %v1280 = vpop.f32.mrb[0].mxu0
  %v1281 = vadd.f32 %v1148, %v1280
  %v1282 = vpop.f32.mrb[0].mxu0
  %v1283 = vadd.f32 %v1150, %v1282
  %1284 = vmatprep.mubr.bf16.mxu0 %v383
  %1285 = vmatmul.mubr.bf16.gmra.mrb[0].mxu0 %v382
  %v1286 = vpop.f32.mrb[0].mxu0
  %v1287 = vadd.f32 %v1154, %v1286
  %v1288 = vpop.f32.mrb[0].mxu0
  %v1289 = vadd.f32 %v1156, %v1288
  %v1290 = vpop.f32.mrb[0].mxu0
  %v1291 = vadd.f32 %v1158, %v1290
  %v1292 = vpop.f32.mrb[0].mxu0
  %v1293 = vadd.f32 %v1160, %v1292
  %1294 = vmatprep.mubr.bf16.mxu0 %v389
  %1295 = vmatmul.mubr.bf16.gmra.mrb[0].mxu0 %v388
  %v1296 = vpop.f32.mrb[0].mxu0
  %v1297 = vadd.f32 %v1164, %v1296
  %v1298 = vpop.f32.mrb[0].mxu0
  %v1299 = vadd.f32 %v1166, %v1298
  %v1300 = vpop.f32.mrb[0].mxu0
  %v1301 = vadd.f32 %v1168, %v1300
  %v1302 = vpop.f32.mrb[0].mxu0
  %v1303 = vadd.f32 %v1170, %v1302
  %1304 = vmatprep.mubr.bf16.mxu0 %v395
  %1305 = vmatmul.mubr.bf16.gmra.mrb[0].mxu0 %v394
  %v1306 = vpop.f32.mrb[0].mxu0
  %v1307 = vadd.f32 %v1174, %v1306
  %v1308 = vpop.f32.mrb[0].mxu0
  %v1309 = vadd.f32 %v1176, %v1308
  %v1310 = vpop.f32.mrb[0].mxu0
  %v1311 = vadd.f32 %v1178, %v1310
  %v1312 = vpop.f32.mrb[0].mxu0
  %v1313 = vadd.f32 %v1180, %v1312
  %1314 = vmatprep.mubr.bf16.mxu0 %v401
  %1315 = vmatmul.mubr.bf16.gmra.mrb[0].mxu0 %v400
  %v1316 = vpop.f32.mrb[0].mxu0
  %v1317 = vadd.f32 %v1184, %v1316
  %v1318 = vpop.f32.mrb[0].mxu0
  %v1319 = vadd.f32 %v1186, %v1318
  %v1320 = vpop.f32.mrb[0].mxu0
  %v1321 = vadd.f32 %v1188, %v1320
  %v1322 = vpop.f32.mrb[0].mxu0
  %v1323 = vadd.f32 %v1190, %v1322
  %1324 = vmatprep.mubr.bf16.mxu0 %v407
  %1325 = vmatmul.mubr.bf16.gmra.mrb[0].mxu0 %v406
  %v1326 = vpop.f32.mrb[0].mxu0
  %v1327 = vadd.f32 %v1194, %v1326
  %v1328 = vpop.f32.mrb[0].mxu0
  %v1329 = vadd.f32 %v1196, %v1328
  %v1330 = vpop.f32.mrb[0].mxu0
  %v1331 = vadd.f32 %v1198, %v1330
  %v1332 = vpop.f32.mrb[0].mxu0
  %v1333 = vadd.f32 %v1200, %v1332
  %1334 = vmatprep.mubr.bf16.mxu0 %v413
  %1335 = vmatmul.mubr.bf16.gmra.mrb[0].mxu0 %v412
  %v1336 = vpop.f32.mrb[0].mxu0
  %v1337 = vadd.f32 %v1204, %v1336
  %v1338 = vpop.f32.mrb[0].mxu0
  %v1339 = vadd.f32 %v1206, %v1338
  %v1340 = vpop.f32.mrb[0].mxu0
  %v1341 = vadd.f32 %v1208, %v1340
  %v1342 = vpop.f32.mrb[0].mxu0
  %v1343 = vadd.f32 %v1210, %v1342
  %1344 = vmatprep.mubr.bf16.mxu0 %v419
  %1345 = vmatmul.mubr.bf16.gmra.mrb[0].mxu0 %v418
  %v1346 = vpop.f32.mrb[0].mxu0
  %v1347 = vadd.f32 %v1214, %v1346
  %v1348 = vpop.f32.mrb[0].mxu0
  %v1349 = vadd.f32 %v1216, %v1348
  %v1350 = vpop.f32.mrb[0].mxu0
  %v1351 = vadd.f32 %v1218, %v1350
  %v1352 = vpop.f32.mrb[0].mxu0
  %v1353 = vadd.f32 %v1220, %v1352
  %1354 = vmatprep.mubr.bf16.mxu0 %v425
  %1355 = vmatmul.mubr.bf16.gmra.mrb[0].mxu0 %v424
  %v1356 = vpop.f32.mrb[0].mxu0
  %v1357 = vadd.f32 %v1224, %v1356
  %v1358 = vpop.f32.mrb[0].mxu0
  %v1359 = vadd.f32 %v1226, %v1358
  %v1360 = vpop.f32.mrb[0].mxu0
  %v1361 = vadd.f32 %v1228, %v1360
  %v1362 = vpop.f32.mrb[0].mxu0
  %v1363 = vadd.f32 %v1230, %v1362
  %1364 = vdwg.mxu0
  %vm1365 = vcmask 130048
  %v1366 = vsel %vm1365, %v1269, 0.0
  %v1367 = vadd.f32 %v1267, %v1366
  %1368 = vadd.xlane.f32.xlu0 %v1367
  %v1369 = vpop.xlane.xlu0 %1368
  %v1370 = vsel %vm1365, %v1273, 0.0
  %v1371 = vadd.f32 %v1271, %v1370
  %1372 = vadd.xlane.f32.xlu0 %v1371
  %v1373 = vpop.xlane.xlu0 %1372
  %v1374 = vsel %vm1365, %v1279, 0.0
  %v1375 = vadd.f32 %v1277, %v1374
  %1376 = vadd.xlane.f32.xlu0 %v1375
  %v1377 = vpop.xlane.xlu0 %1376
  %v1378 = vsel %vm1365, %v1283, 0.0
  %v1379 = vadd.f32 %v1281, %v1378
  %1380 = vadd.xlane.f32.xlu0 %v1379
  %v1381 = vpop.xlane.xlu0 %1380
  %v1382 = vsel %vm1365, %v1289, 0.0
  %v1383 = vadd.f32 %v1287, %v1382
  %1384 = vadd.xlane.f32.xlu0 %v1383
  %v1385 = vpop.xlane.xlu0 %1384
  %v1386 = vsel %vm1365, %v1293, 0.0
  %v1387 = vadd.f32 %v1291, %v1386
  %1388 = vadd.xlane.f32.xlu0 %v1387
  %v1389 = vpop.xlane.xlu0 %1388
  %v1390 = vsel %vm1365, %v1299, 0.0
  %v1391 = vadd.f32 %v1297, %v1390
  %1392 = vadd.xlane.f32.xlu0 %v1391
  %v1393 = vpop.xlane.xlu0 %1392
  %v1394 = vsel %vm1365, %v1303, 0.0
  %v1395 = vadd.f32 %v1301, %v1394
  %1396 = vadd.xlane.f32.xlu0 %v1395
  %v1397 = vpop.xlane.xlu0 %1396
  %v1398 = vsel %vm1365, %v1309, 0.0
  %v1399 = vadd.f32 %v1307, %v1398
  %1400 = vadd.xlane.f32.xlu0 %v1399
  %v1401 = vpop.xlane.xlu0 %1400
  %v1402 = vsel %vm1365, %v1313, 0.0
  %v1403 = vadd.f32 %v1311, %v1402
  %1404 = vadd.xlane.f32.xlu0 %v1403
  %v1405 = vpop.xlane.xlu0 %1404
  %v1406 = vsel %vm1365, %v1319, 0.0
  %v1407 = vadd.f32 %v1317, %v1406
  %1408 = vadd.xlane.f32.xlu0 %v1407
  %v1409 = vpop.xlane.xlu0 %1408
  %v1410 = vsel %vm1365, %v1323, 0.0
  %v1411 = vadd.f32 %v1321, %v1410
  %1412 = vadd.xlane.f32.xlu0 %v1411
  %v1413 = vpop.xlane.xlu0 %1412
  %v1414 = vsel %vm1365, %v1329, 0.0
  %v1415 = vadd.f32 %v1327, %v1414
  %1416 = vadd.xlane.f32.xlu0 %v1415
  %v1417 = vpop.xlane.xlu0 %1416
  %v1418 = vsel %vm1365, %v1333, 0.0
  %v1419 = vadd.f32 %v1331, %v1418
  %1420 = vadd.xlane.f32.xlu0 %v1419
  %v1421 = vpop.xlane.xlu0 %1420
  %v1422 = vsel %vm1365, %v1339, 0.0
  %v1423 = vadd.f32 %v1337, %v1422
  %1424 = vadd.xlane.f32.xlu0 %v1423
  %v1425 = vpop.xlane.xlu0 %1424
  %v1426 = vsel %vm1365, %v1343, 0.0
  %v1427 = vadd.f32 %v1341, %v1426
  %1428 = vadd.xlane.f32.xlu0 %v1427
  %v1429 = vpop.xlane.xlu0 %1428
  %v1430 = vsel %vm1365, %v1349, 0.0
  %v1431 = vadd.f32 %v1347, %v1430
  %1432 = vadd.xlane.f32.xlu0 %v1431
  %v1433 = vpop.xlane.xlu0 %1432
  %v1434 = vsel %vm1365, %v1353, 0.0
  %v1435 = vadd.f32 %v1351, %v1434
  %1436 = vadd.xlane.f32.xlu0 %v1435
  %v1437 = vpop.xlane.xlu0 %1436
  %v1438 = vsel %vm1365, %v1359, 0.0
  %v1439 = vadd.f32 %v1357, %v1438
  %1440 = vadd.xlane.f32.xlu0 %v1439
  %v1441 = vpop.xlane.xlu0 %1440
  %v1442 = vsel %vm1365, %v1363, 0.0
  %v1443 = vadd.f32 %v1361, %v1442
  %1444 = vadd.xlane.f32.xlu0 %v1443
  %v1445 = vpop.xlane.xlu0 %1444
  %v1446 = vmul.f32 %v1369, 0.0069444445
  %v1447 = vmul.f32 %v1373, 0.0069444445
  %v1448 = vmul.f32 %v1377, 0.0069444445
  %v1449 = vmul.f32 %v1381, 0.0069444445
  %v1450 = vmul.f32 %v1385, 0.0069444445
  %v1451 = vmul.f32 %v1389, 0.0069444445
  %v1452 = vmul.f32 %v1393, 0.0069444445
  %v1453 = vmul.f32 %v1397, 0.0069444445
  %v1454 = vmul.f32 %v1401, 0.0069444445
  %v1455 = vmul.f32 %v1405, 0.0069444445
  %v1456 = vmul.f32 %v1409, 0.0069444445
  %v1457 = vmul.f32 %v1413, 0.0069444445
  %v1458 = vmul.f32 %v1417, 0.0069444445
  %v1459 = vmul.f32 %v1421, 0.0069444445
  %v1460 = vmul.f32 %v1425, 0.0069444445
  %v1461 = vmul.f32 %v1429, 0.0069444445
  %v1462 = vmul.f32 %v1433, 0.0069444445
  %v1463 = vmul.f32 %v1437, 0.0069444445
  %v1464 = vmul.f32 %v1441, 0.0069444445
  %v1465 = vmul.f32 %v1445, 0.0069444445
  %v1466 = vsub.f32 %v1267, %v1446
  %v1467 = vsub.f32 %v1269, %v1446
  %v1468 = vsub.f32 %v1271, %v1447
  %v1469 = vsub.f32 %v1273, %v1447
  %v1470 = vsub.f32 %v1277, %v1448
  %v1471 = vsub.f32 %v1279, %v1448
  %v1472 = vsub.f32 %v1281, %v1449
  %v1473 = vsub.f32 %v1283, %v1449
  %v1474 = vsub.f32 %v1287, %v1450
  %v1475 = vsub.f32 %v1289, %v1450
  %v1476 = vsub.f32 %v1291, %v1451
  %v1477 = vsub.f32 %v1293, %v1451
  %v1478 = vsub.f32 %v1297, %v1452
  %v1479 = vsub.f32 %v1299, %v1452
  %v1480 = vsub.f32 %v1301, %v1453
  %v1481 = vsub.f32 %v1303, %v1453
  %v1482 = vsub.f32 %v1307, %v1454
  %v1483 = vsub.f32 %v1309, %v1454
  %v1484 = vsub.f32 %v1311, %v1455
  %v1485 = vsub.f32 %v1313, %v1455
  %v1486 = vsub.f32 %v1317, %v1456
  %v1487 = vsub.f32 %v1319, %v1456
  %v1488 = vsub.f32 %v1321, %v1457
  %v1489 = vsub.f32 %v1323, %v1457
  %v1490 = vsub.f32 %v1327, %v1458
  %v1491 = vsub.f32 %v1329, %v1458
  %v1492 = vsub.f32 %v1331, %v1459
  %v1493 = vsub.f32 %v1333, %v1459
  %v1494 = vsub.f32 %v1337, %v1460
  %v1495 = vsub.f32 %v1339, %v1460
  %v1496 = vsub.f32 %v1341, %v1461
  %v1497 = vsub.f32 %v1343, %v1461
  %v1498 = vsub.f32 %v1347, %v1462
  %v1499 = vsub.f32 %v1349, %v1462
  %v1500 = vsub.f32 %v1351, %v1463
  %v1501 = vsub.f32 %v1353, %v1463
  %v1502 = vsub.f32 %v1357, %v1464
  %v1503 = vsub.f32 %v1359, %v1464
  %v1504 = vsub.f32 %v1361, %v1465
  %v1505 = vsub.f32 %v1363, %v1465
  %v1506 = vmul.f32 %v1466, %v1466
  %v1507 = vmul.f32 %v1467, %v1467
  %v1508 = vmul.f32 %v1468, %v1468
  %v1509 = vmul.f32 %v1469, %v1469
  %v1510 = vmul.f32 %v1470, %v1470
  %v1511 = vmul.f32 %v1471, %v1471
  %v1512 = vmul.f32 %v1472, %v1472
  %v1513 = vmul.f32 %v1473, %v1473
  %v1514 = vmul.f32 %v1474, %v1474
  %v1515 = vmul.f32 %v1475, %v1475
  %v1516 = vmul.f32 %v1476, %v1476
  %v1517 = vmul.f32 %v1477, %v1477
  %v1518 = vmul.f32 %v1478, %v1478
  %v1519 = vmul.f32 %v1479, %v1479
  %v1520 = vmul.f32 %v1480, %v1480
  %v1521 = vmul.f32 %v1481, %v1481
  %v1522 = vmul.f32 %v1482, %v1482
  %v1523 = vmul.f32 %v1483, %v1483
  %v1524 = vmul.f32 %v1484, %v1484
  %v1525 = vmul.f32 %v1485, %v1485
  %v1526 = vmul.f32 %v1486, %v1486
  %v1527 = vmul.f32 %v1487, %v1487
  %v1528 = vmul.f32 %v1488, %v1488
  %v1529 = vmul.f32 %v1489, %v1489
  %v1530 = vmul.f32 %v1490, %v1490
  %v1531 = vmul.f32 %v1491, %v1491
  %v1532 = vmul.f32 %v1492, %v1492
  %v1533 = vmul.f32 %v1493, %v1493
  %v1534 = vmul.f32 %v1494, %v1494
  %v1535 = vmul.f32 %v1495, %v1495
  %v1536 = vmul.f32 %v1496, %v1496
  %v1537 = vmul.f32 %v1497, %v1497
  %v1538 = vmul.f32 %v1498, %v1498
  %v1539 = vmul.f32 %v1499, %v1499
  %v1540 = vmul.f32 %v1500, %v1500
  %v1541 = vmul.f32 %v1501, %v1501
  %v1542 = vmul.f32 %v1502, %v1502
  %v1543 = vmul.f32 %v1503, %v1503
  %v1544 = vmul.f32 %v1504, %v1504
  %v1545 = vmul.f32 %v1505, %v1505
  %v1546 = vsel %vm1365, %v1507, 0.0
  %v1547 = vadd.f32 %v1506, %v1546
  %1548 = vadd.xlane.f32.xlu0 %v1547
  %v1549 = vpop.xlane.xlu0 %1548
  %v1550 = vsel %vm1365, %v1509, 0.0
  %v1551 = vadd.f32 %v1508, %v1550
  %1552 = vadd.xlane.f32.xlu0 %v1551
  %v1553 = vpop.xlane.xlu0 %1552
  %v1554 = vsel %vm1365, %v1511, 0.0
  %v1555 = vadd.f32 %v1510, %v1554
  %1556 = vadd.xlane.f32.xlu0 %v1555
  %v1557 = vpop.xlane.xlu0 %1556
  %v1558 = vsel %vm1365, %v1513, 0.0
  %v1559 = vadd.f32 %v1512, %v1558
  %1560 = vadd.xlane.f32.xlu0 %v1559
  %v1561 = vpop.xlane.xlu0 %1560
  %v1562 = vsel %vm1365, %v1515, 0.0
  %v1563 = vadd.f32 %v1514, %v1562
  %1564 = vadd.xlane.f32.xlu0 %v1563
  %v1565 = vpop.xlane.xlu0 %1564
  %v1566 = vsel %vm1365, %v1517, 0.0
  %v1567 = vadd.f32 %v1516, %v1566
  %1568 = vadd.xlane.f32.xlu0 %v1567
  %v1569 = vpop.xlane.xlu0 %1568
  %v1570 = vsel %vm1365, %v1519, 0.0
  %v1571 = vadd.f32 %v1518, %v1570
  %1572 = vadd.xlane.f32.xlu0 %v1571
  %v1573 = vpop.xlane.xlu0 %1572
  %v1574 = vsel %vm1365, %v1521, 0.0
  %v1575 = vadd.f32 %v1520, %v1574
  %1576 = vadd.xlane.f32.xlu0 %v1575
  %v1577 = vpop.xlane.xlu0 %1576
  %v1578 = vsel %vm1365, %v1523, 0.0
  %v1579 = vadd.f32 %v1522, %v1578
  %1580 = vadd.xlane.f32.xlu0 %v1579
  %v1581 = vpop.xlane.xlu0 %1580
  %v1582 = vsel %vm1365, %v1525, 0.0
  %v1583 = vadd.f32 %v1524, %v1582
  %1584 = vadd.xlane.f32.xlu0 %v1583
  %v1585 = vpop.xlane.xlu0 %1584
  %v1586 = vsel %vm1365, %v1527, 0.0
  %v1587 = vadd.f32 %v1526, %v1586
  %1588 = vadd.xlane.f32.xlu0 %v1587
  %v1589 = vpop.xlane.xlu0 %1588
  %v1590 = vsel %vm1365, %v1529, 0.0
  %v1591 = vadd.f32 %v1528, %v1590
  %1592 = vadd.xlane.f32.xlu0 %v1591
  %v1593 = vpop.xlane.xlu0 %1592
  %v1594 = vsel %vm1365, %v1531, 0.0
  %v1595 = vadd.f32 %v1530, %v1594
  %1596 = vadd.xlane.f32.xlu0 %v1595
  %v1597 = vpop.xlane.xlu0 %1596
  %v1598 = vsel %vm1365, %v1533, 0.0
  %v1599 = vadd.f32 %v1532, %v1598
  %1600 = vadd.xlane.f32.xlu0 %v1599
  %v1601 = vpop.xlane.xlu0 %1600
  %v1602 = vsel %vm1365, %v1535, 0.0
  %v1603 = vadd.f32 %v1534, %v1602
  %1604 = vadd.xlane.f32.xlu0 %v1603
  %v1605 = vpop.xlane.xlu0 %1604
  %v1606 = vsel %vm1365, %v1537, 0.0
  %v1607 = vadd.f32 %v1536, %v1606
  %1608 = vadd.xlane.f32.xlu0 %v1607
  %v1609 = vpop.xlane.xlu0 %1608
  %v1610 = vsel %vm1365, %v1539, 0.0
  %v1611 = vadd.f32 %v1538, %v1610
  %1612 = vadd.xlane.f32.xlu0 %v1611
  %v1613 = vpop.xlane.xlu0 %1612
  %v1614 = vsel %vm1365, %v1541, 0.0
  %v1615 = vadd.f32 %v1540, %v1614
  %1616 = vadd.xlane.f32.xlu0 %v1615
  %v1617 = vpop.xlane.xlu0 %1616
  %v1618 = vsel %vm1365, %v1543, 0.0
  %v1619 = vadd.f32 %v1542, %v1618
  %1620 = vadd.xlane.f32.xlu0 %v1619
  %v1621 = vpop.xlane.xlu0 %1620
  %v1622 = vsel %vm1365, %v1545, 0.0
  %v1623 = vadd.f32 %v1544, %v1622
  %1624 = vadd.xlane.f32.xlu0 %v1623
  %v1625 = vpop.xlane.xlu0 %1624
  %v1626 = vmul.f32 %v1549, 0.0069444445
  %v1627 = vmul.f32 %v1553, 0.0069444445
  %v1628 = vmul.f32 %v1557, 0.0069444445
  %v1629 = vmul.f32 %v1561, 0.0069444445
  %v1630 = vmul.f32 %v1565, 0.0069444445
  %v1631 = vmul.f32 %v1569, 0.0069444445
  %v1632 = vmul.f32 %v1573, 0.0069444445
  %v1633 = vmul.f32 %v1577, 0.0069444445
  %v1634 = vmul.f32 %v1581, 0.0069444445
  %v1635 = vmul.f32 %v1585, 0.0069444445
  %v1636 = vmul.f32 %v1589, 0.0069444445
  %v1637 = vmul.f32 %v1593, 0.0069444445
  %v1638 = vmul.f32 %v1597, 0.0069444445
  %v1639 = vmul.f32 %v1601, 0.0069444445
  %v1640 = vmul.f32 %v1605, 0.0069444445
  %v1641 = vmul.f32 %v1609, 0.0069444445
  %v1642 = vmul.f32 %v1613, 0.0069444445
  %v1643 = vmul.f32 %v1617, 0.0069444445
  %v1644 = vmul.f32 %v1621, 0.0069444445
  %v1645 = vmul.f32 %v1625, 0.0069444445
  %v1646 = vld [vmem:[%s2] sm:$0xff]
  %v1647 = vld [vmem:[%s2 + $0x8] sm:$0xff]
  %v1648 = vld [vmem:[%s2 + $0x10] sm:$0xff]
  %v1649 = vld [vmem:[%s2 + $0x18] sm:$0xff]
  %v1650 = vld [vmem:[%s2 + $0x20] sm:$0xff]
  %v1651 = vld [vmem:[%s2 + $0x28] sm:$0xff]
  %v1652 = vld [vmem:[%s2 + $0x30] sm:$0xff]
  %v1653 = vld [vmem:[%s2 + $0x38] sm:$0xff]
  %v1654 = vld [vmem:[%s2 + $0x40] sm:$0xff]
  %v1655 = vld [vmem:[%s2 + $0x48] sm:$0xff]
  %v1656 = vld [vmem:[%s2 + $0x50] sm:$0xff]
  %v1657 = vld [vmem:[%s2 + $0x58] sm:$0xff]
  %v1658 = vld [vmem:[%s2 + $0x60] sm:$0xff]
  %v1659 = vld [vmem:[%s2 + $0x68] sm:$0xff]
  %v1660 = vld [vmem:[%s2 + $0x70] sm:$0xff]
  %v1661 = vld [vmem:[%s2 + $0x78] sm:$0xff]
  %v1662 = vld [vmem:[%s2 + $0x80] sm:$0xff]
  %v1663 = vld [vmem:[%s2 + $0x88] sm:$0xff]
  %v1664 = vld [vmem:[%s2 + $0x90] sm:$0xff]
  %v1665 = vld [vmem:[%s2 + $0x98] sm:$0xff]
  %v1666 = vadd.f32 %v1626, 0.001
  %v1667 = vadd.f32 %v1627, 0.001
  %v1668 = vadd.f32 %v1628, 0.001
  %v1669 = vadd.f32 %v1629, 0.001
  %v1670 = vadd.f32 %v1630, 0.001
  %v1671 = vadd.f32 %v1631, 0.001
  %v1672 = vadd.f32 %v1632, 0.001
  %v1673 = vadd.f32 %v1633, 0.001
  %v1674 = vadd.f32 %v1634, 0.001
  %v1675 = vadd.f32 %v1635, 0.001
  %v1676 = vadd.f32 %v1636, 0.001
  %v1677 = vadd.f32 %v1637, 0.001
  %v1678 = vadd.f32 %v1638, 0.001
  %v1679 = vadd.f32 %v1639, 0.001
  %v1680 = vadd.f32 %v1640, 0.001
  %v1681 = vadd.f32 %v1641, 0.001
  %v1682 = vadd.f32 %v1642, 0.001
  %v1683 = vadd.f32 %v1643, 0.001
  %v1684 = vadd.f32 %v1644, 0.001
  %v1685 = vadd.f32 %v1645, 0.001
  %v1686 = vrsqrt.pop %v1666
  %v1687 = vrsqrt.pop %v1667
  %v1688 = vrsqrt.pop %v1668
  %v1689 = vrsqrt.pop %v1669
  %v1690 = vrsqrt.pop %v1670
  %v1691 = vrsqrt.pop %v1671
  %v1692 = vrsqrt.pop %v1672
  %v1693 = vrsqrt.pop %v1673
  %v1694 = vrsqrt.pop %v1674
  %v1695 = vrsqrt.pop %v1675
  %v1696 = vrsqrt.pop %v1676
  %v1697 = vrsqrt.pop %v1677
  %v1698 = vrsqrt.pop %v1678
  %v1699 = vrsqrt.pop %v1679
  %v1700 = vrsqrt.pop %v1680
  %v1701 = vrsqrt.pop %v1681
  %v1702 = vrsqrt.pop %v1682
  %v1703 = vrsqrt.pop %v1683
  %v1704 = vrsqrt.pop %v1684
  %v1705 = vrsqrt.pop %v1685
  %v1706 = vmul.f32 %v1646, %v1686
  %v1707 = vmul.f32 %v1647, %v1687
  %v1708 = vmul.f32 %v1648, %v1688
  %v1709 = vmul.f32 %v1649, %v1689
  %v1710 = vmul.f32 %v1650, %v1690
  %v1711 = vmul.f32 %v1651, %v1691
  %v1712 = vmul.f32 %v1652, %v1692
  %v1713 = vmul.f32 %v1653, %v1693
  %v1714 = vmul.f32 %v1654, %v1694
  %v1715 = vmul.f32 %v1655, %v1695
  %v1716 = vmul.f32 %v1656, %v1696
  %v1717 = vmul.f32 %v1657, %v1697
  %v1718 = vmul.f32 %v1658, %v1698
  %v1719 = vmul.f32 %v1659, %v1699
  %v1720 = vmul.f32 %v1660, %v1700
  %v1721 = vmul.f32 %v1661, %v1701
  %v1722 = vmul.f32 %v1662, %v1702
  %v1723 = vmul.f32 %v1663, %v1703
  %v1724 = vmul.f32 %v1664, %v1704
  %v1725 = vmul.f32 %v1665, %v1705
  %1727 = vset.pattern.permute.xlu0 0
  %1728 = vperm.xlu0 %1727, %v1706
  %v1729 = vpop.permute.xlu0 %1728
  %1732 = vset.pattern.permute.xlu0 0
  %1733 = vperm.xlu0 %1732, %v1707
  %v1734 = vpop.permute.xlu0 %1733
  %1737 = vset.pattern.permute.xlu0 0
  %1738 = vperm.xlu0 %1737, %v1708
  %v1739 = vpop.permute.xlu0 %1738
  %1742 = vset.pattern.permute.xlu0 0
  %1743 = vperm.xlu0 %1742, %v1709
  %v1744 = vpop.permute.xlu0 %1743
  %1747 = vset.pattern.permute.xlu0 0
  %1748 = vperm.xlu0 %1747, %v1710
  %v1749 = vpop.permute.xlu0 %1748
  %1752 = vset.pattern.permute.xlu0 0
  %1753 = vperm.xlu0 %1752, %v1711
  %v1754 = vpop.permute.xlu0 %1753
  %1757 = vset.pattern.permute.xlu0 0
  %1758 = vperm.xlu0 %1757, %v1712
  %v1759 = vpop.permute.xlu0 %1758
  %1762 = vset.pattern.permute.xlu0 0
  %1763 = vperm.xlu0 %1762, %v1713
  %v1764 = vpop.permute.xlu0 %1763
  %1767 = vset.pattern.permute.xlu0 0
  %1768 = vperm.xlu0 %1767, %v1714
  %v1769 = vpop.permute.xlu0 %1768
  %1772 = vset.pattern.permute.xlu0 0
  %1773 = vperm.xlu0 %1772, %v1715
  %v1774 = vpop.permute.xlu0 %1773
  %1777 = vset.pattern.permute.xlu0 0
  %1778 = vperm.xlu0 %1777, %v1716
  %v1779 = vpop.permute.xlu0 %1778
  %1782 = vset.pattern.permute.xlu0 0
  %1783 = vperm.xlu0 %1782, %v1717
  %v1784 = vpop.permute.xlu0 %1783
  %1787 = vset.pattern.permute.xlu0 0
  %1788 = vperm.xlu0 %1787, %v1718
  %v1789 = vpop.permute.xlu0 %1788
  %1792 = vset.pattern.permute.xlu0 0
  %1793 = vperm.xlu0 %1792, %v1719
  %v1794 = vpop.permute.xlu0 %1793
  %1797 = vset.pattern.permute.xlu0 0
  %1798 = vperm.xlu0 %1797, %v1720
  %v1799 = vpop.permute.xlu0 %1798
  %1802 = vset.pattern.permute.xlu0 0
  %1803 = vperm.xlu0 %1802, %v1721
  %v1804 = vpop.permute.xlu0 %1803
  %1807 = vset.pattern.permute.xlu0 0
  %1808 = vperm.xlu0 %1807, %v1722
  %v1809 = vpop.permute.xlu0 %1808
  %1812 = vset.pattern.permute.xlu0 0
  %1813 = vperm.xlu0 %1812, %v1723
  %v1814 = vpop.permute.xlu0 %1813
  %1817 = vset.pattern.permute.xlu0 0
  %1818 = vperm.xlu0 %1817, %v1724
  %v1819 = vpop.permute.xlu0 %1818
  %1822 = vset.pattern.permute.xlu0 0
  %1823 = vperm.xlu0 %1822, %v1725
  %v1824 = vpop.permute.xlu0 %1823
  %v1826 = vmul.f32 %v1466, %v1729
  %v1827 = vmul.f32 %v1467, %v1729
  %v1828 = vmul.f32 %v1468, %v1734
  %v1829 = vmul.f32 %v1469, %v1734
  %v1830 = vmul.f32 %v1470, %v1739
  %v1831 = vmul.f32 %v1471, %v1739
  %v1832 = vmul.f32 %v1472, %v1744
  %v1833 = vmul.f32 %v1473, %v1744
  %v1834 = vmul.f32 %v1474, %v1749
  %v1835 = vmul.f32 %v1475, %v1749
  %v1836 = vmul.f32 %v1476, %v1754
  %v1837 = vmul.f32 %v1477, %v1754
  %v1838 = vmul.f32 %v1478, %v1759
  %v1839 = vmul.f32 %v1479, %v1759
  %v1840 = vmul.f32 %v1480, %v1764
  %v1841 = vmul.f32 %v1481, %v1764
  %v1842 = vmul.f32 %v1482, %v1769
  %v1843 = vmul.f32 %v1483, %v1769
  %v1844 = vmul.f32 %v1484, %v1774
  %v1845 = vmul.f32 %v1485, %v1774
  %v1846 = vmul.f32 %v1486, %v1779
  %v1847 = vmul.f32 %v1487, %v1779
  %v1848 = vmul.f32 %v1488, %v1784
  %v1849 = vmul.f32 %v1489, %v1784
  %v1850 = vmul.f32 %v1490, %v1789
  %v1851 = vmul.f32 %v1491, %v1789
  %v1852 = vmul.f32 %v1492, %v1794
  %v1853 = vmul.f32 %v1493, %v1794
  %v1854 = vmul.f32 %v1494, %v1799
  %v1855 = vmul.f32 %v1495, %v1799
  %v1856 = vmul.f32 %v1496, %v1804
  %v1857 = vmul.f32 %v1497, %v1804
  %v1858 = vmul.f32 %v1498, %v1809
  %v1859 = vmul.f32 %v1499, %v1809
  %v1860 = vmul.f32 %v1500, %v1814
  %v1861 = vmul.f32 %v1501, %v1814
  %v1862 = vmul.f32 %v1502, %v1819
  %v1863 = vmul.f32 %v1503, %v1819
  %v1864 = vmul.f32 %v1504, %v1824
  %v1865 = vmul.f32 %v1505, %v1824
  %v1866 = vld [vmem:[%s3] sm:$0xff]
  %v1867 = vld [vmem:[%s3 + $0x8] sm:$0xff]
  %v1868 = vld [vmem:[%s3 + $0x10] sm:$0xff]
  %v1869 = vld [vmem:[%s3 + $0x18] sm:$0xff]
  %v1870 = vld [vmem:[%s3 + $0x20] sm:$0xff]
  %v1871 = vld [vmem:[%s3 + $0x28] sm:$0xff]
  %v1872 = vld [vmem:[%s3 + $0x30] sm:$0xff]
  %v1873 = vld [vmem:[%s3 + $0x38] sm:$0xff]
  %v1874 = vld [vmem:[%s3 + $0x40] sm:$0xff]
  %v1875 = vld [vmem:[%s3 + $0x48] sm:$0xff]
  %v1876 = vld [vmem:[%s3 + $0x50] sm:$0xff]
  %v1877 = vld [vmem:[%s3 + $0x58] sm:$0xff]
  %v1878 = vld [vmem:[%s3 + $0x60] sm:$0xff]
  %v1879 = vld [vmem:[%s3 + $0x68] sm:$0xff]
  %v1880 = vld [vmem:[%s3 + $0x70] sm:$0xff]
  %v1881 = vld [vmem:[%s3 + $0x78] sm:$0xff]
  %v1882 = vld [vmem:[%s3 + $0x80] sm:$0xff]
  %v1883 = vld [vmem:[%s3 + $0x88] sm:$0xff]
  %v1884 = vld [vmem:[%s3 + $0x90] sm:$0xff]
  %v1885 = vld [vmem:[%s3 + $0x98] sm:$0xff]
  %1887 = vset.pattern.permute.xlu0 0
  %1888 = vperm.xlu0 %1887, %v1866
  %v1889 = vpop.permute.xlu0 %1888
  %1892 = vset.pattern.permute.xlu0 0
  %1893 = vperm.xlu0 %1892, %v1867
  %v1894 = vpop.permute.xlu0 %1893
  %1897 = vset.pattern.permute.xlu0 0
  %1898 = vperm.xlu0 %1897, %v1868
  %v1899 = vpop.permute.xlu0 %1898
  %1902 = vset.pattern.permute.xlu0 0
  %1903 = vperm.xlu0 %1902, %v1869
  %v1904 = vpop.permute.xlu0 %1903
  %1907 = vset.pattern.permute.xlu0 0
  %1908 = vperm.xlu0 %1907, %v1870
  %v1909 = vpop.permute.xlu0 %1908
  %1912 = vset.pattern.permute.xlu0 0
  %1913 = vperm.xlu0 %1912, %v1871
  %v1914 = vpop.permute.xlu0 %1913
  %1917 = vset.pattern.permute.xlu0 0
  %1918 = vperm.xlu0 %1917, %v1872
  %v1919 = vpop.permute.xlu0 %1918
  %1922 = vset.pattern.permute.xlu0 0
  %1923 = vperm.xlu0 %1922, %v1873
  %v1924 = vpop.permute.xlu0 %1923
  %1927 = vset.pattern.permute.xlu0 0
  %1928 = vperm.xlu0 %1927, %v1874
  %v1929 = vpop.permute.xlu0 %1928
  %1932 = vset.pattern.permute.xlu0 0
  %1933 = vperm.xlu0 %1932, %v1875
  %v1934 = vpop.permute.xlu0 %1933
  %1937 = vset.pattern.permute.xlu0 0
  %1938 = vperm.xlu0 %1937, %v1876
  %v1939 = vpop.permute.xlu0 %1938
  %1942 = vset.pattern.permute.xlu0 0
  %1943 = vperm.xlu0 %1942, %v1877
  %v1944 = vpop.permute.xlu0 %1943
  %1947 = vset.pattern.permute.xlu0 0
  %1948 = vperm.xlu0 %1947, %v1878
  %v1949 = vpop.permute.xlu0 %1948
  %1952 = vset.pattern.permute.xlu0 0
  %1953 = vperm.xlu0 %1952, %v1879
  %v1954 = vpop.permute.xlu0 %1953
  %1957 = vset.pattern.permute.xlu0 0
  %1958 = vperm.xlu0 %1957, %v1880
  %v1959 = vpop.permute.xlu0 %1958
  %1962 = vset.pattern.permute.xlu0 0
  %1963 = vperm.xlu0 %1962, %v1881
  %v1964 = vpop.permute.xlu0 %1963
  %1967 = vset.pattern.permute.xlu0 0
  %1968 = vperm.xlu0 %1967, %v1882
  %v1969 = vpop.permute.xlu0 %1968
  %1972 = vset.pattern.permute.xlu0 0
  %1973 = vperm.xlu0 %1972, %v1883
  %v1974 = vpop.permute.xlu0 %1973
  %1977 = vset.pattern.permute.xlu0 0
  %1978 = vperm.xlu0 %1977, %v1884
  %v1979 = vpop.permute.xlu0 %1978
  %1982 = vset.pattern.permute.xlu0 0
  %1983 = vperm.xlu0 %1982, %v1885
  %v1984 = vpop.permute.xlu0 %1983
  %v1986 = vadd.f32 %v1826, %v1889
  %v1987 = vadd.f32 %v1827, %v1889
  %v1988 = vadd.f32 %v1828, %v1894
  %v1989 = vadd.f32 %v1829, %v1894
  %v1990 = vadd.f32 %v1830, %v1899
  %v1991 = vadd.f32 %v1831, %v1899
  %v1992 = vadd.f32 %v1832, %v1904
  %v1993 = vadd.f32 %v1833, %v1904
  %v1994 = vadd.f32 %v1834, %v1909
  %v1995 = vadd.f32 %v1835, %v1909
  %v1996 = vadd.f32 %v1836, %v1914
  %v1997 = vadd.f32 %v1837, %v1914
  %v1998 = vadd.f32 %v1838, %v1919
  %v1999 = vadd.f32 %v1839, %v1919
  %v2000 = vadd.f32 %v1840, %v1924
  %v2001 = vadd.f32 %v1841, %v1924
  %v2002 = vadd.f32 %v1842, %v1929
  %v2003 = vadd.f32 %v1843, %v1929
  %v2004 = vadd.f32 %v1844, %v1934
  %v2005 = vadd.f32 %v1845, %v1934
  %v2006 = vadd.f32 %v1846, %v1939
  %v2007 = vadd.f32 %v1847, %v1939
  %v2008 = vadd.f32 %v1848, %v1944
  %v2009 = vadd.f32 %v1849, %v1944
  %v2010 = vadd.f32 %v1850, %v1949
  %v2011 = vadd.f32 %v1851, %v1949
  %v2012 = vadd.f32 %v1852, %v1954
  %v2013 = vadd.f32 %v1853, %v1954
  %v2014 = vadd.f32 %v1854, %v1959
  %v2015 = vadd.f32 %v1855, %v1959
  %v2016 = vadd.f32 %v1856, %v1964
  %v2017 = vadd.f32 %v1857, %v1964
  %v2018 = vadd.f32 %v1858, %v1969
  %v2019 = vadd.f32 %v1859, %v1969
  %v2020 = vadd.f32 %v1860, %v1974
  %v2021 = vadd.f32 %v1861, %v1974
  %v2022 = vadd.f32 %v1862, %v1979
  %v2023 = vadd.f32 %v1863, %v1979
  %v2024 = vadd.f32 %v1864, %v1984
  %v2025 = vadd.f32 %v1865, %v1984
  %v2026 = vmax.f32 %v1986, 0.0
  %v2027 = vmax.f32 %v1987, 0.0
  %v2028 = vmax.f32 %v1988, 0.0
  %v2029 = vmax.f32 %v1989, 0.0
  %v2030 = vmax.f32 %v1990, 0.0
  %v2031 = vmax.f32 %v1991, 0.0
  %v2032 = vmax.f32 %v1992, 0.0
  %v2033 = vmax.f32 %v1993, 0.0
  %v2034 = vmax.f32 %v1994, 0.0
  %v2035 = vmax.f32 %v1995, 0.0
  %v2036 = vmax.f32 %v1996, 0.0
  %v2037 = vmax.f32 %v1997, 0.0
  %v2038 = vmax.f32 %v1998, 0.0
  %v2039 = vmax.f32 %v1999, 0.0
  %v2040 = vmax.f32 %v2000, 0.0
  %v2041 = vmax.f32 %v2001, 0.0
  %v2042 = vmax.f32 %v2002, 0.0
  %v2043 = vmax.f32 %v2003, 0.0
  %v2044 = vmax.f32 %v2004, 0.0
  %v2045 = vmax.f32 %v2005, 0.0
  %v2046 = vmax.f32 %v2006, 0.0
  %v2047 = vmax.f32 %v2007, 0.0
  %v2048 = vmax.f32 %v2008, 0.0
  %v2049 = vmax.f32 %v2009, 0.0
  %v2050 = vmax.f32 %v2010, 0.0
  %v2051 = vmax.f32 %v2011, 0.0
  %v2052 = vmax.f32 %v2012, 0.0
  %v2053 = vmax.f32 %v2013, 0.0
  %v2054 = vmax.f32 %v2014, 0.0
  %v2055 = vmax.f32 %v2015, 0.0
  %v2056 = vmax.f32 %v2016, 0.0
  %v2057 = vmax.f32 %v2017, 0.0
  %v2058 = vmax.f32 %v2018, 0.0
  %v2059 = vmax.f32 %v2019, 0.0
  %v2060 = vmax.f32 %v2020, 0.0
  %v2061 = vmax.f32 %v2021, 0.0
  %v2062 = vmax.f32 %v2022, 0.0
  %v2063 = vmax.f32 %v2023, 0.0
  %v2064 = vmax.f32 %v2024, 0.0
  %v2065 = vmax.f32 %v2025, 0.0
  %v2066 = vpack.c.bf16 %v2028, %v2026
  %v2067 = vpack.c.bf16 %v2029, %v2027
  %v2068 = vpack.c.bf16 %v2032, %v2030
  %v2069 = vpack.c.bf16 %v2033, %v2031
  %v2070 = vpack.c.bf16 %v2036, %v2034
  %v2071 = vpack.c.bf16 %v2037, %v2035
  %v2072 = vpack.c.bf16 %v2040, %v2038
  %v2073 = vpack.c.bf16 %v2041, %v2039
  %v2074 = vpack.c.bf16 %v2044, %v2042
  %v2075 = vpack.c.bf16 %v2045, %v2043
  %v2076 = vpack.c.bf16 %v2048, %v2046
  %v2077 = vpack.c.bf16 %v2049, %v2047
  %v2078 = vpack.c.bf16 %v2052, %v2050
  %v2079 = vpack.c.bf16 %v2053, %v2051
  %v2080 = vpack.c.bf16 %v2056, %v2054
  %v2081 = vpack.c.bf16 %v2057, %v2055
  %v2082 = vpack.c.bf16 %v2060, %v2058
  %v2083 = vpack.c.bf16 %v2061, %v2059
  %v2084 = vpack.c.bf16 %v2064, %v2062
  %v2085 = vpack.c.bf16 %v2065, %v2063
  %2086 = vst [vmem:[#allocation2] sm:$0xff] 0
  %2087 = vst [vmem:[#allocation2 + $0x8] sm:$0xff] 0
  %2088 = vst [vmem:[#allocation2 + $0x10] sm:$0xff] 0
  %2089 = vst [vmem:[#allocation2 + $0x18] sm:$0xff] 0
  %2090 = vst [vmem:[#allocation2 + $0x20] sm:$0xff] 0
  %2091 = vst [vmem:[#allocation2 + $0x28] sm:$0xff] 0
  %2092 = vst [vmem:[#allocation2 + $0x30] sm:$0xff] 0
  %2093 = vst [vmem:[#allocation2 + $0x38] sm:$0xff] 0
  %2094 = vst [vmem:[#allocation2 + $0x40] sm:$0xff] 0
  %2095 = vst [vmem:[#allocation2 + $0x48] sm:$0xff] 0
  %2096 = vst [vmem:[#allocation2 + $0x50] sm:$0xff] 0
  %2097 = vst [vmem:[#allocation2 + $0x58] sm:$0xff] 0
  %2098 = vst [vmem:[#allocation2 + $0x60] sm:$0xff] 0
  %2099 = vst [vmem:[#allocation2 + $0x68] sm:$0xff] 0
  %2100 = vst [vmem:[#allocation2 + $0x70] sm:$0xff] 0
  %2101 = vst [vmem:[#allocation2 + $0x78] sm:$0xff] 0
  %2102 = vst [vmem:[#allocation2 + $0x80] sm:$0xff] 0
  %2103 = vst [vmem:[#allocation2 + $0x88] sm:$0xff] 0
  %2104 = vst [vmem:[#allocation2 + $0x90] sm:$0xff] 0
  %2105 = vst [vmem:[#allocation2 + $0x98] sm:$0xff] 0
  %2106 = vst [vmem:[#allocation2] sm:$0xff] %v2066
  %2107 = vst.msk [vmem:[#allocation2 + $0x8] sm:$0xff] %vm1365, %v2067
  %2108 = vst [vmem:[#allocation2 + $0x10] sm:$0xff] %v2068
  %2109 = vst.msk [vmem:[#allocation2 + $0x18] sm:$0xff] %vm1365, %v2069
  %2110 = vst [vmem:[#allocation2 + $0x20] sm:$0xff] %v2070
  %2111 = vst.msk [vmem:[#allocation2 + $0x28] sm:$0xff] %vm1365, %v2071
  %2112 = vst [vmem:[#allocation2 + $0x30] sm:$0xff] %v2072
  %2113 = vst.msk [vmem:[#allocation2 + $0x38] sm:$0xff] %vm1365, %v2073
  %2114 = vst [vmem:[#allocation2 + $0x40] sm:$0xff] %v2074
  %2115 = vst.msk [vmem:[#allocation2 + $0x48] sm:$0xff] %vm1365, %v2075
  %2116 = vst [vmem:[#allocation2 + $0x50] sm:$0xff] %v2076
  %2117 = vst.msk [vmem:[#allocation2 + $0x58] sm:$0xff] %vm1365, %v2077
  %2118 = vst [vmem:[#allocation2 + $0x60] sm:$0xff] %v2078
  %2119 = vst.msk [vmem:[#allocation2 + $0x68] sm:$0xff] %vm1365, %v2079
  %2120 = vst [vmem:[#allocation2 + $0x70] sm:$0xff] %v2080
  %2121 = vst.msk [vmem:[#allocation2 + $0x78] sm:$0xff] %vm1365, %v2081
  %2122 = vst [vmem:[#allocation2 + $0x80] sm:$0xff] %v2082
  %2123 = vst.msk [vmem:[#allocation2 + $0x88] sm:$0xff] %vm1365, %v2083
  %2124 = vst [vmem:[#allocation2 + $0x90] sm:$0xff] %v2084
  %2125 = vst.msk [vmem:[#allocation2 + $0x98] sm:$0xff] %vm1365, %v2085
  %v2126 = vld [vmem:[%s4] sm:$0xff]
  %v2127 = vld [vmem:[%s4 + $0x8] sm:$0xff]
  %v2128 = vld [vmem:[%s4 + $0x10] sm:$0xff]
  %v2129 = vld [vmem:[%s4 + $0x18] sm:$0xff]
  %v2130 = vld [vmem:[%s4 + $0x20] sm:$0xff]
  %v2131 = vld [vmem:[%s4 + $0x28] sm:$0xff]
  %v2132 = vld [vmem:[%s4 + $0x30] sm:$0xff]
  %v2133 = vld [vmem:[%s4 + $0x38] sm:$0xff]
  %v2134 = vld [vmem:[%s4 + $0x40] sm:$0xff]
  %v2135 = vld [vmem:[%s4 + $0x48] sm:$0xff]
  %v2136 = vld [vmem:[%s4 + $0x50] sm:$0xff]
  %v2137 = vld [vmem:[%s4 + $0x58] sm:$0xff]
  %v2138 = vld [vmem:[%s4 + $0x60] sm:$0xff]
  %v2139 = vld [vmem:[%s4 + $0x68] sm:$0xff]
  %v2140 = vld [vmem:[%s4 + $0x70] sm:$0xff]
  %v2141 = vld [vmem:[%s4 + $0x78] sm:$0xff]
  %v2142 = vld [vmem:[%s4 + $0x80] sm:$0xff]
  %v2143 = vld [vmem:[%s4 + $0x88] sm:$0xff]
  %v2144 = vld [vmem:[%s4 + $0x90] sm:$0xff]
  %v2145 = vld [vmem:[%s4 + $0x98] sm:$0xff]
  %v2146 = vld [vmem:[%s4 + $0xa0] sm:$0xff]
  %v2147 = vld [vmem:[%s4 + $0xa8] sm:$0xff]
  %v2148 = vld [vmem:[%s4 + $0xb0] sm:$0xff]
  %v2149 = vld [vmem:[%s4 + $0xb8] sm:$0xff]
  %v2150 = vld [vmem:[%s4 + $0xc0] sm:$0xff]
  %v2151 = vld [vmem:[%s4 + $0xc8] sm:$0xff]
  %v2152 = vld [vmem:[%s4 + $0xd0] sm:$0xff]
  %v2153 = vld [vmem:[%s4 + $0xd8] sm:$0xff]
  %v2154 = vld [vmem:[%s4 + $0xe0] sm:$0xff]
  %v2155 = vld [vmem:[%s4 + $0xe8] sm:$0xff]
  %v2156 = vld [vmem:[%s4 + $0xf0] sm:$0xff]
  %v2157 = vld [vmem:[%s4 + $0xf8] sm:$0xff]
  %v2158 = vld [vmem:[%s4 + $0x100] sm:$0xff]
  %v2159 = vld [vmem:[%s4 + $0x108] sm:$0xff]
  %v2160 = vld [vmem:[%s4 + $0x110] sm:$0xff]
  %v2161 = vld [vmem:[%s4 + $0x118] sm:$0xff]
  %v2162 = vld [vmem:[%s4 + $0x120] sm:$0xff]
  %v2163 = vld [vmem:[%s4 + $0x128] sm:$0xff]
  %v2164 = vld [vmem:[%s4 + $0x130] sm:$0xff]
  %v2165 = vld [vmem:[%s4 + $0x138] sm:$0xff]
  %v2166 = vld [vmem:[%s4 + $0x140] sm:$0xff]
  %v2167 = vld [vmem:[%s4 + $0x148] sm:$0xff]
  %v2168 = vld [vmem:[%s4 + $0x150] sm:$0xff]
  %v2169 = vld [vmem:[%s4 + $0x158] sm:$0xff]
  %v2170 = vld [vmem:[%s4 + $0x160] sm:$0xff]
  %v2171 = vld [vmem:[%s4 + $0x168] sm:$0xff]
  %v2172 = vld [vmem:[%s4 + $0x170] sm:$0xff]
  %v2173 = vld [vmem:[%s4 + $0x178] sm:$0xff]
  %v2174 = vld [vmem:[%s4 + $0x180] sm:$0xff]
  %v2175 = vld [vmem:[%s4 + $0x188] sm:$0xff]
  %v2176 = vld [vmem:[%s4 + $0x190] sm:$0xff]
  %v2177 = vld [vmem:[%s4 + $0x198] sm:$0xff]
  %v2178 = vld [vmem:[%s4 + $0x1a0] sm:$0xff]
  %v2179 = vld [vmem:[%s4 + $0x1a8] sm:$0xff]
  %v2180 = vld [vmem:[%s4 + $0x1b0] sm:$0xff]
  %v2181 = vld [vmem:[%s4 + $0x1b8] sm:$0xff]
  %v2182 = vld [vmem:[%s4 + $0x1c0] sm:$0xff]
  %v2183 = vld [vmem:[%s4 + $0x1c8] sm:$0xff]
  %v2184 = vld [vmem:[%s4 + $0x1d0] sm:$0xff]
  %v2185 = vld [vmem:[%s4 + $0x1d8] sm:$0xff]
  %v2186 = vld [vmem:[%s4 + $0x1e0] sm:$0xff]
  %v2187 = vld [vmem:[%s4 + $0x1e8] sm:$0xff]
  %v2188 = vld [vmem:[%s4 + $0x1f0] sm:$0xff]
  %v2189 = vld [vmem:[%s4 + $0x1f8] sm:$0xff]
  %v2190 = vld [vmem:[%s4 + $0x200] sm:$0xff]
  %v2191 = vld [vmem:[%s4 + $0x208] sm:$0xff]
  %v2192 = vld [vmem:[%s4 + $0x210] sm:$0xff]
  %v2193 = vld [vmem:[%s4 + $0x218] sm:$0xff]
  %v2194 = vld [vmem:[%s4 + $0x220] sm:$0xff]
  %v2195 = vld [vmem:[%s4 + $0x228] sm:$0xff]
  %v2196 = vld [vmem:[%s4 + $0x230] sm:$0xff]
  %v2197 = vld [vmem:[%s4 + $0x238] sm:$0xff]
  %v2198 = vld [vmem:[%s4 + $0x240] sm:$0xff]
  %v2199 = vld [vmem:[%s4 + $0x248] sm:$0xff]
  %v2200 = vld [vmem:[%s4 + $0x250] sm:$0xff]
  %v2201 = vld [vmem:[%s4 + $0x258] sm:$0xff]
  %v2202 = vld [vmem:[%s4 + $0x260] sm:$0xff]
  %v2203 = vld [vmem:[%s4 + $0x268] sm:$0xff]
  %v2204 = vld [vmem:[%s4 + $0x270] sm:$0xff]
  %v2205 = vld [vmem:[%s4 + $0x278] sm:$0xff]
  %v2206 = vld [vmem:[%s4 + $0x280] sm:$0xff]
  %v2207 = vld [vmem:[%s4 + $0x288] sm:$0xff]
  %v2208 = vld [vmem:[%s4 + $0x290] sm:$0xff]
  %v2209 = vld [vmem:[%s4 + $0x298] sm:$0xff]
  %v2210 = vld [vmem:[%s4 + $0x2a0] sm:$0xff]
  %v2211 = vld [vmem:[%s4 + $0x2a8] sm:$0xff]
  %v2212 = vld [vmem:[%s4 + $0x2b0] sm:$0xff]
  %v2213 = vld [vmem:[%s4 + $0x2b8] sm:$0xff]
  %v2214 = vld [vmem:[%s4 + $0x2c0] sm:$0xff]
  %v2215 = vld [vmem:[%s4 + $0x2c8] sm:$0xff]
  %v2216 = vld [vmem:[%s4 + $0x2d0] sm:$0xff]
  %v2217 = vld [vmem:[%s4 + $0x2d8] sm:$0xff]
  %v2218 = vld [vmem:[%s4 + $0x2e0] sm:$0xff]
  %v2219 = vld [vmem:[%s4 + $0x2e8] sm:$0xff]
  %v2220 = vld [vmem:[%s4 + $0x2f0] sm:$0xff]
  %v2221 = vld [vmem:[%s4 + $0x2f8] sm:$0xff]
  %v2222 = vld [vmem:[%s4 + $0x300] sm:$0xff]
  %v2223 = vld [vmem:[%s4 + $0x308] sm:$0xff]
  %v2224 = vld [vmem:[%s4 + $0x310] sm:$0xff]
  %v2225 = vld [vmem:[%s4 + $0x318] sm:$0xff]
  %v2226 = vld [vmem:[%s4 + $0x320] sm:$0xff]
  %v2227 = vld [vmem:[%s4 + $0x328] sm:$0xff]
  %v2228 = vld [vmem:[%s4 + $0x330] sm:$0xff]
  %v2229 = vld [vmem:[%s4 + $0x338] sm:$0xff]
  %v2230 = vld [vmem:[%s4 + $0x340] sm:$0xff]
  %v2231 = vld [vmem:[%s4 + $0x348] sm:$0xff]
  %v2232 = vld [vmem:[%s4 + $0x350] sm:$0xff]
  %v2233 = vld [vmem:[%s4 + $0x358] sm:$0xff]
  %v2234 = vld [vmem:[%s4 + $0x360] sm:$0xff]
  %v2235 = vld [vmem:[%s4 + $0x368] sm:$0xff]
  %v2236 = vld [vmem:[%s4 + $0x370] sm:$0xff]
  %v2237 = vld [vmem:[%s4 + $0x378] sm:$0xff]
  %v2238 = vld [vmem:[%s4 + $0x380] sm:$0xff]
  %v2239 = vld [vmem:[%s4 + $0x388] sm:$0xff]
  %v2240 = vld [vmem:[%s4 + $0x390] sm:$0xff]
  %v2241 = vld [vmem:[%s4 + $0x398] sm:$0xff]
  %v2242 = vld [vmem:[%s4 + $0x3a0] sm:$0xff]
  %v2243 = vld [vmem:[%s4 + $0x3a8] sm:$0xff]
  %v2244 = vld [vmem:[%s4 + $0x3b0] sm:$0xff]
  %v2245 = vld [vmem:[%s4 + $0x3b8] sm:$0xff]
  %v2246 = vld [vmem:[%s4 + $0x3c0] sm:$0xff]
  %v2247 = vld [vmem:[%s4 + $0x3c8] sm:$0xff]
  %v2248 = vld [vmem:[%s4 + $0x3d0] sm:$0xff]
  %v2249 = vld [vmem:[%s4 + $0x3d8] sm:$0xff]
  %v2250 = vld [vmem:[%s4 + $0x3e0] sm:$0xff]
  %v2251 = vld [vmem:[%s4 + $0x3e8] sm:$0xff]
  %v2252 = vld [vmem:[%s4 + $0x3f0] sm:$0xff]
  %v2253 = vld [vmem:[%s4 + $0x3f8] sm:$0xff]
  %v2254 = vld [vmem:[%s4 + $0x400] sm:$0xff]
  %v2255 = vld [vmem:[%s4 + $0x408] sm:$0xff]
  %v2256 = vld [vmem:[%s4 + $0x410] sm:$0xff]
  %v2257 = vld [vmem:[%s4 + $0x418] sm:$0xff]
  %v2258 = vld [vmem:[%s4 + $0x420] sm:$0xff]
  %v2259 = vld [vmem:[%s4 + $0x428] sm:$0xff]
  %v2260 = vld [vmem:[%s4 + $0x430] sm:$0xff]
  %v2261 = vld [vmem:[%s4 + $0x438] sm:$0xff]
  %v2262 = vld [vmem:[%s4 + $0x440] sm:$0xff]
  %v2263 = vld [vmem:[%s4 + $0x448] sm:$0xff]
  %v2264 = vld [vmem:[%s4 + $0x450] sm:$0xff]
  %v2265 = vld [vmem:[%s4 + $0x458] sm:$0xff]
  %v2266 = vld [vmem:[#allocation2] sm:$0xff]
  %v2267 = vld [vmem:[#allocation2 + $0x8] sm:$0xff]
  %v2268 = vld [vmem:[#allocation2 + $0x10] sm:$0xff]
  %v2269 = vld [vmem:[#allocation2 + $0x18] sm:$0xff]
  %v2270 = vld [vmem:[#allocation2 + $0x20] sm:$0xff]
  %v2271 = vld [vmem:[#allocation2 + $0x28] sm:$0xff]
  %v2272 = vld [vmem:[#allocation2 + $0x30] sm:$0xff]
  %v2273 = vld [vmem:[#allocation2 + $0x38] sm:$0xff]
  %v2274 = vld [vmem:[#allocation2 + $0x40] sm:$0xff]
  %v2275 = vld [vmem:[#allocation2 + $0x48] sm:$0xff]
  %v2276 = vld [vmem:[#allocation2 + $0x50] sm:$0xff]
  %v2277 = vld [vmem:[#allocation2 + $0x58] sm:$0xff]
  %v2278 = vld [vmem:[#allocation2 + $0x60] sm:$0xff]
  %v2279 = vld [vmem:[#allocation2 + $0x68] sm:$0xff]
  %v2280 = vld [vmem:[#allocation2 + $0x70] sm:$0xff]
  %v2281 = vld [vmem:[#allocation2 + $0x78] sm:$0xff]
  %v2282 = vld [vmem:[#allocation2 + $0x80] sm:$0xff]
  %v2283 = vld [vmem:[#allocation2 + $0x88] sm:$0xff]
  %v2284 = vld [vmem:[#allocation2 + $0x90] sm:$0xff]
  %v2285 = vld [vmem:[#allocation2 + $0x98] sm:$0xff]
  %v2426 = vunpack.c.l.b16 %v2126
  %v2427 = vunpack.c.h.b16 %v2126
  %v2428 = vunpack.c.l.b16 %v2127
  %v2429 = vunpack.c.h.b16 %v2127
  %v2430 = vunpack.c.l.b16 %v2128
  %v2431 = vunpack.c.h.b16 %v2128
  %v2432 = vunpack.c.l.b16 %v2129
  %v2433 = vunpack.c.h.b16 %v2129
  %v2434 = vunpack.c.l.b16 %v2130
  %v2435 = vunpack.c.h.b16 %v2130
  %v2436 = vunpack.c.l.b16 %v2131
  %v2437 = vunpack.c.h.b16 %v2131
  %v2438 = vunpack.c.l.b16 %v2132
  %v2439 = vunpack.c.h.b16 %v2132
  %v2440 = vunpack.c.l.b16 %v2133
  %v2441 = vunpack.c.h.b16 %v2133
  %v2442 = vunpack.c.l.b16 %v2134
  %v2443 = vunpack.c.h.b16 %v2134
  %v2444 = vunpack.c.l.b16 %v2135
  %v2445 = vunpack.c.h.b16 %v2135
  %v2446 = vunpack.c.l.b16 %v2136
  %v2447 = vunpack.c.h.b16 %v2136
  %v2448 = vunpack.c.l.b16 %v2137
  %v2449 = vunpack.c.h.b16 %v2137
  %v2450 = vunpack.c.l.b16 %v2138
  %v2451 = vunpack.c.h.b16 %v2138
  %v2452 = vunpack.c.l.b16 %v2139
  %v2453 = vunpack.c.h.b16 %v2139
  %v2454 = vunpack.c.l.b16 %v2140
  %v2455 = vunpack.c.h.b16 %v2140
  %v2456 = vunpack.c.l.b16 %v2141
  %v2457 = vunpack.c.h.b16 %v2141
  %v2458 = vunpack.c.l.b16 %v2142
  %v2459 = vunpack.c.h.b16 %v2142
  %v2460 = vunpack.c.l.b16 %v2143
  %v2461 = vunpack.c.h.b16 %v2143
  %v2462 = vunpack.c.l.b16 %v2144
  %v2463 = vunpack.c.h.b16 %v2144
  %v2464 = vunpack.c.l.b16 %v2145
  %v2465 = vunpack.c.h.b16 %v2145
  %v2466 = vunpack.c.l.b16 %v2146
  %v2467 = vunpack.c.h.b16 %v2146
  %v2468 = vunpack.c.l.b16 %v2147
  %v2469 = vunpack.c.h.b16 %v2147
  %v2470 = vunpack.c.l.b16 %v2148
  %v2471 = vunpack.c.h.b16 %v2148
  %v2472 = vunpack.c.l.b16 %v2149
  %v2473 = vunpack.c.h.b16 %v2149
  %v2474 = vunpack.c.l.b16 %v2150
  %v2475 = vunpack.c.h.b16 %v2150
  %v2476 = vunpack.c.l.b16 %v2151
  %v2477 = vunpack.c.h.b16 %v2151
  %v2478 = vunpack.c.l.b16 %v2152
  %v2479 = vunpack.c.h.b16 %v2152
  %v2480 = vunpack.c.l.b16 %v2153
  %v2481 = vunpack.c.h.b16 %v2153
  %v2482 = vunpack.c.l.b16 %v2154
  %v2483 = vunpack.c.h.b16 %v2154
  %v2484 = vunpack.c.l.b16 %v2155
  %v2485 = vunpack.c.h.b16 %v2155
  %v2486 = vunpack.c.l.b16 %v2156
  %v2487 = vunpack.c.h.b16 %v2156
  %v2488 = vunpack.c.l.b16 %v2157
  %v2489 = vunpack.c.h.b16 %v2157
  %v2490 = vunpack.c.l.b16 %v2158
  %v2491 = vunpack.c.h.b16 %v2158
  %v2492 = vunpack.c.l.b16 %v2159
  %v2493 = vunpack.c.h.b16 %v2159
  %v2494 = vunpack.c.l.b16 %v2160
  %v2495 = vunpack.c.h.b16 %v2160
  %v2496 = vunpack.c.l.b16 %v2161
  %v2497 = vunpack.c.h.b16 %v2161
  %v2498 = vunpack.c.l.b16 %v2162
  %v2499 = vunpack.c.h.b16 %v2162
  %v2500 = vunpack.c.l.b16 %v2163
  %v2501 = vunpack.c.h.b16 %v2163
  %v2502 = vunpack.c.l.b16 %v2164
  %v2503 = vunpack.c.h.b16 %v2164
  %v2504 = vunpack.c.l.b16 %v2165
  %v2505 = vunpack.c.h.b16 %v2165
  %v2506 = vunpack.c.l.b16 %v2166
  %v2507 = vunpack.c.h.b16 %v2166
  %v2508 = vunpack.c.l.b16 %v2167
  %v2509 = vunpack.c.h.b16 %v2167
  %v2510 = vunpack.c.l.b16 %v2168
  %v2511 = vunpack.c.h.b16 %v2168
  %v2512 = vunpack.c.l.b16 %v2169
  %v2513 = vunpack.c.h.b16 %v2169
  %v2514 = vunpack.c.l.b16 %v2170
  %v2515 = vunpack.c.h.b16 %v2170
  %v2516 = vunpack.c.l.b16 %v2171
  %v2517 = vunpack.c.h.b16 %v2171
  %v2518 = vunpack.c.l.b16 %v2172
  %v2519 = vunpack.c.h.b16 %v2172
  %v2520 = vunpack.c.l.b16 %v2173
  %v2521 = vunpack.c.h.b16 %v2173
  %v2522 = vunpack.c.l.b16 %v2174
  %v2523 = vunpack.c.h.b16 %v2174
  %v2524 = vunpack.c.l.b16 %v2175
  %v2525 = vunpack.c.h.b16 %v2175
  %v2526 = vunpack.c.l.b16 %v2176
  %v2527 = vunpack.c.h.b16 %v2176
  %v2528 = vunpack.c.l.b16 %v2177
  %v2529 = vunpack.c.h.b16 %v2177
  %v2530 = vunpack.c.l.b16 %v2178
  %v2531 = vunpack.c.h.b16 %v2178
  %v2532 = vunpack.c.l.b16 %v2179
  %v2533 = vunpack.c.h.b16 %v2179
  %v2534 = vunpack.c.l.b16 %v2180
  %v2535 = vunpack.c.h.b16 %v2180
  %v2536 = vunpack.c.l.b16 %v2181
  %v2537 = vunpack.c.h.b16 %v2181
  %v2538 = vunpack.c.l.b16 %v2182
  %v2539 = vunpack.c.h.b16 %v2182
  %v2540 = vunpack.c.l.b16 %v2183
  %v2541 = vunpack.c.h.b16 %v2183
  %v2542 = vunpack.c.l.b16 %v2184
  %v2543 = vunpack.c.h.b16 %v2184
  %v2544 = vunpack.c.l.b16 %v2185
  %v2545 = vunpack.c.h.b16 %v2185
  %v2546 = vunpack.c.l.b16 %v2186
  %v2547 = vunpack.c.h.b16 %v2186
  %v2548 = vunpack.c.l.b16 %v2187
  %v2549 = vunpack.c.h.b16 %v2187
  %v2550 = vunpack.c.l.b16 %v2188
  %v2551 = vunpack.c.h.b16 %v2188
  %v2552 = vunpack.c.l.b16 %v2189
  %v2553 = vunpack.c.h.b16 %v2189
  %v2554 = vunpack.c.l.b16 %v2190
  %v2555 = vunpack.c.h.b16 %v2190
  %v2556 = vunpack.c.l.b16 %v2191
  %v2557 = vunpack.c.h.b16 %v2191
  %v2558 = vunpack.c.l.b16 %v2192
  %v2559 = vunpack.c.h.b16 %v2192
  %v2560 = vunpack.c.l.b16 %v2193
  %v2561 = vunpack.c.h.b16 %v2193
  %v2562 = vunpack.c.l.b16 %v2194
  %v2563 = vunpack.c.h.b16 %v2194
  %v2564 = vunpack.c.l.b16 %v2195
  %v2565 = vunpack.c.h.b16 %v2195
  %v2566 = vunpack.c.l.b16 %v2196
  %v2567 = vunpack.c.h.b16 %v2196
  %v2568 = vunpack.c.l.b16 %v2197
  %v2569 = vunpack.c.h.b16 %v2197
  %v2570 = vunpack.c.l.b16 %v2198
  %v2571 = vunpack.c.h.b16 %v2198
  %v2572 = vunpack.c.l.b16 %v2199
  %v2573 = vunpack.c.h.b16 %v2199
  %v2574 = vunpack.c.l.b16 %v2200
  %v2575 = vunpack.c.h.b16 %v2200
  %v2576 = vunpack.c.l.b16 %v2201
  %v2577 = vunpack.c.h.b16 %v2201
  %v2578 = vunpack.c.l.b16 %v2202
  %v2579 = vunpack.c.h.b16 %v2202
  %v2580 = vunpack.c.l.b16 %v2203
  %v2581 = vunpack.c.h.b16 %v2203
  %v2582 = vunpack.c.l.b16 %v2204
  %v2583 = vunpack.c.h.b16 %v2204
  %v2584 = vunpack.c.l.b16 %v2205
  %v2585 = vunpack.c.h.b16 %v2205
  %v2586 = vunpack.c.l.b16 %v2206
  %v2587 = vunpack.c.h.b16 %v2206
  %v2588 = vunpack.c.l.b16 %v2207
  %v2589 = vunpack.c.h.b16 %v2207
  %v2590 = vunpack.c.l.b16 %v2208
  %v2591 = vunpack.c.h.b16 %v2208
  %v2592 = vunpack.c.l.b16 %v2209
  %v2593 = vunpack.c.h.b16 %v2209
  %v2594 = vunpack.c.l.b16 %v2210
  %v2595 = vunpack.c.h.b16 %v2210
  %v2596 = vunpack.c.l.b16 %v2211
  %v2597 = vunpack.c.h.b16 %v2211
  %v2598 = vunpack.c.l.b16 %v2212
  %v2599 = vunpack.c.h.b16 %v2212
  %v2600 = vunpack.c.l.b16 %v2213
  %v2601 = vunpack.c.h.b16 %v2213
  %v2602 = vunpack.c.l.b16 %v2214
  %v2603 = vunpack.c.h.b16 %v2214
  %v2604 = vunpack.c.l.b16 %v2215
  %v2605 = vunpack.c.h.b16 %v2215
  %v2606 = vunpack.c.l.b16 %v2216
  %v2607 = vunpack.c.h.b16 %v2216
  %v2608 = vunpack.c.l.b16 %v2217
  %v2609 = vunpack.c.h.b16 %v2217
  %v2610 = vunpack.c.l.b16 %v2218
  %v2611 = vunpack.c.h.b16 %v2218
  %v2612 = vunpack.c.l.b16 %v2219
  %v2613 = vunpack.c.h.b16 %v2219
  %v2614 = vunpack.c.l.b16 %v2220
  %v2615 = vunpack.c.h.b16 %v2220
  %v2616 = vunpack.c.l.b16 %v2221
  %v2617 = vunpack.c.h.b16 %v2221
  %v2618 = vunpack.c.l.b16 %v2222
  %v2619 = vunpack.c.h.b16 %v2222
  %v2620 = vunpack.c.l.b16 %v2223
  %v2621 = vunpack.c.h.b16 %v2223
  %v2622 = vunpack.c.l.b16 %v2224
  %v2623 = vunpack.c.h.b16 %v2224
  %v2624 = vunpack.c.l.b16 %v2225
  %v2625 = vunpack.c.h.b16 %v2225
  %v2626 = vunpack.c.l.b16 %v2226
  %v2627 = vunpack.c.h.b16 %v2226
  %v2628 = vunpack.c.l.b16 %v2227
  %v2629 = vunpack.c.h.b16 %v2227
  %v2630 = vunpack.c.l.b16 %v2228
  %v2631 = vunpack.c.h.b16 %v2228
  %v2632 = vunpack.c.l.b16 %v2229
  %v2633 = vunpack.c.h.b16 %v2229
  %v2634 = vunpack.c.l.b16 %v2230
  %v2635 = vunpack.c.h.b16 %v2230
  %v2636 = vunpack.c.l.b16 %v2231
  %v2637 = vunpack.c.h.b16 %v2231
  %v2638 = vunpack.c.l.b16 %v2232
  %v2639 = vunpack.c.h.b16 %v2232
  %v2640 = vunpack.c.l.b16 %v2233
  %v2641 = vunpack.c.h.b16 %v2233
  %v2642 = vunpack.c.l.b16 %v2234
  %v2643 = vunpack.c.h.b16 %v2234
  %v2644 = vunpack.c.l.b16 %v2235
  %v2645 = vunpack.c.h.b16 %v2235
  %v2646 = vunpack.c.l.b16 %v2236
  %v2647 = vunpack.c.h.b16 %v2236
  %v2648 = vunpack.c.l.b16 %v2237
  %v2649 = vunpack.c.h.b16 %v2237
  %v2650 = vunpack.c.l.b16 %v2238
  %v2651 = vunpack.c.h.b16 %v2238
  %v2652 = vunpack.c.l.b16 %v2239
  %v2653 = vunpack.c.h.b16 %v2239
  %v2654 = vunpack.c.l.b16 %v2240
  %v2655 = vunpack.c.h.b16 %v2240
  %v2656 = vunpack.c.l.b16 %v2241
  %v2657 = vunpack.c.h.b16 %v2241
  %v2658 = vunpack.c.l.b16 %v2242
  %v2659 = vunpack.c.h.b16 %v2242
  %v2660 = vunpack.c.l.b16 %v2243
  %v2661 = vunpack.c.h.b16 %v2243
  %v2662 = vunpack.c.l.b16 %v2244
  %v2663 = vunpack.c.h.b16 %v2244
  %v2664 = vunpack.c.l.b16 %v2245
  %v2665 = vunpack.c.h.b16 %v2245
  %v2666 = vunpack.c.l.b16 %v2246
  %v2667 = vunpack.c.h.b16 %v2246
  %v2668 = vunpack.c.l.b16 %v2247
  %v2669 = vunpack.c.h.b16 %v2247
  %v2670 = vunpack.c.l.b16 %v2248
  %v2671 = vunpack.c.h.b16 %v2248
  %v2672 = vunpack.c.l.b16 %v2249
  %v2673 = vunpack.c.h.b16 %v2249
  %v2674 = vunpack.c.l.b16 %v2250
  %v2675 = vunpack.c.h.b16 %v2250
  %v2676 = vunpack.c.l.b16 %v2251
  %v2677 = vunpack.c.h.b16 %v2251
  %v2678 = vunpack.c.l.b16 %v2252
  %v2679 = vunpack.c.h.b16 %v2252
  %v2680 = vunpack.c.l.b16 %v2253
  %v2681 = vunpack.c.h.b16 %v2253
  %v2682 = vunpack.c.l.b16 %v2254
  %v2683 = vunpack.c.h.b16 %v2254
  %v2684 = vunpack.c.l.b16 %v2255
  %v2685 = vunpack.c.h.b16 %v2255
  %v2686 = vunpack.c.l.b16 %v2256
  %v2687 = vunpack.c.h.b16 %v2256
  %v2688 = vunpack.c.l.b16 %v2257
  %v2689 = vunpack.c.h.b16 %v2257
  %v2690 = vunpack.c.l.b16 %v2258
  %v2691 = vunpack.c.h.b16 %v2258
  %v2692 = vunpack.c.l.b16 %v2259
  %v2693 = vunpack.c.h.b16 %v2259
  %v2694 = vunpack.c.l.b16 %v2260
  %v2695 = vunpack.c.h.b16 %v2260
  %v2696 = vunpack.c.l.b16 %v2261
  %v2697 = vunpack.c.h.b16 %v2261
  %v2698 = vunpack.c.l.b16 %v2262
  %v2699 = vunpack.c.h.b16 %v2262
  %v2700 = vunpack.c.l.b16 %v2263
  %v2701 = vunpack.c.h.b16 %v2263
  %v2702 = vunpack.c.l.b16 %v2264
  %v2703 = vunpack.c.h.b16 %v2264
  %v2704 = vunpack.c.l.b16 %v2265
  %v2705 = vunpack.c.h.b16 %v2265
  %v2706 = vpack.c.b16 %v2428, %v2426
  %v2707 = vpack.c.b16 %v2429, %v2427
  %v2708 = vpack.c.b16 %v2432, %v2430
  %v2709 = vpack.c.b16 %v2433, %v2431
  %v2710 = vpack.c.b16 %v2436, %v2434
  %v2711 = vpack.c.b16 %v2437, %v2435
  %v2712 = vpack.c.b16 %v2440, %v2438
  %v2713 = vpack.c.b16 %v2441, %v2439
  %v2714 = vpack.c.b16 %v2444, %v2442
  %v2715 = vpack.c.b16 %v2445, %v2443
  %v2716 = vpack.c.b16 %v2448, %v2446
  %v2717 = vpack.c.b16 %v2449, %v2447
  %v2718 = vpack.c.b16 %v2452, %v2450
  %v2719 = vpack.c.b16 %v2453, %v2451
  %v2720 = vpack.c.b16 %v2456, %v2454
  %v2721 = vpack.c.b16 %v2457, %v2455
  %v2722 = vpack.c.b16 %v2460, %v2458
  %v2723 = vpack.c.b16 %v2461, %v2459
  %v2724 = vpack.c.b16 %v2464, %v2462
  %v2725 = vpack.c.b16 %v2465, %v2463
  %v2726 = vpack.c.b16 %v2468, %v2466
  %v2727 = vpack.c.b16 %v2469, %v2467
  %v2728 = vpack.c.b16 %v2472, %v2470
  %v2729 = vpack.c.b16 %v2473, %v2471
  %v2730 = vpack.c.b16 %v2476, %v2474
  %v2731 = vpack.c.b16 %v2477, %v2475
  %v2732 = vpack.c.b16 %v2480, %v2478
  %v2733 = vpack.c.b16 %v2481, %v2479
  %v2734 = vpack.c.b16 %v2484, %v2482
  %v2735 = vpack.c.b16 %v2485, %v2483
  %v2736 = vpack.c.b16 %v2488, %v2486
  %v2737 = vpack.c.b16 %v2489, %v2487
  %v2738 = vpack.c.b16 %v2492, %v2490
  %v2739 = vpack.c.b16 %v2493, %v2491
  %v2740 = vpack.c.b16 %v2496, %v2494
  %v2741 = vpack.c.b16 %v2497, %v2495
  %v2742 = vpack.c.b16 %v2500, %v2498
  %v2743 = vpack.c.b16 %v2501, %v2499
  %v2744 = vpack.c.b16 %v2504, %v2502
  %v2745 = vpack.c.b16 %v2505, %v2503
  %v2746 = vpack.c.b16 %v2508, %v2506
  %v2747 = vpack.c.b16 %v2509, %v2507
  %v2748 = vpack.c.b16 %v2512, %v2510
  %v2749 = vpack.c.b16 %v2513, %v2511
  %v2750 = vpack.c.b16 %v2516, %v2514
  %v2751 = vpack.c.b16 %v2517, %v2515
  %v2752 = vpack.c.b16 %v2520, %v2518
  %v2753 = vpack.c.b16 %v2521, %v2519
  %v2754 = vpack.c.b16 %v2524, %v2522
  %v2755 = vpack.c.b16 %v2525, %v2523
  %v2756 = vpack.c.b16 %v2528, %v2526
  %v2757 = vpack.c.b16 %v2529, %v2527
  %v2758 = vpack.c.b16 %v2532, %v2530
  %v2759 = vpack.c.b16 %v2533, %v2531
  %v2760 = vpack.c.b16 %v2536, %v2534
  %v2761 = vpack.c.b16 %v2537, %v2535
  %v2762 = vpack.c.b16 %v2540, %v2538
  %v2763 = vpack.c.b16 %v2541, %v2539
  %v2764 = vpack.c.b16 %v2544, %v2542
  %v2765 = vpack.c.b16 %v2545, %v2543
  %v2766 = vpack.c.b16 %v2548, %v2546
  %v2767 = vpack.c.b16 %v2549, %v2547
  %v2768 = vpack.c.b16 %v2552, %v2550
  %v2769 = vpack.c.b16 %v2553, %v2551
  %v2770 = vpack.c.b16 %v2556, %v2554
  %v2771 = vpack.c.b16 %v2557, %v2555
  %v2772 = vpack.c.b16 %v2560, %v2558
  %v2773 = vpack.c.b16 %v2561, %v2559
  %v2774 = vpack.c.b16 %v2564, %v2562
  %v2775 = vpack.c.b16 %v2565, %v2563
  %v2776 = vpack.c.b16 %v2568, %v2566
  %v2777 = vpack.c.b16 %v2569, %v2567
  %v2778 = vpack.c.b16 %v2572, %v2570
  %v2779 = vpack.c.b16 %v2573, %v2571
  %v2780 = vpack.c.b16 %v2576, %v2574
  %v2781 = vpack.c.b16 %v2577, %v2575
  %v2782 = vpack.c.b16 %v2580, %v2578
  %v2783 = vpack.c.b16 %v2581, %v2579
  %v2784 = vpack.c.b16 %v2584, %v2582
  %v2785 = vpack.c.b16 %v2585, %v2583
  %v2786 = vpack.c.b16 %v2588, %v2586
  %v2787 = vpack.c.b16 %v2589, %v2587
  %v2788 = vpack.c.b16 %v2592, %v2590
  %v2789 = vpack.c.b16 %v2593, %v2591
  %v2790 = vpack.c.b16 %v2596, %v2594
  %v2791 = vpack.c.b16 %v2597, %v2595
  %v2792 = vpack.c.b16 %v2600, %v2598
  %v2793 = vpack.c.b16 %v2601, %v2599
  %v2794 = vpack.c.b16 %v2604, %v2602
  %v2795 = vpack.c.b16 %v2605, %v2603
  %v2796 = vpack.c.b16 %v2608, %v2606
  %v2797 = vpack.c.b16 %v2609, %v2607
  %v2798 = vpack.c.b16 %v2612, %v2610
  %v2799 = vpack.c.b16 %v2613, %v2611
  %v2800 = vpack.c.b16 %v2616, %v2614
  %v2801 = vpack.c.b16 %v2617, %v2615
  %v2802 = vpack.c.b16 %v2620, %v2618
  %v2803 = vpack.c.b16 %v2621, %v2619
  %v2804 = vpack.c.b16 %v2624, %v2622
  %v2805 = vpack.c.b16 %v2625, %v2623
  %v2806 = vpack.c.b16 %v2628, %v2626
  %v2807 = vpack.c.b16 %v2629, %v2627
  %v2808 = vpack.c.b16 %v2632, %v2630
  %v2809 = vpack.c.b16 %v2633, %v2631
  %v2810 = vpack.c.b16 %v2636, %v2634
  %v2811 = vpack.c.b16 %v2637, %v2635
  %v2812 = vpack.c.b16 %v2640, %v2638
  %v2813 = vpack.c.b16 %v2641, %v2639
  %v2814 = vpack.c.b16 %v2644, %v2642
  %v2815 = vpack.c.b16 %v2645, %v2643
  %v2816 = vpack.c.b16 %v2648, %v2646
  %v2817 = vpack.c.b16 %v2649, %v2647
  %v2818 = vpack.c.b16 %v2652, %v2650
  %v2819 = vpack.c.b16 %v2653, %v2651
  %v2820 = vpack.c.b16 %v2656, %v2654
  %v2821 = vpack.c.b16 %v2657, %v2655
  %v2822 = vpack.c.b16 %v2660, %v2658
  %v2823 = vpack.c.b16 %v2661, %v2659
  %v2824 = vpack.c.b16 %v2664, %v2662
  %v2825 = vpack.c.b16 %v2665, %v2663
  %v2826 = vpack.c.b16 %v2668, %v2666
  %v2827 = vpack.c.b16 %v2669, %v2667
  %v2828 = vpack.c.b16 %v2672, %v2670
  %v2829 = vpack.c.b16 %v2673, %v2671
  %v2830 = vpack.c.b16 %v2676, %v2674
  %v2831 = vpack.c.b16 %v2677, %v2675
  %v2832 = vpack.c.b16 %v2680, %v2678
  %v2833 = vpack.c.b16 %v2681, %v2679
  %v2834 = vpack.c.b16 %v2684, %v2682
  %v2835 = vpack.c.b16 %v2685, %v2683
  %v2836 = vpack.c.b16 %v2688, %v2686
  %v2837 = vpack.c.b16 %v2689, %v2687
  %v2838 = vpack.c.b16 %v2692, %v2690
  %v2839 = vpack.c.b16 %v2693, %v2691
  %v2840 = vpack.c.b16 %v2696, %v2694
  %v2841 = vpack.c.b16 %v2697, %v2695
  %v2842 = vpack.c.b16 %v2700, %v2698
  %v2843 = vpack.c.b16 %v2701, %v2699
  %v2844 = vpack.c.b16 %v2704, %v2702
  %v2845 = vpack.c.b16 %v2705, %v2703
  %vm2916 = vcmask 261120
  %v2918 = vsel %vm2916, %v2707, 0
  %v2921 = vsel %vm2916, %v2709, 0
  %v2924 = vsel %vm2916, %v2711, 0
  %v2927 = vsel %vm2916, %v2713, 0
  %v2930 = vsel %vm2916, %v2715, 0
  %v2933 = vsel %vm2916, %v2717, 0
  %v2936 = vsel %vm2916, %v2719, 0
  %v2939 = vsel %vm2916, %v2721, 0
  %v2942 = vsel %vm2916, %v2723, 0
  %v2945 = vsel %vm2916, %v2725, 0
  %v2948 = vsel %vm2916, %v2727, 0
  %v2951 = vsel %vm2916, %v2729, 0
  %v2954 = vsel %vm2916, %v2731, 0
  %v2957 = vsel %vm2916, %v2733, 0
  %v2960 = vsel %vm2916, %v2735, 0
  %v2963 = vsel %vm2916, %v2737, 0
  %v2966 = vsel %vm2916, %v2739, 0
  %v2969 = vsel %vm2916, %v2741, 0
  %v2972 = vsel %vm2916, %v2743, 0
  %v2975 = vsel %vm2916, %v2745, 0
  %v2978 = vsel %vm2916, %v2747, 0
  %v2981 = vsel %vm2916, %v2749, 0
  %v2984 = vsel %vm2916, %v2751, 0
  %v2987 = vsel %vm2916, %v2753, 0
  %v2990 = vsel %vm2916, %v2755, 0
  %v2993 = vsel %vm2916, %v2757, 0
  %v2996 = vsel %vm2916, %v2759, 0
  %v2999 = vsel %vm2916, %v2761, 0
  %v3002 = vsel %vm2916, %v2763, 0
  %v3005 = vsel %vm2916, %v2765, 0
  %v3008 = vsel %vm2916, %v2767, 0
  %v3011 = vsel %vm2916, %v2769, 0
  %v3014 = vsel %vm2916, %v2771, 0
  %v3017 = vsel %vm2916, %v2773, 0
  %v3020 = vsel %vm2916, %v2775, 0
  %v3023 = vsel %vm2916, %v2777, 0
  %v3026 = vsel %vm2916, %v2779, 0
  %v3029 = vsel %vm2916, %v2781, 0
  %v3032 = vsel %vm2916, %v2783, 0
  %v3035 = vsel %vm2916, %v2785, 0
  %v3038 = vsel %vm2916, %v2787, 0
  %v3041 = vsel %vm2916, %v2789, 0
  %v3044 = vsel %vm2916, %v2791, 0
  %v3047 = vsel %vm2916, %v2793, 0
  %v3050 = vsel %vm2916, %v2795, 0
  %v3053 = vsel %vm2916, %v2797, 0
  %v3056 = vsel %vm2916, %v2799, 0
  %v3059 = vsel %vm2916, %v2801, 0
  %v3062 = vsel %vm2916, %v2803, 0
  %v3065 = vsel %vm2916, %v2805, 0
  %v3068 = vsel %vm2916, %v2807, 0
  %v3071 = vsel %vm2916, %v2809, 0
  %v3074 = vsel %vm2916, %v2811, 0
  %v3077 = vsel %vm2916, %v2813, 0
  %v3080 = vsel %vm2916, %v2815, 0
  %v3083 = vsel %vm2916, %v2817, 0
  %v3086 = vsel %vm2916, %v2819, 0
  %v3089 = vsel %vm2916, %v2821, 0
  %v3092 = vsel %vm2916, %v2823, 0
  %v3095 = vsel %vm2916, %v2825, 0
  %v3098 = vsel %vm2916, %v2827, 0
  %v3101 = vsel %vm2916, %v2829, 0
  %v3104 = vsel %vm2916, %v2831, 0
  %v3107 = vsel %vm2916, %v2833, 0
  %v3110 = vsel %vm2916, %v2835, 0
  %v3113 = vsel %vm2916, %v2837, 0
  %v3116 = vsel %vm2916, %v2839, 0
  %v3119 = vsel %vm2916, %v2841, 0
  %v3122 = vsel %vm2916, %v2843, 0
  %v3125 = vsel %vm2916, %v2845, 0
  %3127 = vmatprep.subr.bf16.mxu0 %v2267
  %3128 = vmatpush1.bf16.msra.mxu0 %v2266
  %3129 = vmatprep.subr.bf16.mxu0 %v2269
  %3130 = vmatpush1.bf16.msra.mxu0 %v2268
  %3131 = vmatprep.subr.bf16.mxu0 %v2271
  %3132 = vmatpush1.bf16.msra.mxu0 %v2270
  %3133 = vmatprep.subr.bf16.mxu0 %v2273
  %3134 = vmatpush1.bf16.msra.mxu0 %v2272
  %3135 = vmatprep.subr.bf16.mxu0 %v2275
  %3136 = vmatpush1.bf16.msra.mxu0 %v2274
  %3137 = vmatprep.subr.bf16.mxu0 %v2277
  %3138 = vmatpush1.bf16.msra.mxu0 %v2276
  %3139 = vmatprep.subr.bf16.mxu0 %v2279
  %3140 = vmatpush1.bf16.msra.mxu0 %v2278
  %3141 = vmatprep.subr.bf16.mxu0 %v2281
  %3142 = vmatpush1.bf16.msra.mxu0 %v2280
  %3143 = vmatprep.subr.bf16.mxu0 %v2283
  %3144 = vmatpush1.bf16.msra.mxu0 %v2282
  %3145 = vmatprep.subr.bf16.mxu0 %v2285
  %3146 = vmatpush1.bf16.msra.mxu0 %v2284
  %3147 = vmatprep.subr.bf16.mxu0 0
  %3148 = vmatpush1.bf16.msra.mxu0 0
  %3149 = vmatprep.subr.bf16.mxu0 0
  %3150 = vmatpush1.bf16.msra.mxu0 0
  %3151 = vmatprep.subr.bf16.mxu0 0
  %3152 = vmatpush1.bf16.msra.mxu0 0
  %3153 = vmatprep.subr.bf16.mxu0 0
  %3154 = vmatpush1.bf16.msra.mxu0 0
  %3155 = vmatprep.subr.bf16.mxu0 0
  %3156 = vmatpush1.bf16.msra.mxu0 0
  %3157 = vmatprep.subr.bf16.mxu0 0
  %3158 = vmatpush1.bf16.msra.mxu0 0
  %3159 = vmatprep.mubr.bf16.mxu0 %v2918
  %3160 = vmatmul.mubr.bf16.gmra.mrb[0].mxu0 %v2706
  %v3161 = vpop.f32.mrb[0].mxu0
  %v3162 = vadd.f32 0.0, %v3161
  %v3163 = vpop.f32.mrb[0].mxu0
  %v3164 = vadd.f32 0.0, %v3163
  %v3165 = vpop.f32.mrb[0].mxu0
  %v3166 = vadd.f32 0.0, %v3165
  %v3167 = vpop.f32.mrb[0].mxu0
  %v3168 = vadd.f32 0.0, %v3167
  %3169 = vmatprep.mubr.bf16.mxu0 %v2921
  %3170 = vmatmul.mubr.bf16.gmra.mrb[0].mxu0 %v2708
  %v3171 = vpop.f32.mrb[0].mxu0
  %v3172 = vadd.f32 0.0, %v3171
  %v3173 = vpop.f32.mrb[0].mxu0
  %v3174 = vadd.f32 0.0, %v3173
  %v3175 = vpop.f32.mrb[0].mxu0
  %v3176 = vadd.f32 0.0, %v3175
  %v3177 = vpop.f32.mrb[0].mxu0
  %v3178 = vadd.f32 0.0, %v3177
  %3179 = vmatprep.mubr.bf16.mxu0 %v2924
  %3180 = vmatmul.mubr.bf16.gmra.mrb[0].mxu0 %v2710
  %v3181 = vpop.f32.mrb[0].mxu0
  %v3182 = vadd.f32 0.0, %v3181
  %v3183 = vpop.f32.mrb[0].mxu0
  %v3184 = vadd.f32 0.0, %v3183
  %v3185 = vpop.f32.mrb[0].mxu0
  %v3186 = vadd.f32 0.0, %v3185
  %v3187 = vpop.f32.mrb[0].mxu0
  %v3188 = vadd.f32 0.0, %v3187
  %3189 = vmatprep.mubr.bf16.mxu0 %v2927
  %3190 = vmatmul.mubr.bf16.gmra.mrb[0].mxu0 %v2712
  %v3191 = vpop.f32.mrb[0].mxu0
  %v3192 = vadd.f32 0.0, %v3191
  %v3193 = vpop.f32.mrb[0].mxu0
  %v3194 = vadd.f32 0.0, %v3193
  %v3195 = vpop.f32.mrb[0].mxu0
  %v3196 = vadd.f32 0.0, %v3195
  %v3197 = vpop.f32.mrb[0].mxu0
  %v3198 = vadd.f32 0.0, %v3197
  %3199 = vmatprep.mubr.bf16.mxu0 %v2930
  %3200 = vmatmul.mubr.bf16.gmra.mrb[0].mxu0 %v2714
  %v3201 = vpop.f32.mrb[0].mxu0
  %v3202 = vadd.f32 0.0, %v3201
  %v3203 = vpop.f32.mrb[0].mxu0
  %v3204 = vadd.f32 0.0, %v3203
  %v3205 = vpop.f32.mrb[0].mxu0
  %v3206 = vadd.f32 0.0, %v3205
  %v3207 = vpop.f32.mrb[0].mxu0
  %v3208 = vadd.f32 0.0, %v3207
  %3209 = vmatprep.mubr.bf16.mxu0 %v2933
  %3210 = vmatmul.mubr.bf16.gmra.mrb[0].mxu0 %v2716
  %v3211 = vpop.f32.mrb[0].mxu0
  %v3212 = vadd.f32 0.0, %v3211
  %v3213 = vpop.f32.mrb[0].mxu0
  %v3214 = vadd.f32 0.0, %v3213
  %v3215 = vpop.f32.mrb[0].mxu0
  %v3216 = vadd.f32 0.0, %v3215
  %v3217 = vpop.f32.mrb[0].mxu0
  %v3218 = vadd.f32 0.0, %v3217
  %3219 = vmatprep.mubr.bf16.mxu0 %v2936
  %3220 = vmatmul.mubr.bf16.gmra.mrb[0].mxu0 %v2718
  %v3221 = vpop.f32.mrb[0].mxu0
  %v3222 = vadd.f32 0.0, %v3221
  %v3223 = vpop.f32.mrb[0].mxu0
  %v3224 = vadd.f32 0.0, %v3223
  %v3225 = vpop.f32.mrb[0].mxu0
  %v3226 = vadd.f32 0.0, %v3225
  %v3227 = vpop.f32.mrb[0].mxu0
  %v3228 = vadd.f32 0.0, %v3227
  %3229 = vmatprep.mubr.bf16.mxu0 %v2939
  %3230 = vmatmul.mubr.bf16.gmra.mrb[0].mxu0 %v2720
  %v3231 = vpop.f32.mrb[0].mxu0
  %v3232 = vadd.f32 0.0, %v3231
  %v3233 = vpop.f32.mrb[0].mxu0
  %v3234 = vadd.f32 0.0, %v3233
  %v3235 = vpop.f32.mrb[0].mxu0
  %v3236 = vadd.f32 0.0, %v3235
  %v3237 = vpop.f32.mrb[0].mxu0
  %v3238 = vadd.f32 0.0, %v3237
  %3239 = vmatprep.mubr.bf16.mxu0 %v2942
  %3240 = vmatmul.mubr.bf16.gmra.mrb[0].mxu0 %v2722
  %v3241 = vpop.f32.mrb[0].mxu0
  %v3242 = vadd.f32 0.0, %v3241
  %v3243 = vpop.f32.mrb[0].mxu0
  %v3244 = vadd.f32 0.0, %v3243
  %v3245 = vpop.f32.mrb[0].mxu0
  %v3246 = vadd.f32 0.0, %v3245
  %v3247 = vpop.f32.mrb[0].mxu0
  %v3248 = vadd.f32 0.0, %v3247
  %3249 = vmatprep.mubr.bf16.mxu0 %v2945
  %3250 = vmatmul.mubr.bf16.gmra.mrb[0].mxu0 %v2724
  %v3251 = vpop.f32.mrb[0].mxu0
  %v3252 = vadd.f32 0.0, %v3251
  %v3253 = vpop.f32.mrb[0].mxu0
  %v3254 = vadd.f32 0.0, %v3253
  %v3255 = vpop.f32.mrb[0].mxu0
  %v3256 = vadd.f32 0.0, %v3255
  %v3257 = vpop.f32.mrb[0].mxu0
  %v3258 = vadd.f32 0.0, %v3257
  %3259 = vmatprep.mubr.bf16.mxu0 %v2948
  %3260 = vmatmul.mubr.bf16.gmra.mrb[0].mxu0 %v2726
  %v3261 = vpop.f32.mrb[0].mxu0
  %v3262 = vadd.f32 0.0, %v3261
  %v3263 = vpop.f32.mrb[0].mxu0
  %v3264 = vadd.f32 0.0, %v3263
  %v3265 = vpop.f32.mrb[0].mxu0
  %v3266 = vadd.f32 0.0, %v3265
  %v3267 = vpop.f32.mrb[0].mxu0
  %v3268 = vadd.f32 0.0, %v3267
  %3269 = vmatprep.mubr.bf16.mxu0 %v2951
  %3270 = vmatmul.mubr.bf16.gmra.mrb[0].mxu0 %v2728
  %v3271 = vpop.f32.mrb[0].mxu0
  %v3272 = vadd.f32 0.0, %v3271
  %v3273 = vpop.f32.mrb[0].mxu0
  %v3274 = vadd.f32 0.0, %v3273
  %v3275 = vpop.f32.mrb[0].mxu0
  %v3276 = vadd.f32 0.0, %v3275
  %v3277 = vpop.f32.mrb[0].mxu0
  %v3278 = vadd.f32 0.0, %v3277
  %3279 = vmatprep.mubr.bf16.mxu0 %v2954
  %3280 = vmatmul.mubr.bf16.gmra.mrb[0].mxu0 %v2730
  %v3281 = vpop.f32.mrb[0].mxu0
  %v3282 = vadd.f32 0.0, %v3281
  %v3283 = vpop.f32.mrb[0].mxu0
  %v3284 = vadd.f32 0.0, %v3283
  %v3285 = vpop.f32.mrb[0].mxu0
  %v3286 = vadd.f32 0.0, %v3285
  %v3287 = vpop.f32.mrb[0].mxu0
  %v3288 = vadd.f32 0.0, %v3287
  %3289 = vmatprep.mubr.bf16.mxu0 %v2957
  %3290 = vmatmul.mubr.bf16.gmra.mrb[0].mxu0 %v2732
  %v3291 = vpop.f32.mrb[0].mxu0
  %v3292 = vadd.f32 0.0, %v3291
  %v3293 = vpop.f32.mrb[0].mxu0
  %v3294 = vadd.f32 0.0, %v3293
  %v3295 = vpop.f32.mrb[0].mxu0
  %v3296 = vadd.f32 0.0, %v3295
  %v3297 = vpop.f32.mrb[0].mxu0
  %v3298 = vadd.f32 0.0, %v3297
  %3299 = vmatprep.mubr.bf16.mxu0 %v2960
  %3300 = vmatmul.mubr.bf16.gmra.mrb[0].mxu0 %v2734
  %v3301 = vpop.f32.mrb[0].mxu0
  %v3302 = vadd.f32 0.0, %v3301
  %v3303 = vpop.f32.mrb[0].mxu0
  %v3304 = vadd.f32 0.0, %v3303
  %v3305 = vpop.f32.mrb[0].mxu0
  %v3306 = vadd.f32 0.0, %v3305
  %v3307 = vpop.f32.mrb[0].mxu0
  %v3308 = vadd.f32 0.0, %v3307
  %3309 = vmatprep.mubr.bf16.mxu0 %v2963
  %3310 = vmatmul.mubr.bf16.gmra.mrb[0].mxu0 %v2736
  %v3311 = vpop.f32.mrb[0].mxu0
  %v3312 = vadd.f32 0.0, %v3311
  %v3313 = vpop.f32.mrb[0].mxu0
  %v3314 = vadd.f32 0.0, %v3313
  %v3315 = vpop.f32.mrb[0].mxu0
  %v3316 = vadd.f32 0.0, %v3315
  %v3317 = vpop.f32.mrb[0].mxu0
  %v3318 = vadd.f32 0.0, %v3317
  %3319 = vmatprep.mubr.bf16.mxu0 %v2966
  %3320 = vmatmul.mubr.bf16.gmra.mrb[0].mxu0 %v2738
  %v3321 = vpop.f32.mrb[0].mxu0
  %v3322 = vadd.f32 0.0, %v3321
  %v3323 = vpop.f32.mrb[0].mxu0
  %v3324 = vadd.f32 0.0, %v3323
  %v3325 = vpop.f32.mrb[0].mxu0
  %v3326 = vadd.f32 0.0, %v3325
  %v3327 = vpop.f32.mrb[0].mxu0
  %v3328 = vadd.f32 0.0, %v3327
  %3329 = vmatprep.mubr.bf16.mxu0 %v2969
  %3330 = vmatmul.mubr.bf16.gmra.mrb[0].mxu0 %v2740
  %v3331 = vpop.f32.mrb[0].mxu0
  %v3332 = vadd.f32 0.0, %v3331
  %v3333 = vpop.f32.mrb[0].mxu0
  %v3334 = vadd.f32 0.0, %v3333
  %v3335 = vpop.f32.mrb[0].mxu0
  %v3336 = vadd.f32 0.0, %v3335
  %v3337 = vpop.f32.mrb[0].mxu0
  %v3338 = vadd.f32 0.0, %v3337
  %3339 = vmatprep.mubr.bf16.mxu0 %v2972
  %3340 = vmatmul.mubr.bf16.gmra.mrb[0].mxu0 %v2742
  %v3341 = vpop.f32.mrb[0].mxu0
  %v3342 = vadd.f32 0.0, %v3341
  %v3343 = vpop.f32.mrb[0].mxu0
  %v3344 = vadd.f32 0.0, %v3343
  %v3345 = vpop.f32.mrb[0].mxu0
  %v3346 = vadd.f32 0.0, %v3345
  %v3347 = vpop.f32.mrb[0].mxu0
  %v3348 = vadd.f32 0.0, %v3347
  %3349 = vmatprep.mubr.bf16.mxu0 %v2975
  %3350 = vmatmul.mubr.bf16.gmra.mrb[0].mxu0 %v2744
  %v3351 = vpop.f32.mrb[0].mxu0
  %v3352 = vadd.f32 0.0, %v3351
  %v3353 = vpop.f32.mrb[0].mxu0
  %v3354 = vadd.f32 0.0, %v3353
  %v3355 = vpop.f32.mrb[0].mxu0
  %v3356 = vadd.f32 0.0, %v3355
  %v3357 = vpop.f32.mrb[0].mxu0
  %v3358 = vadd.f32 0.0, %v3357
  %3359 = vmatprep.mubr.bf16.mxu0 %v2978
  %3360 = vmatmul.mubr.bf16.gmra.mrb[0].mxu0 %v2746
  %v3361 = vpop.f32.mrb[0].mxu0
  %v3362 = vadd.f32 0.0, %v3361
  %v3363 = vpop.f32.mrb[0].mxu0
  %v3364 = vadd.f32 0.0, %v3363
  %v3365 = vpop.f32.mrb[0].mxu0
  %v3366 = vadd.f32 0.0, %v3365
  %v3367 = vpop.f32.mrb[0].mxu0
  %v3368 = vadd.f32 0.0, %v3367
  %3369 = vmatprep.mubr.bf16.mxu0 %v2981
  %3370 = vmatmul.mubr.bf16.gmra.mrb[0].mxu0 %v2748
  %v3371 = vpop.f32.mrb[0].mxu0
  %v3372 = vadd.f32 0.0, %v3371
  %v3373 = vpop.f32.mrb[0].mxu0
  %v3374 = vadd.f32 0.0, %v3373
  %v3375 = vpop.f32.mrb[0].mxu0
  %v3376 = vadd.f32 0.0, %v3375
  %v3377 = vpop.f32.mrb[0].mxu0
  %v3378 = vadd.f32 0.0, %v3377
  %3379 = vmatprep.mubr.bf16.mxu0 %v2984
  %3380 = vmatmul.mubr.bf16.gmra.mrb[0].mxu0 %v2750
  %v3381 = vpop.f32.mrb[0].mxu0
  %v3382 = vadd.f32 0.0, %v3381
  %v3383 = vpop.f32.mrb[0].mxu0
  %v3384 = vadd.f32 0.0, %v3383
  %v3385 = vpop.f32.mrb[0].mxu0
  %v3386 = vadd.f32 0.0, %v3385
  %v3387 = vpop.f32.mrb[0].mxu0
  %v3388 = vadd.f32 0.0, %v3387
  %3389 = vmatprep.mubr.bf16.mxu0 %v2987
  %3390 = vmatmul.mubr.bf16.gmra.mrb[0].mxu0 %v2752
  %v3391 = vpop.f32.mrb[0].mxu0
  %v3392 = vadd.f32 0.0, %v3391
  %v3393 = vpop.f32.mrb[0].mxu0
  %v3394 = vadd.f32 0.0, %v3393
  %v3395 = vpop.f32.mrb[0].mxu0
  %v3396 = vadd.f32 0.0, %v3395
  %v3397 = vpop.f32.mrb[0].mxu0
  %v3398 = vadd.f32 0.0, %v3397
  %3399 = vmatprep.mubr.bf16.mxu0 %v2990
  %3400 = vmatmul.mubr.bf16.gmra.mrb[0].mxu0 %v2754
  %v3401 = vpop.f32.mrb[0].mxu0
  %v3402 = vadd.f32 0.0, %v3401
  %v3403 = vpop.f32.mrb[0].mxu0
  %v3404 = vadd.f32 0.0, %v3403
  %v3405 = vpop.f32.mrb[0].mxu0
  %v3406 = vadd.f32 0.0, %v3405
  %v3407 = vpop.f32.mrb[0].mxu0
  %v3408 = vadd.f32 0.0, %v3407
  %3409 = vmatprep.mubr.bf16.mxu0 %v2993
  %3410 = vmatmul.mubr.bf16.gmra.mrb[0].mxu0 %v2756
  %v3411 = vpop.f32.mrb[0].mxu0
  %v3412 = vadd.f32 0.0, %v3411
  %v3413 = vpop.f32.mrb[0].mxu0
  %v3414 = vadd.f32 0.0, %v3413
  %v3415 = vpop.f32.mrb[0].mxu0
  %v3416 = vadd.f32 0.0, %v3415
  %v3417 = vpop.f32.mrb[0].mxu0
  %v3418 = vadd.f32 0.0, %v3417
  %3419 = vmatprep.mubr.bf16.mxu0 %v2996
  %3420 = vmatmul.mubr.bf16.gmra.mrb[0].mxu0 %v2758
  %v3421 = vpop.f32.mrb[0].mxu0
  %v3422 = vadd.f32 0.0, %v3421
  %v3423 = vpop.f32.mrb[0].mxu0
  %v3424 = vadd.f32 0.0, %v3423
  %v3425 = vpop.f32.mrb[0].mxu0
  %v3426 = vadd.f32 0.0, %v3425
  %v3427 = vpop.f32.mrb[0].mxu0
  %v3428 = vadd.f32 0.0, %v3427
  %3429 = vmatprep.mubr.bf16.mxu0 %v2999
  %3430 = vmatmul.mubr.bf16.gmra.mrb[0].mxu0 %v2760
  %v3431 = vpop.f32.mrb[0].mxu0
  %v3432 = vadd.f32 0.0, %v3431
  %v3433 = vpop.f32.mrb[0].mxu0
  %v3434 = vadd.f32 0.0, %v3433
  %v3435 = vpop.f32.mrb[0].mxu0
  %v3436 = vadd.f32 0.0, %v3435
  %v3437 = vpop.f32.mrb[0].mxu0
  %v3438 = vadd.f32 0.0, %v3437
  %3439 = vmatprep.mubr.bf16.mxu0 %v3002
  %3440 = vmatmul.mubr.bf16.gmra.mrb[0].mxu0 %v2762
  %v3441 = vpop.f32.mrb[0].mxu0
  %v3442 = vadd.f32 0.0, %v3441
  %v3443 = vpop.f32.mrb[0].mxu0
  %v3444 = vadd.f32 0.0, %v3443
  %v3445 = vpop.f32.mrb[0].mxu0
  %v3446 = vadd.f32 0.0, %v3445
  %v3447 = vpop.f32.mrb[0].mxu0
  %v3448 = vadd.f32 0.0, %v3447
  %3449 = vmatprep.mubr.bf16.mxu0 %v3005
  %3450 = vmatmul.mubr.bf16.gmra.mrb[0].mxu0 %v2764
  %v3451 = vpop.f32.mrb[0].mxu0
  %v3452 = vadd.f32 0.0, %v3451
  %v3453 = vpop.f32.mrb[0].mxu0
  %v3454 = vadd.f32 0.0, %v3453
  %v3455 = vpop.f32.mrb[0].mxu0
  %v3456 = vadd.f32 0.0, %v3455
  %v3457 = vpop.f32.mrb[0].mxu0
  %v3458 = vadd.f32 0.0, %v3457
  %3459 = vmatprep.mubr.bf16.mxu0 %v3008
  %3460 = vmatmul.mubr.bf16.gmra.mrb[0].mxu0 %v2766
  %v3461 = vpop.f32.mrb[0].mxu0
  %v3462 = vadd.f32 0.0, %v3461
  %v3463 = vpop.f32.mrb[0].mxu0
  %v3464 = vadd.f32 0.0, %v3463
  %v3465 = vpop.f32.mrb[0].mxu0
  %v3466 = vadd.f32 0.0, %v3465
  %v3467 = vpop.f32.mrb[0].mxu0
  %v3468 = vadd.f32 0.0, %v3467
  %3469 = vmatprep.mubr.bf16.mxu0 %v3011
  %3470 = vmatmul.mubr.bf16.gmra.mrb[0].mxu0 %v2768
  %v3471 = vpop.f32.mrb[0].mxu0
  %v3472 = vadd.f32 0.0, %v3471
  %v3473 = vpop.f32.mrb[0].mxu0
  %v3474 = vadd.f32 0.0, %v3473
  %v3475 = vpop.f32.mrb[0].mxu0
  %v3476 = vadd.f32 0.0, %v3475
  %v3477 = vpop.f32.mrb[0].mxu0
  %v3478 = vadd.f32 0.0, %v3477
  %3479 = vmatprep.mubr.bf16.mxu0 %v3014
  %3480 = vmatmul.mubr.bf16.gmra.mrb[0].mxu0 %v2770
  %v3481 = vpop.f32.mrb[0].mxu0
  %v3482 = vadd.f32 0.0, %v3481
  %v3483 = vpop.f32.mrb[0].mxu0
  %v3484 = vadd.f32 0.0, %v3483
  %v3485 = vpop.f32.mrb[0].mxu0
  %v3486 = vadd.f32 0.0, %v3485
  %v3487 = vpop.f32.mrb[0].mxu0
  %v3488 = vadd.f32 0.0, %v3487
  %3489 = vmatprep.mubr.bf16.mxu0 %v3017
  %3490 = vmatmul.mubr.bf16.gmra.mrb[0].mxu0 %v2772
  %v3491 = vpop.f32.mrb[0].mxu0
  %v3492 = vadd.f32 0.0, %v3491
  %v3493 = vpop.f32.mrb[0].mxu0
  %v3494 = vadd.f32 0.0, %v3493
  %v3495 = vpop.f32.mrb[0].mxu0
  %v3496 = vadd.f32 0.0, %v3495
  %v3497 = vpop.f32.mrb[0].mxu0
  %v3498 = vadd.f32 0.0, %v3497
  %3499 = vmatprep.mubr.bf16.mxu0 %v3020
  %3500 = vmatmul.mubr.bf16.gmra.mrb[0].mxu0 %v2774
  %v3501 = vpop.f32.mrb[0].mxu0
  %v3502 = vadd.f32 0.0, %v3501
  %v3503 = vpop.f32.mrb[0].mxu0
  %v3504 = vadd.f32 0.0, %v3503
  %v3505 = vpop.f32.mrb[0].mxu0
  %v3506 = vadd.f32 0.0, %v3505
  %v3507 = vpop.f32.mrb[0].mxu0
  %v3508 = vadd.f32 0.0, %v3507
  %3509 = vmatprep.mubr.bf16.mxu0 %v3023
  %3510 = vmatmul.mubr.bf16.gmra.mrb[0].mxu0 %v2776
  %v3511 = vpop.f32.mrb[0].mxu0
  %v3512 = vadd.f32 0.0, %v3511
  %v3513 = vpop.f32.mrb[0].mxu0
  %v3514 = vadd.f32 0.0, %v3513
  %v3515 = vpop.f32.mrb[0].mxu0
  %v3516 = vadd.f32 0.0, %v3515
  %v3517 = vpop.f32.mrb[0].mxu0
  %v3518 = vadd.f32 0.0, %v3517
  %3519 = vmatprep.mubr.bf16.mxu0 %v3026
  %3520 = vmatmul.mubr.bf16.gmra.mrb[0].mxu0 %v2778
  %v3521 = vpop.f32.mrb[0].mxu0
  %v3522 = vadd.f32 0.0, %v3521
  %v3523 = vpop.f32.mrb[0].mxu0
  %v3524 = vadd.f32 0.0, %v3523
  %v3525 = vpop.f32.mrb[0].mxu0
  %v3526 = vadd.f32 0.0, %v3525
  %v3527 = vpop.f32.mrb[0].mxu0
  %v3528 = vadd.f32 0.0, %v3527
  %3529 = vmatprep.mubr.bf16.mxu0 %v3029
  %3530 = vmatmul.mubr.bf16.gmra.mrb[0].mxu0 %v2780
  %v3531 = vpop.f32.mrb[0].mxu0
  %v3532 = vadd.f32 0.0, %v3531
  %v3533 = vpop.f32.mrb[0].mxu0
  %v3534 = vadd.f32 0.0, %v3533
  %v3535 = vpop.f32.mrb[0].mxu0
  %v3536 = vadd.f32 0.0, %v3535
  %v3537 = vpop.f32.mrb[0].mxu0
  %v3538 = vadd.f32 0.0, %v3537
  %3539 = vmatprep.mubr.bf16.mxu0 %v3032
  %3540 = vmatmul.mubr.bf16.gmra.mrb[0].mxu0 %v2782
  %v3541 = vpop.f32.mrb[0].mxu0
  %v3542 = vadd.f32 0.0, %v3541
  %v3543 = vpop.f32.mrb[0].mxu0
  %v3544 = vadd.f32 0.0, %v3543
  %v3545 = vpop.f32.mrb[0].mxu0
  %v3546 = vadd.f32 0.0, %v3545
  %v3547 = vpop.f32.mrb[0].mxu0
  %v3548 = vadd.f32 0.0, %v3547
  %3549 = vmatprep.mubr.bf16.mxu0 %v3035
  %3550 = vmatmul.mubr.bf16.gmra.mrb[0].mxu0 %v2784
  %v3551 = vpop.f32.mrb[0].mxu0
  %v3552 = vadd.f32 0.0, %v3551
  %v3553 = vpop.f32.mrb[0].mxu0
  %v3554 = vadd.f32 0.0, %v3553
  %v3555 = vpop.f32.mrb[0].mxu0
  %v3556 = vadd.f32 0.0, %v3555
  %v3557 = vpop.f32.mrb[0].mxu0
  %v3558 = vadd.f32 0.0, %v3557
  %3559 = vmatprep.mubr.bf16.mxu0 %v3038
  %3560 = vmatmul.mubr.bf16.gmra.mrb[0].mxu0 %v2786
  %v3561 = vpop.f32.mrb[0].mxu0
  %v3562 = vadd.f32 0.0, %v3561
  %v3563 = vpop.f32.mrb[0].mxu0
  %v3564 = vadd.f32 0.0, %v3563
  %v3565 = vpop.f32.mrb[0].mxu0
  %v3566 = vadd.f32 0.0, %v3565
  %v3567 = vpop.f32.mrb[0].mxu0
  %v3568 = vadd.f32 0.0, %v3567
  %3569 = vmatprep.mubr.bf16.mxu0 %v3041
  %3570 = vmatmul.mubr.bf16.gmra.mrb[0].mxu0 %v2788
  %v3571 = vpop.f32.mrb[0].mxu0
  %v3572 = vadd.f32 0.0, %v3571
  %v3573 = vpop.f32.mrb[0].mxu0
  %v3574 = vadd.f32 0.0, %v3573
  %v3575 = vpop.f32.mrb[0].mxu0
  %v3576 = vadd.f32 0.0, %v3575
  %v3577 = vpop.f32.mrb[0].mxu0
  %v3578 = vadd.f32 0.0, %v3577
  %3579 = vmatprep.mubr.bf16.mxu0 %v3044
  %3580 = vmatmul.mubr.bf16.gmra.mrb[0].mxu0 %v2790
  %v3581 = vpop.f32.mrb[0].mxu0
  %v3582 = vadd.f32 0.0, %v3581
  %v3583 = vpop.f32.mrb[0].mxu0
  %v3584 = vadd.f32 0.0, %v3583
  %v3585 = vpop.f32.mrb[0].mxu0
  %v3586 = vadd.f32 0.0, %v3585
  %v3587 = vpop.f32.mrb[0].mxu0
  %v3588 = vadd.f32 0.0, %v3587
  %3589 = vmatprep.mubr.bf16.mxu0 %v3047
  %3590 = vmatmul.mubr.bf16.gmra.mrb[0].mxu0 %v2792
  %v3591 = vpop.f32.mrb[0].mxu0
  %v3592 = vadd.f32 0.0, %v3591
  %v3593 = vpop.f32.mrb[0].mxu0
  %v3594 = vadd.f32 0.0, %v3593
  %v3595 = vpop.f32.mrb[0].mxu0
  %v3596 = vadd.f32 0.0, %v3595
  %v3597 = vpop.f32.mrb[0].mxu0
  %v3598 = vadd.f32 0.0, %v3597
  %3599 = vmatprep.mubr.bf16.mxu0 %v3050
  %3600 = vmatmul.mubr.bf16.gmra.mrb[0].mxu0 %v2794
  %v3601 = vpop.f32.mrb[0].mxu0
  %v3602 = vadd.f32 0.0, %v3601
  %v3603 = vpop.f32.mrb[0].mxu0
  %v3604 = vadd.f32 0.0, %v3603
  %v3605 = vpop.f32.mrb[0].mxu0
  %v3606 = vadd.f32 0.0, %v3605
  %v3607 = vpop.f32.mrb[0].mxu0
  %v3608 = vadd.f32 0.0, %v3607
  %3609 = vmatprep.mubr.bf16.mxu0 %v3053
  %3610 = vmatmul.mubr.bf16.gmra.mrb[0].mxu0 %v2796
  %v3611 = vpop.f32.mrb[0].mxu0
  %v3612 = vadd.f32 0.0, %v3611
  %v3613 = vpop.f32.mrb[0].mxu0
  %v3614 = vadd.f32 0.0, %v3613
  %v3615 = vpop.f32.mrb[0].mxu0
  %v3616 = vadd.f32 0.0, %v3615
  %v3617 = vpop.f32.mrb[0].mxu0
  %v3618 = vadd.f32 0.0, %v3617
  %3619 = vmatprep.mubr.bf16.mxu0 %v3056
  %3620 = vmatmul.mubr.bf16.gmra.mrb[0].mxu0 %v2798
  %v3621 = vpop.f32.mrb[0].mxu0
  %v3622 = vadd.f32 0.0, %v3621
  %v3623 = vpop.f32.mrb[0].mxu0
  %v3624 = vadd.f32 0.0, %v3623
  %v3625 = vpop.f32.mrb[0].mxu0
  %v3626 = vadd.f32 0.0, %v3625
  %v3627 = vpop.f32.mrb[0].mxu0
  %v3628 = vadd.f32 0.0, %v3627
  %3629 = vmatprep.mubr.bf16.mxu0 %v3059
  %3630 = vmatmul.mubr.bf16.gmra.mrb[0].mxu0 %v2800
  %v3631 = vpop.f32.mrb[0].mxu0
  %v3632 = vadd.f32 0.0, %v3631
  %v3633 = vpop.f32.mrb[0].mxu0
  %v3634 = vadd.f32 0.0, %v3633
  %v3635 = vpop.f32.mrb[0].mxu0
  %v3636 = vadd.f32 0.0, %v3635
  %v3637 = vpop.f32.mrb[0].mxu0
  %v3638 = vadd.f32 0.0, %v3637
  %3639 = vmatprep.mubr.bf16.mxu0 %v3062
  %3640 = vmatmul.mubr.bf16.gmra.mrb[0].mxu0 %v2802
  %v3641 = vpop.f32.mrb[0].mxu0
  %v3642 = vadd.f32 0.0, %v3641
  %v3643 = vpop.f32.mrb[0].mxu0
  %v3644 = vadd.f32 0.0, %v3643
  %v3645 = vpop.f32.mrb[0].mxu0
  %v3646 = vadd.f32 0.0, %v3645
  %v3647 = vpop.f32.mrb[0].mxu0
  %v3648 = vadd.f32 0.0, %v3647
  %3649 = vmatprep.mubr.bf16.mxu0 %v3065
  %3650 = vmatmul.mubr.bf16.gmra.mrb[0].mxu0 %v2804
  %v3651 = vpop.f32.mrb[0].mxu0
  %v3652 = vadd.f32 0.0, %v3651
  %v3653 = vpop.f32.mrb[0].mxu0
  %v3654 = vadd.f32 0.0, %v3653
  %v3655 = vpop.f32.mrb[0].mxu0
  %v3656 = vadd.f32 0.0, %v3655
  %v3657 = vpop.f32.mrb[0].mxu0
  %v3658 = vadd.f32 0.0, %v3657
  %3659 = vmatprep.mubr.bf16.mxu0 %v3068
  %3660 = vmatmul.mubr.bf16.gmra.mrb[0].mxu0 %v2806
  %v3661 = vpop.f32.mrb[0].mxu0
  %v3662 = vadd.f32 0.0, %v3661
  %v3663 = vpop.f32.mrb[0].mxu0
  %v3664 = vadd.f32 0.0, %v3663
  %v3665 = vpop.f32.mrb[0].mxu0
  %v3666 = vadd.f32 0.0, %v3665
  %v3667 = vpop.f32.mrb[0].mxu0
  %v3668 = vadd.f32 0.0, %v3667
  %3669 = vmatprep.mubr.bf16.mxu0 %v3071
  %3670 = vmatmul.mubr.bf16.gmra.mrb[0].mxu0 %v2808
  %v3671 = vpop.f32.mrb[0].mxu0
  %v3672 = vadd.f32 0.0, %v3671
  %v3673 = vpop.f32.mrb[0].mxu0
  %v3674 = vadd.f32 0.0, %v3673
  %v3675 = vpop.f32.mrb[0].mxu0
  %v3676 = vadd.f32 0.0, %v3675
  %v3677 = vpop.f32.mrb[0].mxu0
  %v3678 = vadd.f32 0.0, %v3677
  %3679 = vmatprep.mubr.bf16.mxu0 %v3074
  %3680 = vmatmul.mubr.bf16.gmra.mrb[0].mxu0 %v2810
  %v3681 = vpop.f32.mrb[0].mxu0
  %v3682 = vadd.f32 0.0, %v3681
  %v3683 = vpop.f32.mrb[0].mxu0
  %v3684 = vadd.f32 0.0, %v3683
  %v3685 = vpop.f32.mrb[0].mxu0
  %v3686 = vadd.f32 0.0, %v3685
  %v3687 = vpop.f32.mrb[0].mxu0
  %v3688 = vadd.f32 0.0, %v3687
  %3689 = vmatprep.mubr.bf16.mxu0 %v3077
  %3690 = vmatmul.mubr.bf16.gmra.mrb[0].mxu0 %v2812
  %v3691 = vpop.f32.mrb[0].mxu0
  %v3692 = vadd.f32 0.0, %v3691
  %v3693 = vpop.f32.mrb[0].mxu0
  %v3694 = vadd.f32 0.0, %v3693
  %v3695 = vpop.f32.mrb[0].mxu0
  %v3696 = vadd.f32 0.0, %v3695
  %v3697 = vpop.f32.mrb[0].mxu0
  %v3698 = vadd.f32 0.0, %v3697
  %3699 = vmatprep.mubr.bf16.mxu0 %v3080
  %3700 = vmatmul.mubr.bf16.gmra.mrb[0].mxu0 %v2814
  %v3701 = vpop.f32.mrb[0].mxu0
  %v3702 = vadd.f32 0.0, %v3701
  %v3703 = vpop.f32.mrb[0].mxu0
  %v3704 = vadd.f32 0.0, %v3703
  %v3705 = vpop.f32.mrb[0].mxu0
  %v3706 = vadd.f32 0.0, %v3705
  %v3707 = vpop.f32.mrb[0].mxu0
  %v3708 = vadd.f32 0.0, %v3707
  %3709 = vmatprep.mubr.bf16.mxu0 %v3083
  %3710 = vmatmul.mubr.bf16.gmra.mrb[0].mxu0 %v2816
  %v3711 = vpop.f32.mrb[0].mxu0
  %v3712 = vadd.f32 0.0, %v3711
  %v3713 = vpop.f32.mrb[0].mxu0
  %v3714 = vadd.f32 0.0, %v3713
  %v3715 = vpop.f32.mrb[0].mxu0
  %v3716 = vadd.f32 0.0, %v3715
  %v3717 = vpop.f32.mrb[0].mxu0
  %v3718 = vadd.f32 0.0, %v3717
  %3719 = vmatprep.mubr.bf16.mxu0 %v3086
  %3720 = vmatmul.mubr.bf16.gmra.mrb[0].mxu0 %v2818
  %v3721 = vpop.f32.mrb[0].mxu0
  %v3722 = vadd.f32 0.0, %v3721
  %v3723 = vpop.f32.mrb[0].mxu0
  %v3724 = vadd.f32 0.0, %v3723
  %v3725 = vpop.f32.mrb[0].mxu0
  %v3726 = vadd.f32 0.0, %v3725
  %v3727 = vpop.f32.mrb[0].mxu0
  %v3728 = vadd.f32 0.0, %v3727
  %3729 = vmatprep.mubr.bf16.mxu0 %v3089
  %3730 = vmatmul.mubr.bf16.gmra.mrb[0].mxu0 %v2820
  %v3731 = vpop.f32.mrb[0].mxu0
  %v3732 = vadd.f32 0.0, %v3731
  %v3733 = vpop.f32.mrb[0].mxu0
  %v3734 = vadd.f32 0.0, %v3733
  %v3735 = vpop.f32.mrb[0].mxu0
  %v3736 = vadd.f32 0.0, %v3735
  %v3737 = vpop.f32.mrb[0].mxu0
  %v3738 = vadd.f32 0.0, %v3737
  %3739 = vmatprep.mubr.bf16.mxu0 %v3092
  %3740 = vmatmul.mubr.bf16.gmra.mrb[0].mxu0 %v2822
  %v3741 = vpop.f32.mrb[0].mxu0
  %v3742 = vadd.f32 0.0, %v3741
  %v3743 = vpop.f32.mrb[0].mxu0
  %v3744 = vadd.f32 0.0, %v3743
  %v3745 = vpop.f32.mrb[0].mxu0
  %v3746 = vadd.f32 0.0, %v3745
  %v3747 = vpop.f32.mrb[0].mxu0
  %v3748 = vadd.f32 0.0, %v3747
  %3749 = vmatprep.mubr.bf16.mxu0 %v3095
  %3750 = vmatmul.mubr.bf16.gmra.mrb[0].mxu0 %v2824
  %v3751 = vpop.f32.mrb[0].mxu0
  %v3752 = vadd.f32 0.0, %v3751
  %v3753 = vpop.f32.mrb[0].mxu0
  %v3754 = vadd.f32 0.0, %v3753
  %v3755 = vpop.f32.mrb[0].mxu0
  %v3756 = vadd.f32 0.0, %v3755
  %v3757 = vpop.f32.mrb[0].mxu0
  %v3758 = vadd.f32 0.0, %v3757
  %3759 = vmatprep.mubr.bf16.mxu0 %v3098
  %3760 = vmatmul.mubr.bf16.gmra.mrb[0].mxu0 %v2826
  %v3761 = vpop.f32.mrb[0].mxu0
  %v3762 = vadd.f32 0.0, %v3761
  %v3763 = vpop.f32.mrb[0].mxu0
  %v3764 = vadd.f32 0.0, %v3763
  %v3765 = vpop.f32.mrb[0].mxu0
  %v3766 = vadd.f32 0.0, %v3765
  %v3767 = vpop.f32.mrb[0].mxu0
  %v3768 = vadd.f32 0.0, %v3767
  %3769 = vmatprep.mubr.bf16.mxu0 %v3101
  %3770 = vmatmul.mubr.bf16.gmra.mrb[0].mxu0 %v2828
  %v3771 = vpop.f32.mrb[0].mxu0
  %v3772 = vadd.f32 0.0, %v3771
  %v3773 = vpop.f32.mrb[0].mxu0
  %v3774 = vadd.f32 0.0, %v3773
  %v3775 = vpop.f32.mrb[0].mxu0
  %v3776 = vadd.f32 0.0, %v3775
  %v3777 = vpop.f32.mrb[0].mxu0
  %v3778 = vadd.f32 0.0, %v3777
  %3779 = vmatprep.mubr.bf16.mxu0 %v3104
  %3780 = vmatmul.mubr.bf16.gmra.mrb[0].mxu0 %v2830
  %v3781 = vpop.f32.mrb[0].mxu0
  %v3782 = vadd.f32 0.0, %v3781
  %v3783 = vpop.f32.mrb[0].mxu0
  %v3784 = vadd.f32 0.0, %v3783
  %v3785 = vpop.f32.mrb[0].mxu0
  %v3786 = vadd.f32 0.0, %v3785
  %v3787 = vpop.f32.mrb[0].mxu0
  %v3788 = vadd.f32 0.0, %v3787
  %3789 = vmatprep.mubr.bf16.mxu0 %v3107
  %3790 = vmatmul.mubr.bf16.gmra.mrb[0].mxu0 %v2832
  %v3791 = vpop.f32.mrb[0].mxu0
  %v3792 = vadd.f32 0.0, %v3791
  %v3793 = vpop.f32.mrb[0].mxu0
  %v3794 = vadd.f32 0.0, %v3793
  %v3795 = vpop.f32.mrb[0].mxu0
  %v3796 = vadd.f32 0.0, %v3795
  %v3797 = vpop.f32.mrb[0].mxu0
  %v3798 = vadd.f32 0.0, %v3797
  %3799 = vmatprep.mubr.bf16.mxu0 %v3110
  %3800 = vmatmul.mubr.bf16.gmra.mrb[0].mxu0 %v2834
  %v3801 = vpop.f32.mrb[0].mxu0
  %v3802 = vadd.f32 0.0, %v3801
  %v3803 = vpop.f32.mrb[0].mxu0
  %v3804 = vadd.f32 0.0, %v3803
  %v3805 = vpop.f32.mrb[0].mxu0
  %v3806 = vadd.f32 0.0, %v3805
  %v3807 = vpop.f32.mrb[0].mxu0
  %v3808 = vadd.f32 0.0, %v3807
  %3809 = vmatprep.mubr.bf16.mxu0 %v3113
  %3810 = vmatmul.mubr.bf16.gmra.mrb[0].mxu0 %v2836
  %v3811 = vpop.f32.mrb[0].mxu0
  %v3812 = vadd.f32 0.0, %v3811
  %v3813 = vpop.f32.mrb[0].mxu0
  %v3814 = vadd.f32 0.0, %v3813
  %v3815 = vpop.f32.mrb[0].mxu0
  %v3816 = vadd.f32 0.0, %v3815
  %v3817 = vpop.f32.mrb[0].mxu0
  %v3818 = vadd.f32 0.0, %v3817
  %3819 = vmatprep.mubr.bf16.mxu0 %v3116
  %3820 = vmatmul.mubr.bf16.gmra.mrb[0].mxu0 %v2838
  %v3821 = vpop.f32.mrb[0].mxu0
  %v3822 = vadd.f32 0.0, %v3821
  %v3823 = vpop.f32.mrb[0].mxu0
  %v3824 = vadd.f32 0.0, %v3823
  %v3825 = vpop.f32.mrb[0].mxu0
  %v3826 = vadd.f32 0.0, %v3825
  %v3827 = vpop.f32.mrb[0].mxu0
  %v3828 = vadd.f32 0.0, %v3827
  %3829 = vmatprep.mubr.bf16.mxu0 %v3119
  %3830 = vmatmul.mubr.bf16.gmra.mrb[0].mxu0 %v2840
  %v3831 = vpop.f32.mrb[0].mxu0
  %v3832 = vadd.f32 0.0, %v3831
  %v3833 = vpop.f32.mrb[0].mxu0
  %v3834 = vadd.f32 0.0, %v3833
  %v3835 = vpop.f32.mrb[0].mxu0
  %v3836 = vadd.f32 0.0, %v3835
  %v3837 = vpop.f32.mrb[0].mxu0
  %v3838 = vadd.f32 0.0, %v3837
  %3839 = vmatprep.mubr.bf16.mxu0 %v3122
  %3840 = vmatmul.mubr.bf16.gmra.mrb[0].mxu0 %v2842
  %v3841 = vpop.f32.mrb[0].mxu0
  %v3842 = vadd.f32 0.0, %v3841
  %v3843 = vpop.f32.mrb[0].mxu0
  %v3844 = vadd.f32 0.0, %v3843
  %v3845 = vpop.f32.mrb[0].mxu0
  %v3846 = vadd.f32 0.0, %v3845
  %v3847 = vpop.f32.mrb[0].mxu0
  %v3848 = vadd.f32 0.0, %v3847
  %3849 = vmatprep.mubr.bf16.mxu0 %v3125
  %3850 = vmatmul.mubr.bf16.gmra.mrb[0].mxu0 %v2844
  %v3851 = vpop.f32.mrb[0].mxu0
  %v3852 = vadd.f32 0.0, %v3851
  %v3853 = vpop.f32.mrb[0].mxu0
  %v3854 = vadd.f32 0.0, %v3853
  %v3855 = vpop.f32.mrb[0].mxu0
  %v3856 = vadd.f32 0.0, %v3855
  %v3857 = vpop.f32.mrb[0].mxu0
  %v3858 = vadd.f32 0.0, %v3857
  %3859 = vdwg.mxu0
  %s3860 = scalar_lea.vmem %s7, 3
  %v3861 = vld [vmem:[%s3860] ss:$8 sm:$0x3]
  %v3863 = vlaneseq
  %v3864 = vshrl.u32 %v3863, 7
  %v3865 = vsub.s32 0, %v3864
  %v3866 = vrot.slane %v3861, %v3865
  %v3867 = vlaneseq
  %v3868 = vshrl.u32 %v3867, 7
  %v3869 = vsub.s32 1, %v3868
  %v3870 = vrot.slane %v3861, %v3869
  %v3873 = vmul.f32 %v3462, %v3866
  %v3874 = vmul.f32 %v3464, %v3870
  %v3875 = vmul.f32 %v3466, %v3866
  %v3876 = vmul.f32 %v3468, %v3870
  %v3877 = vmul.f32 %v3472, %v3866
  %v3878 = vmul.f32 %v3474, %v3870
  %v3879 = vmul.f32 %v3476, %v3866
  %v3880 = vmul.f32 %v3478, %v3870
  %v3881 = vmul.f32 %v3482, %v3866
  %v3882 = vmul.f32 %v3484, %v3870
  %v3883 = vmul.f32 %v3486, %v3866
  %v3884 = vmul.f32 %v3488, %v3870
  %v3885 = vmul.f32 %v3492, %v3866
  %v3886 = vmul.f32 %v3494, %v3870
  %v3887 = vmul.f32 %v3496, %v3866
  %v3888 = vmul.f32 %v3498, %v3870
  %v3889 = vmul.f32 %v3502, %v3866
  %v3890 = vmul.f32 %v3504, %v3870
  %v3891 = vmul.f32 %v3506, %v3866
  %v3892 = vmul.f32 %v3508, %v3870
  %v3893 = vmul.f32 %v3512, %v3866
  %v3894 = vmul.f32 %v3514, %v3870
  %v3895 = vmul.f32 %v3516, %v3866
  %v3896 = vmul.f32 %v3518, %v3870
  %v3897 = vmul.f32 %v3522, %v3866
  %v3898 = vmul.f32 %v3524, %v3870
  %v3899 = vmul.f32 %v3526, %v3866
  %v3900 = vmul.f32 %v3528, %v3870
  %v3901 = vmul.f32 %v3532, %v3866
  %v3902 = vmul.f32 %v3534, %v3870
  %v3903 = vmul.f32 %v3536, %v3866
  %v3904 = vmul.f32 %v3538, %v3870
  %v3905 = vmul.f32 %v3542, %v3866
  %v3906 = vmul.f32 %v3544, %v3870
  %v3907 = vmul.f32 %v3546, %v3866
  %v3908 = vmul.f32 %v3548, %v3870
  %v3909 = vmul.f32 %v3552, %v3866
  %v3910 = vmul.f32 %v3554, %v3870
  %v3911 = vmul.f32 %v3556, %v3866
  %v3912 = vmul.f32 %v3558, %v3870
  %3913 = vrot.lane.b32.xlu0 %v3162, 3
  %v3914 = vpop.permute.xlu0 %3913
  %3915 = vrot.lane.b32.xlu0 %v3166, 3
  %v3916 = vpop.permute.xlu0 %3915
  %3917 = vrot.lane.b32.xlu0 %v3172, 3
  %v3918 = vpop.permute.xlu0 %3917
  %3919 = vrot.lane.b32.xlu0 %v3176, 3
  %v3920 = vpop.permute.xlu0 %3919
  %3921 = vrot.lane.b32.xlu0 %v3182, 3
  %v3922 = vpop.permute.xlu0 %3921
  %3923 = vrot.lane.b32.xlu0 %v3186, 3
  %v3924 = vpop.permute.xlu0 %3923
  %3925 = vrot.lane.b32.xlu0 %v3192, 3
  %v3926 = vpop.permute.xlu0 %3925
  %3927 = vrot.lane.b32.xlu0 %v3196, 3
  %v3928 = vpop.permute.xlu0 %3927
  %3929 = vrot.lane.b32.xlu0 %v3202, 3
  %v3930 = vpop.permute.xlu0 %3929
  %3931 = vrot.lane.b32.xlu0 %v3206, 3
  %v3932 = vpop.permute.xlu0 %3931
  %3933 = vrot.lane.b32.xlu0 %v3212, 3
  %v3934 = vpop.permute.xlu0 %3933
  %3935 = vrot.lane.b32.xlu0 %v3216, 3
  %v3936 = vpop.permute.xlu0 %3935
  %3937 = vrot.lane.b32.xlu0 %v3222, 3
  %v3938 = vpop.permute.xlu0 %3937
  %3939 = vrot.lane.b32.xlu0 %v3226, 3
  %v3940 = vpop.permute.xlu0 %3939
  %3941 = vrot.lane.b32.xlu0 %v3232, 3
  %v3942 = vpop.permute.xlu0 %3941
  %3943 = vrot.lane.b32.xlu0 %v3236, 3
  %v3944 = vpop.permute.xlu0 %3943
  %3945 = vrot.lane.b32.xlu0 %v3242, 3
  %v3946 = vpop.permute.xlu0 %3945
  %3947 = vrot.lane.b32.xlu0 %v3246, 3
  %v3948 = vpop.permute.xlu0 %3947
  %3949 = vrot.lane.b32.xlu0 %v3252, 3
  %v3950 = vpop.permute.xlu0 %3949
  %3951 = vrot.lane.b32.xlu0 %v3256, 3
  %v3952 = vpop.permute.xlu0 %3951
  %3953 = vrot.lane.b32.xlu0 %v3164, 3
  %v3954 = vpop.permute.xlu0 %3953
  %3955 = vrot.lane.b32.xlu0 %v3168, 3
  %v3956 = vpop.permute.xlu0 %3955
  %3957 = vrot.lane.b32.xlu0 %v3174, 3
  %v3958 = vpop.permute.xlu0 %3957
  %3959 = vrot.lane.b32.xlu0 %v3178, 3
  %v3960 = vpop.permute.xlu0 %3959
  %3961 = vrot.lane.b32.xlu0 %v3184, 3
  %v3962 = vpop.permute.xlu0 %3961
  %3963 = vrot.lane.b32.xlu0 %v3188, 3
  %v3964 = vpop.permute.xlu0 %3963
  %3965 = vrot.lane.b32.xlu0 %v3194, 3
  %v3966 = vpop.permute.xlu0 %3965
  %3967 = vrot.lane.b32.xlu0 %v3198, 3
  %v3968 = vpop.permute.xlu0 %3967
  %3969 = vrot.lane.b32.xlu0 %v3204, 3
  %v3970 = vpop.permute.xlu0 %3969
  %3971 = vrot.lane.b32.xlu0 %v3208, 3
  %v3972 = vpop.permute.xlu0 %3971
  %3973 = vrot.lane.b32.xlu0 %v3214, 3
  %v3974 = vpop.permute.xlu0 %3973
  %3975 = vrot.lane.b32.xlu0 %v3218, 3
  %v3976 = vpop.permute.xlu0 %3975
  %3977 = vrot.lane.b32.xlu0 %v3224, 3
  %v3978 = vpop.permute.xlu0 %3977
  %3979 = vrot.lane.b32.xlu0 %v3228, 3
  %v3980 = vpop.permute.xlu0 %3979
  %3981 = vrot.lane.b32.xlu0 %v3234, 3
  %v3982 = vpop.permute.xlu0 %3981
  %3983 = vrot.lane.b32.xlu0 %v3238, 3
  %v3984 = vpop.permute.xlu0 %3983
  %3985 = vrot.lane.b32.xlu0 %v3244, 3
  %v3986 = vpop.permute.xlu0 %3985
  %3987 = vrot.lane.b32.xlu0 %v3248, 3
  %v3988 = vpop.permute.xlu0 %3987
  %3989 = vrot.lane.b32.xlu0 %v3254, 3
  %v3990 = vpop.permute.xlu0 %3989
  %3991 = vrot.lane.b32.xlu0 %v3258, 3
  %v3992 = vpop.permute.xlu0 %3991
  %v3993 = vlaneseq
  %v3994 = vand.u32 %v3993, 127
  %vm3995 = vcmp.lt.s32.totalorder %v3994, 3
  %v3996 = vsel %vm3995, %v3914, %v3954
  %v3997 = vsel %vm3995, %v3916, %v3956
  %v3998 = vsel %vm3995, %v3918, %v3958
  %v3999 = vsel %vm3995, %v3920, %v3960
  %v4000 = vsel %vm3995, %v3922, %v3962
  %v4001 = vsel %vm3995, %v3924, %v3964
  %v4002 = vsel %vm3995, %v3926, %v3966
  %v4003 = vsel %vm3995, %v3928, %v3968
  %v4004 = vsel %vm3995, %v3930, %v3970
  %v4005 = vsel %vm3995, %v3932, %v3972
  %v4006 = vsel %vm3995, %v3934, %v3974
  %v4007 = vsel %vm3995, %v3936, %v3976
  %v4008 = vsel %vm3995, %v3938, %v3978
  %v4009 = vsel %vm3995, %v3940, %v3980
  %v4010 = vsel %vm3995, %v3942, %v3982
  %v4011 = vsel %vm3995, %v3944, %v3984
  %v4012 = vsel %vm3995, %v3946, %v3986
  %v4013 = vsel %vm3995, %v3948, %v3988
  %v4014 = vsel %vm3995, %v3950, %v3990
  %v4015 = vsel %vm3995, %v3952, %v3992
  %v4016 = vsel %vm3995, %v3954, %v3914
  %v4017 = vsel %vm3995, %v3956, %v3916
  %v4018 = vsel %vm3995, %v3958, %v3918
  %v4019 = vsel %vm3995, %v3960, %v3920
  %v4020 = vsel %vm3995, %v3962, %v3922
  %v4021 = vsel %vm3995, %v3964, %v3924
  %v4022 = vsel %vm3995, %v3966, %v3926
  %v4023 = vsel %vm3995, %v3968, %v3928
  %v4024 = vsel %vm3995, %v3970, %v3930
  %v4025 = vsel %vm3995, %v3972, %v3932
  %v4026 = vsel %vm3995, %v3974, %v3934
  %v4027 = vsel %vm3995, %v3976, %v3936
  %v4028 = vsel %vm3995, %v3978, %v3938
  %v4029 = vsel %vm3995, %v3980, %v3940
  %v4030 = vsel %vm3995, %v3982, %v3942
  %v4031 = vsel %vm3995, %v3984, %v3944
  %v4032 = vsel %vm3995, %v3986, %v3946
  %v4033 = vsel %vm3995, %v3988, %v3948
  %v4034 = vsel %vm3995, %v3990, %v3950
  %v4035 = vsel %vm3995, %v3992, %v3952
  %v4036 = vld [vmem:[%s7] ss:$8 sm:$0x3]
  %v4038 = vlaneseq
  %v4039 = vshrl.u32 %v4038, 7
  %v4040 = vsub.s32 0, %v4039
  %v4041 = vrot.slane %v4036, %v4040
  %v4042 = vlaneseq
  %v4043 = vshrl.u32 %v4042, 7
  %v4044 = vsub.s32 1, %v4043
  %v4045 = vrot.slane %v4036, %v4044
  %v4048 = vmul.f32 %v4016, %v4041
  %v4049 = vmul.f32 %v3996, %v4045
  %v4050 = vmul.f32 %v4017, %v4041
  %v4051 = vmul.f32 %v3997, %v4045
  %v4052 = vmul.f32 %v4018, %v4041
  %v4053 = vmul.f32 %v3998, %v4045
  %v4054 = vmul.f32 %v4019, %v4041
  %v4055 = vmul.f32 %v3999, %v4045
  %v4056 = vmul.f32 %v4020, %v4041
  %v4057 = vmul.f32 %v4000, %v4045
  %v4058 = vmul.f32 %v4021, %v4041
  %v4059 = vmul.f32 %v4001, %v4045
  %v4060 = vmul.f32 %v4022, %v4041
  %v4061 = vmul.f32 %v4002, %v4045
  %v4062 = vmul.f32 %v4023, %v4041
  %v4063 = vmul.f32 %v4003, %v4045
  %v4064 = vmul.f32 %v4024, %v4041
  %v4065 = vmul.f32 %v4004, %v4045
  %v4066 = vmul.f32 %v4025, %v4041
  %v4067 = vmul.f32 %v4005, %v4045
  %v4068 = vmul.f32 %v4026, %v4041
  %v4069 = vmul.f32 %v4006, %v4045
  %v4070 = vmul.f32 %v4027, %v4041
  %v4071 = vmul.f32 %v4007, %v4045
  %v4072 = vmul.f32 %v4028, %v4041
  %v4073 = vmul.f32 %v4008, %v4045
  %v4074 = vmul.f32 %v4029, %v4041
  %v4075 = vmul.f32 %v4009, %v4045
  %v4076 = vmul.f32 %v4030, %v4041
  %v4077 = vmul.f32 %v4010, %v4045
  %v4078 = vmul.f32 %v4031, %v4041
  %v4079 = vmul.f32 %v4011, %v4045
  %v4080 = vmul.f32 %v4032, %v4041
  %v4081 = vmul.f32 %v4012, %v4045
  %v4082 = vmul.f32 %v4033, %v4041
  %v4083 = vmul.f32 %v4013, %v4045
  %v4084 = vmul.f32 %v4034, %v4041
  %v4085 = vmul.f32 %v4014, %v4045
  %v4086 = vmul.f32 %v4035, %v4041
  %v4087 = vmul.f32 %v4015, %v4045
  %v4088 = vadd.f32 %v3873, %v4048
  %v4089 = vadd.f32 %v3874, %v4049
  %v4090 = vadd.f32 %v3875, %v4050
  %v4091 = vadd.f32 %v3876, %v4051
  %v4092 = vadd.f32 %v3877, %v4052
  %v4093 = vadd.f32 %v3878, %v4053
  %v4094 = vadd.f32 %v3879, %v4054
  %v4095 = vadd.f32 %v3880, %v4055
  %v4096 = vadd.f32 %v3881, %v4056
  %v4097 = vadd.f32 %v3882, %v4057
  %v4098 = vadd.f32 %v3883, %v4058
  %v4099 = vadd.f32 %v3884, %v4059
  %v4100 = vadd.f32 %v3885, %v4060
  %v4101 = vadd.f32 %v3886, %v4061
  %v4102 = vadd.f32 %v3887, %v4062
  %v4103 = vadd.f32 %v3888, %v4063
  %v4104 = vadd.f32 %v3889, %v4064
  %v4105 = vadd.f32 %v3890, %v4065
  %v4106 = vadd.f32 %v3891, %v4066
  %v4107 = vadd.f32 %v3892, %v4067
  %v4108 = vadd.f32 %v3893, %v4068
  %v4109 = vadd.f32 %v3894, %v4069
  %v4110 = vadd.f32 %v3895, %v4070
  %v4111 = vadd.f32 %v3896, %v4071
  %v4112 = vadd.f32 %v3897, %v4072
  %v4113 = vadd.f32 %v3898, %v4073
  %v4114 = vadd.f32 %v3899, %v4074
  %v4115 = vadd.f32 %v3900, %v4075
  %v4116 = vadd.f32 %v3901, %v4076
  %v4117 = vadd.f32 %v3902, %v4077
  %v4118 = vadd.f32 %v3903, %v4078
  %v4119 = vadd.f32 %v3904, %v4079
  %v4120 = vadd.f32 %v3905, %v4080
  %v4121 = vadd.f32 %v3906, %v4081
  %v4122 = vadd.f32 %v3907, %v4082
  %v4123 = vadd.f32 %v3908, %v4083
  %v4124 = vadd.f32 %v3909, %v4084
  %v4125 = vadd.f32 %v3910, %v4085
  %v4126 = vadd.f32 %v3911, %v4086
  %v4127 = vadd.f32 %v3912, %v4087
  %4128 = vrot.lane.b32.xlu0 %v3262, 2
  %v4129 = vpop.permute.xlu0 %4128
  %4130 = vrot.lane.b32.xlu0 %v3266, 2
  %v4131 = vpop.permute.xlu0 %4130
  %4132 = vrot.lane.b32.xlu0 %v3272, 2
  %v4133 = vpop.permute.xlu0 %4132
  %4134 = vrot.lane.b32.xlu0 %v3276, 2
  %v4135 = vpop.permute.xlu0 %4134
  %4136 = vrot.lane.b32.xlu0 %v3282, 2
  %v4137 = vpop.permute.xlu0 %4136
  %4138 = vrot.lane.b32.xlu0 %v3286, 2
  %v4139 = vpop.permute.xlu0 %4138
  %4140 = vrot.lane.b32.xlu0 %v3292, 2
  %v4141 = vpop.permute.xlu0 %4140
  %4142 = vrot.lane.b32.xlu0 %v3296, 2
  %v4143 = vpop.permute.xlu0 %4142
  %4144 = vrot.lane.b32.xlu0 %v3302, 2
  %v4145 = vpop.permute.xlu0 %4144
  %4146 = vrot.lane.b32.xlu0 %v3306, 2
  %v4147 = vpop.permute.xlu0 %4146
  %4148 = vrot.lane.b32.xlu0 %v3312, 2
  %v4149 = vpop.permute.xlu0 %4148
  %4150 = vrot.lane.b32.xlu0 %v3316, 2
  %v4151 = vpop.permute.xlu0 %4150
  %4152 = vrot.lane.b32.xlu0 %v3322, 2
  %v4153 = vpop.permute.xlu0 %4152
  %4154 = vrot.lane.b32.xlu0 %v3326, 2
  %v4155 = vpop.permute.xlu0 %4154
  %4156 = vrot.lane.b32.xlu0 %v3332, 2
  %v4157 = vpop.permute.xlu0 %4156
  %4158 = vrot.lane.b32.xlu0 %v3336, 2
  %v4159 = vpop.permute.xlu0 %4158
  %4160 = vrot.lane.b32.xlu0 %v3342, 2
  %v4161 = vpop.permute.xlu0 %4160
  %4162 = vrot.lane.b32.xlu0 %v3346, 2
  %v4163 = vpop.permute.xlu0 %4162
  %4164 = vrot.lane.b32.xlu0 %v3352, 2
  %v4165 = vpop.permute.xlu0 %4164
  %4166 = vrot.lane.b32.xlu0 %v3356, 2
  %v4167 = vpop.permute.xlu0 %4166
  %4168 = vrot.lane.b32.xlu0 %v3264, 2
  %v4169 = vpop.permute.xlu0 %4168
  %4170 = vrot.lane.b32.xlu0 %v3268, 2
  %v4171 = vpop.permute.xlu0 %4170
  %4172 = vrot.lane.b32.xlu0 %v3274, 2
  %v4173 = vpop.permute.xlu0 %4172
  %4174 = vrot.lane.b32.xlu0 %v3278, 2
  %v4175 = vpop.permute.xlu0 %4174
  %4176 = vrot.lane.b32.xlu0 %v3284, 2
  %v4177 = vpop.permute.xlu0 %4176
  %4178 = vrot.lane.b32.xlu0 %v3288, 2
  %v4179 = vpop.permute.xlu0 %4178
  %4180 = vrot.lane.b32.xlu0 %v3294, 2
  %v4181 = vpop.permute.xlu0 %4180
  %4182 = vrot.lane.b32.xlu0 %v3298, 2
  %v4183 = vpop.permute.xlu0 %4182
  %4184 = vrot.lane.b32.xlu0 %v3304, 2
  %v4185 = vpop.permute.xlu0 %4184
  %4186 = vrot.lane.b32.xlu0 %v3308, 2
  %v4187 = vpop.permute.xlu0 %4186
  %4188 = vrot.lane.b32.xlu0 %v3314, 2
  %v4189 = vpop.permute.xlu0 %4188
  %4190 = vrot.lane.b32.xlu0 %v3318, 2
  %v4191 = vpop.permute.xlu0 %4190
  %4192 = vrot.lane.b32.xlu0 %v3324, 2
  %v4193 = vpop.permute.xlu0 %4192
  %4194 = vrot.lane.b32.xlu0 %v3328, 2
  %v4195 = vpop.permute.xlu0 %4194
  %4196 = vrot.lane.b32.xlu0 %v3334, 2
  %v4197 = vpop.permute.xlu0 %4196
  %4198 = vrot.lane.b32.xlu0 %v3338, 2
  %v4199 = vpop.permute.xlu0 %4198
  %4200 = vrot.lane.b32.xlu0 %v3344, 2
  %v4201 = vpop.permute.xlu0 %4200
  %4202 = vrot.lane.b32.xlu0 %v3348, 2
  %v4203 = vpop.permute.xlu0 %4202
  %4204 = vrot.lane.b32.xlu0 %v3354, 2
  %v4205 = vpop.permute.xlu0 %4204
  %4206 = vrot.lane.b32.xlu0 %v3358, 2
  %v4207 = vpop.permute.xlu0 %4206
  %vm4208 = vcmp.lt.s32.totalorder %v3994, 2
  %v4209 = vsel %vm4208, %v4129, %v4169
  %v4210 = vsel %vm4208, %v4131, %v4171
  %v4211 = vsel %vm4208, %v4133, %v4173
  %v4212 = vsel %vm4208, %v4135, %v4175
  %v4213 = vsel %vm4208, %v4137, %v4177
  %v4214 = vsel %vm4208, %v4139, %v4179
  %v4215 = vsel %vm4208, %v4141, %v4181
  %v4216 = vsel %vm4208, %v4143, %v4183
  %v4217 = vsel %vm4208, %v4145, %v4185
  %v4218 = vsel %vm4208, %v4147, %v4187
  %v4219 = vsel %vm4208, %v4149, %v4189
  %v4220 = vsel %vm4208, %v4151, %v4191
  %v4221 = vsel %vm4208, %v4153, %v4193
  %v4222 = vsel %vm4208, %v4155, %v4195
  %v4223 = vsel %vm4208, %v4157, %v4197
  %v4224 = vsel %vm4208, %v4159, %v4199
  %v4225 = vsel %vm4208, %v4161, %v4201
  %v4226 = vsel %vm4208, %v4163, %v4203
  %v4227 = vsel %vm4208, %v4165, %v4205
  %v4228 = vsel %vm4208, %v4167, %v4207
  %v4229 = vsel %vm4208, %v4169, %v4129
  %v4230 = vsel %vm4208, %v4171, %v4131
  %v4231 = vsel %vm4208, %v4173, %v4133
  %v4232 = vsel %vm4208, %v4175, %v4135
  %v4233 = vsel %vm4208, %v4177, %v4137
  %v4234 = vsel %vm4208, %v4179, %v4139
  %v4235 = vsel %vm4208, %v4181, %v4141
  %v4236 = vsel %vm4208, %v4183, %v4143
  %v4237 = vsel %vm4208, %v4185, %v4145
  %v4238 = vsel %vm4208, %v4187, %v4147
  %v4239 = vsel %vm4208, %v4189, %v4149
  %v4240 = vsel %vm4208, %v4191, %v4151
  %v4241 = vsel %vm4208, %v4193, %v4153
  %v4242 = vsel %vm4208, %v4195, %v4155
  %v4243 = vsel %vm4208, %v4197, %v4157
  %v4244 = vsel %vm4208, %v4199, %v4159
  %v4245 = vsel %vm4208, %v4201, %v4161
  %v4246 = vsel %vm4208, %v4203, %v4163
  %v4247 = vsel %vm4208, %v4205, %v4165
  %v4248 = vsel %vm4208, %v4207, %v4167
  %s4249 = scalar_lea.vmem %s7, 1
  %v4250 = vld [vmem:[%s4249] ss:$8 sm:$0x3]
  %v4252 = vlaneseq
  %v4253 = vshrl.u32 %v4252, 7
  %v4254 = vsub.s32 0, %v4253
  %v4255 = vrot.slane %v4250, %v4254
  %v4256 = vlaneseq
  %v4257 = vshrl.u32 %v4256, 7
  %v4258 = vsub.s32 1, %v4257
  %v4259 = vrot.slane %v4250, %v4258
  %v4262 = vmul.f32 %v4229, %v4255
  %v4263 = vmul.f32 %v4209, %v4259
  %v4264 = vmul.f32 %v4230, %v4255
  %v4265 = vmul.f32 %v4210, %v4259
  %v4266 = vmul.f32 %v4231, %v4255
  %v4267 = vmul.f32 %v4211, %v4259
  %v4268 = vmul.f32 %v4232, %v4255
  %v4269 = vmul.f32 %v4212, %v4259
  %v4270 = vmul.f32 %v4233, %v4255
  %v4271 = vmul.f32 %v4213, %v4259
  %v4272 = vmul.f32 %v4234, %v4255
  %v4273 = vmul.f32 %v4214, %v4259
  %v4274 = vmul.f32 %v4235, %v4255
  %v4275 = vmul.f32 %v4215, %v4259
  %v4276 = vmul.f32 %v4236, %v4255
  %v4277 = vmul.f32 %v4216, %v4259
  %v4278 = vmul.f32 %v4237, %v4255
  %v4279 = vmul.f32 %v4217, %v4259
  %v4280 = vmul.f32 %v4238, %v4255
  %v4281 = vmul.f32 %v4218, %v4259
  %v4282 = vmul.f32 %v4239, %v4255
  %v4283 = vmul.f32 %v4219, %v4259
  %v4284 = vmul.f32 %v4240, %v4255
  %v4285 = vmul.f32 %v4220, %v4259
  %v4286 = vmul.f32 %v4241, %v4255
  %v4287 = vmul.f32 %v4221, %v4259
  %v4288 = vmul.f32 %v4242, %v4255
  %v4289 = vmul.f32 %v4222, %v4259
  %v4290 = vmul.f32 %v4243, %v4255
  %v4291 = vmul.f32 %v4223, %v4259
  %v4292 = vmul.f32 %v4244, %v4255
  %v4293 = vmul.f32 %v4224, %v4259
  %v4294 = vmul.f32 %v4245, %v4255
  %v4295 = vmul.f32 %v4225, %v4259
  %v4296 = vmul.f32 %v4246, %v4255
  %v4297 = vmul.f32 %v4226, %v4259
  %v4298 = vmul.f32 %v4247, %v4255
  %v4299 = vmul.f32 %v4227, %v4259
  %v4300 = vmul.f32 %v4248, %v4255
  %v4301 = vmul.f32 %v4228, %v4259
  %v4302 = vadd.f32 %v4088, %v4262
  %v4303 = vadd.f32 %v4089, %v4263
  %v4304 = vadd.f32 %v4090, %v4264
  %v4305 = vadd.f32 %v4091, %v4265
  %v4306 = vadd.f32 %v4092, %v4266
  %v4307 = vadd.f32 %v4093, %v4267
  %v4308 = vadd.f32 %v4094, %v4268
  %v4309 = vadd.f32 %v4095, %v4269
  %v4310 = vadd.f32 %v4096, %v4270
  %v4311 = vadd.f32 %v4097, %v4271
  %v4312 = vadd.f32 %v4098, %v4272
  %v4313 = vadd.f32 %v4099, %v4273
  %v4314 = vadd.f32 %v4100, %v4274
  %v4315 = vadd.f32 %v4101, %v4275
  %v4316 = vadd.f32 %v4102, %v4276
  %v4317 = vadd.f32 %v4103, %v4277
  %v4318 = vadd.f32 %v4104, %v4278
  %v4319 = vadd.f32 %v4105, %v4279
  %v4320 = vadd.f32 %v4106, %v4280
  %v4321 = vadd.f32 %v4107, %v4281
  %v4322 = vadd.f32 %v4108, %v4282
  %v4323 = vadd.f32 %v4109, %v4283
  %v4324 = vadd.f32 %v4110, %v4284
  %v4325 = vadd.f32 %v4111, %v4285
  %v4326 = vadd.f32 %v4112, %v4286
  %v4327 = vadd.f32 %v4113, %v4287
  %v4328 = vadd.f32 %v4114, %v4288
  %v4329 = vadd.f32 %v4115, %v4289
  %v4330 = vadd.f32 %v4116, %v4290
  %v4331 = vadd.f32 %v4117, %v4291
  %v4332 = vadd.f32 %v4118, %v4292
  %v4333 = vadd.f32 %v4119, %v4293
  %v4334 = vadd.f32 %v4120, %v4294
  %v4335 = vadd.f32 %v4121, %v4295
  %v4336 = vadd.f32 %v4122, %v4296
  %v4337 = vadd.f32 %v4123, %v4297
  %v4338 = vadd.f32 %v4124, %v4298
  %v4339 = vadd.f32 %v4125, %v4299
  %v4340 = vadd.f32 %v4126, %v4300
  %v4341 = vadd.f32 %v4127, %v4301
  %4342 = vrot.lane.b32.xlu0 %v3362, 1
  %v4343 = vpop.permute.xlu0 %4342
  %4344 = vrot.lane.b32.xlu0 %v3366, 1
  %v4345 = vpop.permute.xlu0 %4344
  %4346 = vrot.lane.b32.xlu0 %v3372, 1
  %v4347 = vpop.permute.xlu0 %4346
  %4348 = vrot.lane.b32.xlu0 %v3376, 1
  %v4349 = vpop.permute.xlu0 %4348
  %4350 = vrot.lane.b32.xlu0 %v3382, 1
  %v4351 = vpop.permute.xlu0 %4350
  %4352 = vrot.lane.b32.xlu0 %v3386, 1
  %v4353 = vpop.permute.xlu0 %4352
  %4354 = vrot.lane.b32.xlu0 %v3392, 1
  %v4355 = vpop.permute.xlu0 %4354
  %4356 = vrot.lane.b32.xlu0 %v3396, 1
  %v4357 = vpop.permute.xlu0 %4356
  %4358 = vrot.lane.b32.xlu0 %v3402, 1
  %v4359 = vpop.permute.xlu0 %4358
  %4360 = vrot.lane.b32.xlu0 %v3406, 1
  %v4361 = vpop.permute.xlu0 %4360
  %4362 = vrot.lane.b32.xlu0 %v3412, 1
  %v4363 = vpop.permute.xlu0 %4362
  %4364 = vrot.lane.b32.xlu0 %v3416, 1
  %v4365 = vpop.permute.xlu0 %4364
  %4366 = vrot.lane.b32.xlu0 %v3422, 1
  %v4367 = vpop.permute.xlu0 %4366
  %4368 = vrot.lane.b32.xlu0 %v3426, 1
  %v4369 = vpop.permute.xlu0 %4368
  %4370 = vrot.lane.b32.xlu0 %v3432, 1
  %v4371 = vpop.permute.xlu0 %4370
  %4372 = vrot.lane.b32.xlu0 %v3436, 1
  %v4373 = vpop.permute.xlu0 %4372
  %4374 = vrot.lane.b32.xlu0 %v3442, 1
  %v4375 = vpop.permute.xlu0 %4374
  %4376 = vrot.lane.b32.xlu0 %v3446, 1
  %v4377 = vpop.permute.xlu0 %4376
  %4378 = vrot.lane.b32.xlu0 %v3452, 1
  %v4379 = vpop.permute.xlu0 %4378
  %4380 = vrot.lane.b32.xlu0 %v3456, 1
  %v4381 = vpop.permute.xlu0 %4380
  %4382 = vrot.lane.b32.xlu0 %v3364, 1
  %v4383 = vpop.permute.xlu0 %4382
  %4384 = vrot.lane.b32.xlu0 %v3368, 1
  %v4385 = vpop.permute.xlu0 %4384
  %4386 = vrot.lane.b32.xlu0 %v3374, 1
  %v4387 = vpop.permute.xlu0 %4386
  %4388 = vrot.lane.b32.xlu0 %v3378, 1
  %v4389 = vpop.permute.xlu0 %4388
  %4390 = vrot.lane.b32.xlu0 %v3384, 1
  %v4391 = vpop.permute.xlu0 %4390
  %4392 = vrot.lane.b32.xlu0 %v3388, 1
  %v4393 = vpop.permute.xlu0 %4392
  %4394 = vrot.lane.b32.xlu0 %v3394, 1
  %v4395 = vpop.permute.xlu0 %4394
  %4396 = vrot.lane.b32.xlu0 %v3398, 1
  %v4397 = vpop.permute.xlu0 %4396
  %4398 = vrot.lane.b32.xlu0 %v3404, 1
  %v4399 = vpop.permute.xlu0 %4398
  %4400 = vrot.lane.b32.xlu0 %v3408, 1
  %v4401 = vpop.permute.xlu0 %4400
  %4402 = vrot.lane.b32.xlu0 %v3414, 1
  %v4403 = vpop.permute.xlu0 %4402
  %4404 = vrot.lane.b32.xlu0 %v3418, 1
  %v4405 = vpop.permute.xlu0 %4404
  %4406 = vrot.lane.b32.xlu0 %v3424, 1
  %v4407 = vpop.permute.xlu0 %4406
  %4408 = vrot.lane.b32.xlu0 %v3428, 1
  %v4409 = vpop.permute.xlu0 %4408
  %4410 = vrot.lane.b32.xlu0 %v3434, 1
  %v4411 = vpop.permute.xlu0 %4410
  %4412 = vrot.lane.b32.xlu0 %v3438, 1
  %v4413 = vpop.permute.xlu0 %4412
  %4414 = vrot.lane.b32.xlu0 %v3444, 1
  %v4415 = vpop.permute.xlu0 %4414
  %4416 = vrot.lane.b32.xlu0 %v3448, 1
  %v4417 = vpop.permute.xlu0 %4416
  %4418 = vrot.lane.b32.xlu0 %v3454, 1
  %v4419 = vpop.permute.xlu0 %4418
  %4420 = vrot.lane.b32.xlu0 %v3458, 1
  %v4421 = vpop.permute.xlu0 %4420
  %vm4422 = vcmp.lt.s32.totalorder %v3994, 1
  %v4423 = vsel %vm4422, %v4343, %v4383
  %v4424 = vsel %vm4422, %v4345, %v4385
  %v4425 = vsel %vm4422, %v4347, %v4387
  %v4426 = vsel %vm4422, %v4349, %v4389
  %v4427 = vsel %vm4422, %v4351, %v4391
  %v4428 = vsel %vm4422, %v4353, %v4393
  %v4429 = vsel %vm4422, %v4355, %v4395
  %v4430 = vsel %vm4422, %v4357, %v4397
  %v4431 = vsel %vm4422, %v4359, %v4399
  %v4432 = vsel %vm4422, %v4361, %v4401
  %v4433 = vsel %vm4422, %v4363, %v4403
  %v4434 = vsel %vm4422, %v4365, %v4405
  %v4435 = vsel %vm4422, %v4367, %v4407
  %v4436 = vsel %vm4422, %v4369, %v4409
  %v4437 = vsel %vm4422, %v4371, %v4411
  %v4438 = vsel %vm4422, %v4373, %v4413
  %v4439 = vsel %vm4422, %v4375, %v4415
  %v4440 = vsel %vm4422, %v4377, %v4417
  %v4441 = vsel %vm4422, %v4379, %v4419
  %v4442 = vsel %vm4422, %v4381, %v4421
  %v4443 = vsel %vm4422, %v4383, %v4343
  %v4444 = vsel %vm4422, %v4385, %v4345
  %v4445 = vsel %vm4422, %v4387, %v4347
  %v4446 = vsel %vm4422, %v4389, %v4349
  %v4447 = vsel %vm4422, %v4391, %v4351
  %v4448 = vsel %vm4422, %v4393, %v4353
  %v4449 = vsel %vm4422, %v4395, %v4355
  %v4450 = vsel %vm4422, %v4397, %v4357
  %v4451 = vsel %vm4422, %v4399, %v4359
  %v4452 = vsel %vm4422, %v4401, %v4361
  %v4453 = vsel %vm4422, %v4403, %v4363
  %v4454 = vsel %vm4422, %v4405, %v4365
  %v4455 = vsel %vm4422, %v4407, %v4367
  %v4456 = vsel %vm4422, %v4409, %v4369
  %v4457 = vsel %vm4422, %v4411, %v4371
  %v4458 = vsel %vm4422, %v4413, %v4373
  %v4459 = vsel %vm4422, %v4415, %v4375
  %v4460 = vsel %vm4422, %v4417, %v4377
  %v4461 = vsel %vm4422, %v4419, %v4379
  %v4462 = vsel %vm4422, %v4421, %v4381
  %s4463 = scalar_lea.vmem %s7, 2
  %v4464 = vld [vmem:[%s4463] ss:$8 sm:$0x3]
  %v4466 = vlaneseq
  %v4467 = vshrl.u32 %v4466, 7
  %v4468 = vsub.s32 0, %v4467
  %v4469 = vrot.slane %v4464, %v4468
  %v4470 = vlaneseq
  %v4471 = vshrl.u32 %v4470, 7
  %v4472 = vsub.s32 1, %v4471
  %v4473 = vrot.slane %v4464, %v4472
  %v4476 = vmul.f32 %v4443, %v4469
  %v4477 = vmul.f32 %v4423, %v4473
  %v4478 = vmul.f32 %v4444, %v4469
  %v4479 = vmul.f32 %v4424, %v4473
  %v4480 = vmul.f32 %v4445, %v4469
  %v4481 = vmul.f32 %v4425, %v4473
  %v4482 = vmul.f32 %v4446, %v4469
  %v4483 = vmul.f32 %v4426, %v4473
  %v4484 = vmul.f32 %v4447, %v4469
  %v4485 = vmul.f32 %v4427, %v4473
  %v4486 = vmul.f32 %v4448, %v4469
  %v4487 = vmul.f32 %v4428, %v4473
  %v4488 = vmul.f32 %v4449, %v4469
  %v4489 = vmul.f32 %v4429, %v4473
  %v4490 = vmul.f32 %v4450, %v4469
  %v4491 = vmul.f32 %v4430, %v4473
  %v4492 = vmul.f32 %v4451, %v4469
  %v4493 = vmul.f32 %v4431, %v4473
  %v4494 = vmul.f32 %v4452, %v4469
  %v4495 = vmul.f32 %v4432, %v4473
  %v4496 = vmul.f32 %v4453, %v4469
  %v4497 = vmul.f32 %v4433, %v4473
  %v4498 = vmul.f32 %v4454, %v4469
  %v4499 = vmul.f32 %v4434, %v4473
  %v4500 = vmul.f32 %v4455, %v4469
  %v4501 = vmul.f32 %v4435, %v4473
  %v4502 = vmul.f32 %v4456, %v4469
  %v4503 = vmul.f32 %v4436, %v4473
  %v4504 = vmul.f32 %v4457, %v4469
  %v4505 = vmul.f32 %v4437, %v4473
  %v4506 = vmul.f32 %v4458, %v4469
  %v4507 = vmul.f32 %v4438, %v4473
  %v4508 = vmul.f32 %v4459, %v4469
  %v4509 = vmul.f32 %v4439, %v4473
  %v4510 = vmul.f32 %v4460, %v4469
  %v4511 = vmul.f32 %v4440, %v4473
  %v4512 = vmul.f32 %v4461, %v4469
  %v4513 = vmul.f32 %v4441, %v4473
  %v4514 = vmul.f32 %v4462, %v4469
  %v4515 = vmul.f32 %v4442, %v4473
  %v4516 = vadd.f32 %v4302, %v4476
  %v4517 = vadd.f32 %v4303, %v4477
  %v4518 = vadd.f32 %v4304, %v4478
  %v4519 = vadd.f32 %v4305, %v4479
  %v4520 = vadd.f32 %v4306, %v4480
  %v4521 = vadd.f32 %v4307, %v4481
  %v4522 = vadd.f32 %v4308, %v4482
  %v4523 = vadd.f32 %v4309, %v4483
  %v4524 = vadd.f32 %v4310, %v4484
  %v4525 = vadd.f32 %v4311, %v4485
  %v4526 = vadd.f32 %v4312, %v4486
  %v4527 = vadd.f32 %v4313, %v4487
  %v4528 = vadd.f32 %v4314, %v4488
  %v4529 = vadd.f32 %v4315, %v4489
  %v4530 = vadd.f32 %v4316, %v4490
  %v4531 = vadd.f32 %v4317, %v4491
  %v4532 = vadd.f32 %v4318, %v4492
  %v4533 = vadd.f32 %v4319, %v4493
  %v4534 = vadd.f32 %v4320, %v4494
  %v4535 = vadd.f32 %v4321, %v4495
  %v4536 = vadd.f32 %v4322, %v4496
  %v4537 = vadd.f32 %v4323, %v4497
  %v4538 = vadd.f32 %v4324, %v4498
  %v4539 = vadd.f32 %v4325, %v4499
  %v4540 = vadd.f32 %v4326, %v4500
  %v4541 = vadd.f32 %v4327, %v4501
  %v4542 = vadd.f32 %v4328, %v4502
  %v4543 = vadd.f32 %v4329, %v4503
  %v4544 = vadd.f32 %v4330, %v4504
  %v4545 = vadd.f32 %v4331, %v4505
  %v4546 = vadd.f32 %v4332, %v4506
  %v4547 = vadd.f32 %v4333, %v4507
  %v4548 = vadd.f32 %v4334, %v4508
  %v4549 = vadd.f32 %v4335, %v4509
  %v4550 = vadd.f32 %v4336, %v4510
  %v4551 = vadd.f32 %v4337, %v4511
  %v4552 = vadd.f32 %v4338, %v4512
  %v4553 = vadd.f32 %v4339, %v4513
  %v4554 = vadd.f32 %v4340, %v4514
  %v4555 = vadd.f32 %v4341, %v4515
  %4556 = vrot.lane.b32.xlu0 %v3562, 127
  %v4557 = vpop.permute.xlu0 %4556
  %4558 = vrot.lane.b32.xlu0 %v3566, 127
  %v4559 = vpop.permute.xlu0 %4558
  %4560 = vrot.lane.b32.xlu0 %v3572, 127
  %v4561 = vpop.permute.xlu0 %4560
  %4562 = vrot.lane.b32.xlu0 %v3576, 127
  %v4563 = vpop.permute.xlu0 %4562
  %4564 = vrot.lane.b32.xlu0 %v3582, 127
  %v4565 = vpop.permute.xlu0 %4564
  %4566 = vrot.lane.b32.xlu0 %v3586, 127
  %v4567 = vpop.permute.xlu0 %4566
  %4568 = vrot.lane.b32.xlu0 %v3592, 127
  %v4569 = vpop.permute.xlu0 %4568
  %4570 = vrot.lane.b32.xlu0 %v3596, 127
  %v4571 = vpop.permute.xlu0 %4570
  %4572 = vrot.lane.b32.xlu0 %v3602, 127
  %v4573 = vpop.permute.xlu0 %4572
  %4574 = vrot.lane.b32.xlu0 %v3606, 127
  %v4575 = vpop.permute.xlu0 %4574
  %4576 = vrot.lane.b32.xlu0 %v3612, 127
  %v4577 = vpop.permute.xlu0 %4576
  %4578 = vrot.lane.b32.xlu0 %v3616, 127
  %v4579 = vpop.permute.xlu0 %4578
  %4580 = vrot.lane.b32.xlu0 %v3622, 127
  %v4581 = vpop.permute.xlu0 %4580
  %4582 = vrot.lane.b32.xlu0 %v3626, 127
  %v4583 = vpop.permute.xlu0 %4582
  %4584 = vrot.lane.b32.xlu0 %v3632, 127
  %v4585 = vpop.permute.xlu0 %4584
  %4586 = vrot.lane.b32.xlu0 %v3636, 127
  %v4587 = vpop.permute.xlu0 %4586
  %4588 = vrot.lane.b32.xlu0 %v3642, 127
  %v4589 = vpop.permute.xlu0 %4588
  %4590 = vrot.lane.b32.xlu0 %v3646, 127
  %v4591 = vpop.permute.xlu0 %4590
  %4592 = vrot.lane.b32.xlu0 %v3652, 127
  %v4593 = vpop.permute.xlu0 %4592
  %4594 = vrot.lane.b32.xlu0 %v3656, 127
  %v4595 = vpop.permute.xlu0 %4594
  %4596 = vrot.lane.b32.xlu0 %v3564, 127
  %v4597 = vpop.permute.xlu0 %4596
  %4598 = vrot.lane.b32.xlu0 %v3568, 127
  %v4599 = vpop.permute.xlu0 %4598
  %4600 = vrot.lane.b32.xlu0 %v3574, 127
  %v4601 = vpop.permute.xlu0 %4600
  %4602 = vrot.lane.b32.xlu0 %v3578, 127
  %v4603 = vpop.permute.xlu0 %4602
  %4604 = vrot.lane.b32.xlu0 %v3584, 127
  %v4605 = vpop.permute.xlu0 %4604
  %4606 = vrot.lane.b32.xlu0 %v3588, 127
  %v4607 = vpop.permute.xlu0 %4606
  %4608 = vrot.lane.b32.xlu0 %v3594, 127
  %v4609 = vpop.permute.xlu0 %4608
  %4610 = vrot.lane.b32.xlu0 %v3598, 127
  %v4611 = vpop.permute.xlu0 %4610
  %4612 = vrot.lane.b32.xlu0 %v3604, 127
  %v4613 = vpop.permute.xlu0 %4612
  %4614 = vrot.lane.b32.xlu0 %v3608, 127
  %v4615 = vpop.permute.xlu0 %4614
  %4616 = vrot.lane.b32.xlu0 %v3614, 127
  %v4617 = vpop.permute.xlu0 %4616
  %4618 = vrot.lane.b32.xlu0 %v3618, 127
  %v4619 = vpop.permute.xlu0 %4618
  %4620 = vrot.lane.b32.xlu0 %v3624, 127
  %v4621 = vpop.permute.xlu0 %4620
  %4622 = vrot.lane.b32.xlu0 %v3628, 127
  %v4623 = vpop.permute.xlu0 %4622
  %4624 = vrot.lane.b32.xlu0 %v3634, 127
  %v4625 = vpop.permute.xlu0 %4624
  %4626 = vrot.lane.b32.xlu0 %v3638, 127
  %v4627 = vpop.permute.xlu0 %4626
  %4628 = vrot.lane.b32.xlu0 %v3644, 127
  %v4629 = vpop.permute.xlu0 %4628
  %4630 = vrot.lane.b32.xlu0 %v3648, 127
  %v4631 = vpop.permute.xlu0 %4630
  %4632 = vrot.lane.b32.xlu0 %v3654, 127
  %v4633 = vpop.permute.xlu0 %4632
  %4634 = vrot.lane.b32.xlu0 %v3658, 127
  %v4635 = vpop.permute.xlu0 %4634
  %vm4636 = vcmp.lt.s32.totalorder %v3994, 127
  %v4637 = vsel %vm4636, %v4557, %v4597
  %v4638 = vsel %vm4636, %v4559, %v4599
  %v4639 = vsel %vm4636, %v4561, %v4601
  %v4640 = vsel %vm4636, %v4563, %v4603
  %v4641 = vsel %vm4636, %v4565, %v4605
  %v4642 = vsel %vm4636, %v4567, %v4607
  %v4643 = vsel %vm4636, %v4569, %v4609
  %v4644 = vsel %vm4636, %v4571, %v4611
  %v4645 = vsel %vm4636, %v4573, %v4613
  %v4646 = vsel %vm4636, %v4575, %v4615
  %v4647 = vsel %vm4636, %v4577, %v4617
  %v4648 = vsel %vm4636, %v4579, %v4619
  %v4649 = vsel %vm4636, %v4581, %v4621
  %v4650 = vsel %vm4636, %v4583, %v4623
  %v4651 = vsel %vm4636, %v4585, %v4625
  %v4652 = vsel %vm4636, %v4587, %v4627
  %v4653 = vsel %vm4636, %v4589, %v4629
  %v4654 = vsel %vm4636, %v4591, %v4631
  %v4655 = vsel %vm4636, %v4593, %v4633
  %v4656 = vsel %vm4636, %v4595, %v4635
  %v4657 = vsel %vm4636, %v4597, %v4557
  %v4658 = vsel %vm4636, %v4599, %v4559
  %v4659 = vsel %vm4636, %v4601, %v4561
  %v4660 = vsel %vm4636, %v4603, %v4563
  %v4661 = vsel %vm4636, %v4605, %v4565
  %v4662 = vsel %vm4636, %v4607, %v4567
  %v4663 = vsel %vm4636, %v4609, %v4569
  %v4664 = vsel %vm4636, %v4611, %v4571
  %v4665 = vsel %vm4636, %v4613, %v4573
  %v4666 = vsel %vm4636, %v4615, %v4575
  %v4667 = vsel %vm4636, %v4617, %v4577
  %v4668 = vsel %vm4636, %v4619, %v4579
  %v4669 = vsel %vm4636, %v4621, %v4581
  %v4670 = vsel %vm4636, %v4623, %v4583
  %v4671 = vsel %vm4636, %v4625, %v4585
  %v4672 = vsel %vm4636, %v4627, %v4587
  %v4673 = vsel %vm4636, %v4629, %v4589
  %v4674 = vsel %vm4636, %v4631, %v4591
  %v4675 = vsel %vm4636, %v4633, %v4593
  %v4676 = vsel %vm4636, %v4635, %v4595
  %s4677 = scalar_lea.vmem %s7, 4
  %v4678 = vld [vmem:[%s4677] ss:$8 sm:$0x3]
  %v4680 = vlaneseq
  %v4681 = vshrl.u32 %v4680, 7
  %v4682 = vsub.s32 0, %v4681
  %v4683 = vrot.slane %v4678, %v4682
  %v4684 = vlaneseq
  %v4685 = vshrl.u32 %v4684, 7
  %v4686 = vsub.s32 1, %v4685
  %v4687 = vrot.slane %v4678, %v4686
  %v4690 = vmul.f32 %v4637, %v4683
  %v4691 = vmul.f32 %v4657, %v4687
  %v4692 = vmul.f32 %v4638, %v4683
  %v4693 = vmul.f32 %v4658, %v4687
  %v4694 = vmul.f32 %v4639, %v4683
  %v4695 = vmul.f32 %v4659, %v4687
  %v4696 = vmul.f32 %v4640, %v4683
  %v4697 = vmul.f32 %v4660, %v4687
  %v4698 = vmul.f32 %v4641, %v4683
  %v4699 = vmul.f32 %v4661, %v4687
  %v4700 = vmul.f32 %v4642, %v4683
  %v4701 = vmul.f32 %v4662, %v4687
  %v4702 = vmul.f32 %v4643, %v4683
  %v4703 = vmul.f32 %v4663, %v4687
  %v4704 = vmul.f32 %v4644, %v4683
  %v4705 = vmul.f32 %v4664, %v4687
  %v4706 = vmul.f32 %v4645, %v4683
  %v4707 = vmul.f32 %v4665, %v4687
  %v4708 = vmul.f32 %v4646, %v4683
  %v4709 = vmul.f32 %v4666, %v4687
  %v4710 = vmul.f32 %v4647, %v4683
  %v4711 = vmul.f32 %v4667, %v4687
  %v4712 = vmul.f32 %v4648, %v4683
  %v4713 = vmul.f32 %v4668, %v4687
  %v4714 = vmul.f32 %v4649, %v4683
  %v4715 = vmul.f32 %v4669, %v4687
  %v4716 = vmul.f32 %v4650, %v4683
  %v4717 = vmul.f32 %v4670, %v4687
  %v4718 = vmul.f32 %v4651, %v4683
  %v4719 = vmul.f32 %v4671, %v4687
  %v4720 = vmul.f32 %v4652, %v4683
  %v4721 = vmul.f32 %v4672, %v4687
  %v4722 = vmul.f32 %v4653, %v4683
  %v4723 = vmul.f32 %v4673, %v4687
  %v4724 = vmul.f32 %v4654, %v4683
  %v4725 = vmul.f32 %v4674, %v4687
  %v4726 = vmul.f32 %v4655, %v4683
  %v4727 = vmul.f32 %v4675, %v4687
  %v4728 = vmul.f32 %v4656, %v4683
  %v4729 = vmul.f32 %v4676, %v4687
  %v4730 = vadd.f32 %v4516, %v4690
  %v4731 = vadd.f32 %v4517, %v4691
  %v4732 = vadd.f32 %v4518, %v4692
  %v4733 = vadd.f32 %v4519, %v4693
  %v4734 = vadd.f32 %v4520, %v4694
  %v4735 = vadd.f32 %v4521, %v4695
  %v4736 = vadd.f32 %v4522, %v4696
  %v4737 = vadd.f32 %v4523, %v4697
  %v4738 = vadd.f32 %v4524, %v4698
  %v4739 = vadd.f32 %v4525, %v4699
  %v4740 = vadd.f32 %v4526, %v4700
  %v4741 = vadd.f32 %v4527, %v4701
  %v4742 = vadd.f32 %v4528, %v4702
  %v4743 = vadd.f32 %v4529, %v4703
  %v4744 = vadd.f32 %v4530, %v4704
  %v4745 = vadd.f32 %v4531, %v4705
  %v4746 = vadd.f32 %v4532, %v4706
  %v4747 = vadd.f32 %v4533, %v4707
  %v4748 = vadd.f32 %v4534, %v4708
  %v4749 = vadd.f32 %v4535, %v4709
  %v4750 = vadd.f32 %v4536, %v4710
  %v4751 = vadd.f32 %v4537, %v4711
  %v4752 = vadd.f32 %v4538, %v4712
  %v4753 = vadd.f32 %v4539, %v4713
  %v4754 = vadd.f32 %v4540, %v4714
  %v4755 = vadd.f32 %v4541, %v4715
  %v4756 = vadd.f32 %v4542, %v4716
  %v4757 = vadd.f32 %v4543, %v4717
  %v4758 = vadd.f32 %v4544, %v4718
  %v4759 = vadd.f32 %v4545, %v4719
  %v4760 = vadd.f32 %v4546, %v4720
  %v4761 = vadd.f32 %v4547, %v4721
  %v4762 = vadd.f32 %v4548, %v4722
  %v4763 = vadd.f32 %v4549, %v4723
  %v4764 = vadd.f32 %v4550, %v4724
  %v4765 = vadd.f32 %v4551, %v4725
  %v4766 = vadd.f32 %v4552, %v4726
  %v4767 = vadd.f32 %v4553, %v4727
  %v4768 = vadd.f32 %v4554, %v4728
  %v4769 = vadd.f32 %v4555, %v4729
  %4770 = vrot.lane.b32.xlu0 %v3662, 126
  %v4771 = vpop.permute.xlu0 %4770
  %4772 = vrot.lane.b32.xlu0 %v3666, 126
  %v4773 = vpop.permute.xlu0 %4772
  %4774 = vrot.lane.b32.xlu0 %v3672, 126
  %v4775 = vpop.permute.xlu0 %4774
  %4776 = vrot.lane.b32.xlu0 %v3676, 126
  %v4777 = vpop.permute.xlu0 %4776
  %4778 = vrot.lane.b32.xlu0 %v3682, 126
  %v4779 = vpop.permute.xlu0 %4778
  %4780 = vrot.lane.b32.xlu0 %v3686, 126
  %v4781 = vpop.permute.xlu0 %4780
  %4782 = vrot.lane.b32.xlu0 %v3692, 126
  %v4783 = vpop.permute.xlu0 %4782
  %4784 = vrot.lane.b32.xlu0 %v3696, 126
  %v4785 = vpop.permute.xlu0 %4784
  %4786 = vrot.lane.b32.xlu0 %v3702, 126
  %v4787 = vpop.permute.xlu0 %4786
  %4788 = vrot.lane.b32.xlu0 %v3706, 126
  %v4789 = vpop.permute.xlu0 %4788
  %4790 = vrot.lane.b32.xlu0 %v3712, 126
  %v4791 = vpop.permute.xlu0 %4790
  %4792 = vrot.lane.b32.xlu0 %v3716, 126
  %v4793 = vpop.permute.xlu0 %4792
  %4794 = vrot.lane.b32.xlu0 %v3722, 126
  %v4795 = vpop.permute.xlu0 %4794
  %4796 = vrot.lane.b32.xlu0 %v3726, 126
  %v4797 = vpop.permute.xlu0 %4796
  %4798 = vrot.lane.b32.xlu0 %v3732, 126
  %v4799 = vpop.permute.xlu0 %4798
  %4800 = vrot.lane.b32.xlu0 %v3736, 126
  %v4801 = vpop.permute.xlu0 %4800
  %4802 = vrot.lane.b32.xlu0 %v3742, 126
  %v4803 = vpop.permute.xlu0 %4802
  %4804 = vrot.lane.b32.xlu0 %v3746, 126
  %v4805 = vpop.permute.xlu0 %4804
  %4806 = vrot.lane.b32.xlu0 %v3752, 126
  %v4807 = vpop.permute.xlu0 %4806
  %4808 = vrot.lane.b32.xlu0 %v3756, 126
  %v4809 = vpop.permute.xlu0 %4808
  %4810 = vrot.lane.b32.xlu0 %v3664, 126
  %v4811 = vpop.permute.xlu0 %4810
  %4812 = vrot.lane.b32.xlu0 %v3668, 126
  %v4813 = vpop.permute.xlu0 %4812
  %4814 = vrot.lane.b32.xlu0 %v3674, 126
  %v4815 = vpop.permute.xlu0 %4814
  %4816 = vrot.lane.b32.xlu0 %v3678, 126
  %v4817 = vpop.permute.xlu0 %4816
  %4818 = vrot.lane.b32.xlu0 %v3684, 126
  %v4819 = vpop.permute.xlu0 %4818
  %4820 = vrot.lane.b32.xlu0 %v3688, 126
  %v4821 = vpop.permute.xlu0 %4820
  %4822 = vrot.lane.b32.xlu0 %v3694, 126
  %v4823 = vpop.permute.xlu0 %4822
  %4824 = vrot.lane.b32.xlu0 %v3698, 126
  %v4825 = vpop.permute.xlu0 %4824
  %4826 = vrot.lane.b32.xlu0 %v3704, 126
  %v4827 = vpop.permute.xlu0 %4826
  %4828 = vrot.lane.b32.xlu0 %v3708, 126
  %v4829 = vpop.permute.xlu0 %4828
  %4830 = vrot.lane.b32.xlu0 %v3714, 126
  %v4831 = vpop.permute.xlu0 %4830
  %4832 = vrot.lane.b32.xlu0 %v3718, 126
  %v4833 = vpop.permute.xlu0 %4832
  %4834 = vrot.lane.b32.xlu0 %v3724, 126
  %v4835 = vpop.permute.xlu0 %4834
  %4836 = vrot.lane.b32.xlu0 %v3728, 126
  %v4837 = vpop.permute.xlu0 %4836
  %4838 = vrot.lane.b32.xlu0 %v3734, 126
  %v4839 = vpop.permute.xlu0 %4838
  %4840 = vrot.lane.b32.xlu0 %v3738, 126
  %v4841 = vpop.permute.xlu0 %4840
  %4842 = vrot.lane.b32.xlu0 %v3744, 126
  %v4843 = vpop.permute.xlu0 %4842
  %4844 = vrot.lane.b32.xlu0 %v3748, 126
  %v4845 = vpop.permute.xlu0 %4844
  %4846 = vrot.lane.b32.xlu0 %v3754, 126
  %v4847 = vpop.permute.xlu0 %4846
  %4848 = vrot.lane.b32.xlu0 %v3758, 126
  %v4849 = vpop.permute.xlu0 %4848
  %vm4850 = vcmp.lt.s32.totalorder %v3994, 126
  %v4851 = vsel %vm4850, %v4771, %v4811
  %v4852 = vsel %vm4850, %v4773, %v4813
  %v4853 = vsel %vm4850, %v4775, %v4815
  %v4854 = vsel %vm4850, %v4777, %v4817
  %v4855 = vsel %vm4850, %v4779, %v4819
  %v4856 = vsel %vm4850, %v4781, %v4821
  %v4857 = vsel %vm4850, %v4783, %v4823
  %v4858 = vsel %vm4850, %v4785, %v4825
  %v4859 = vsel %vm4850, %v4787, %v4827
  %v4860 = vsel %vm4850, %v4789, %v4829
  %v4861 = vsel %vm4850, %v4791, %v4831
  %v4862 = vsel %vm4850, %v4793, %v4833
  %v4863 = vsel %vm4850, %v4795, %v4835
  %v4864 = vsel %vm4850, %v4797, %v4837
  %v4865 = vsel %vm4850, %v4799, %v4839
  %v4866 = vsel %vm4850, %v4801, %v4841
  %v4867 = vsel %vm4850, %v4803, %v4843
  %v4868 = vsel %vm4850, %v4805, %v4845
  %v4869 = vsel %vm4850, %v4807, %v4847
  %v4870 = vsel %vm4850, %v4809, %v4849
  %v4871 = vsel %vm4850, %v4811, %v4771
  %v4872 = vsel %vm4850, %v4813, %v4773
  %v4873 = vsel %vm4850, %v4815, %v4775
  %v4874 = vsel %vm4850, %v4817, %v4777
  %v4875 = vsel %vm4850, %v4819, %v4779
  %v4876 = vsel %vm4850, %v4821, %v4781
  %v4877 = vsel %vm4850, %v4823, %v4783
  %v4878 = vsel %vm4850, %v4825, %v4785
  %v4879 = vsel %vm4850, %v4827, %v4787
  %v4880 = vsel %vm4850, %v4829, %v4789
  %v4881 = vsel %vm4850, %v4831, %v4791
  %v4882 = vsel %vm4850, %v4833, %v4793
  %v4883 = vsel %vm4850, %v4835, %v4795
  %v4884 = vsel %vm4850, %v4837, %v4797
  %v4885 = vsel %vm4850, %v4839, %v4799
  %v4886 = vsel %vm4850, %v4841, %v4801
  %v4887 = vsel %vm4850, %v4843, %v4803
  %v4888 = vsel %vm4850, %v4845, %v4805
  %v4889 = vsel %vm4850, %v4847, %v4807
  %v4890 = vsel %vm4850, %v4849, %v4809
  %s4891 = scalar_lea.vmem %s7, 5
  %v4892 = vld [vmem:[%s4891] ss:$8 sm:$0x3]
  %v4894 = vlaneseq
  %v4895 = vshrl.u32 %v4894, 7
  %v4896 = vsub.s32 0, %v4895
  %v4897 = vrot.slane %v4892, %v4896
  %v4898 = vlaneseq
  %v4899 = vshrl.u32 %v4898, 7
  %v4900 = vsub.s32 1, %v4899
  %v4901 = vrot.slane %v4892, %v4900
  %v4904 = vmul.f32 %v4851, %v4897
  %v4905 = vmul.f32 %v4871, %v4901
  %v4906 = vmul.f32 %v4852, %v4897
  %v4907 = vmul.f32 %v4872, %v4901
  %v4908 = vmul.f32 %v4853, %v4897
  %v4909 = vmul.f32 %v4873, %v4901
  %v4910 = vmul.f32 %v4854, %v4897
  %v4911 = vmul.f32 %v4874, %v4901
  %v4912 = vmul.f32 %v4855, %v4897
  %v4913 = vmul.f32 %v4875, %v4901
  %v4914 = vmul.f32 %v4856, %v4897
  %v4915 = vmul.f32 %v4876, %v4901
  %v4916 = vmul.f32 %v4857, %v4897
  %v4917 = vmul.f32 %v4877, %v4901
  %v4918 = vmul.f32 %v4858, %v4897
  %v4919 = vmul.f32 %v4878, %v4901
  %v4920 = vmul.f32 %v4859, %v4897
  %v4921 = vmul.f32 %v4879, %v4901
  %v4922 = vmul.f32 %v4860, %v4897
  %v4923 = vmul.f32 %v4880, %v4901
  %v4924 = vmul.f32 %v4861, %v4897
  %v4925 = vmul.f32 %v4881, %v4901
  %v4926 = vmul.f32 %v4862, %v4897
  %v4927 = vmul.f32 %v4882, %v4901
  %v4928 = vmul.f32 %v4863, %v4897
  %v4929 = vmul.f32 %v4883, %v4901
  %v4930 = vmul.f32 %v4864, %v4897
  %v4931 = vmul.f32 %v4884, %v4901
  %v4932 = vmul.f32 %v4865, %v4897
  %v4933 = vmul.f32 %v4885, %v4901
  %v4934 = vmul.f32 %v4866, %v4897
  %v4935 = vmul.f32 %v4886, %v4901
  %v4936 = vmul.f32 %v4867, %v4897
  %v4937 = vmul.f32 %v4887, %v4901
  %v4938 = vmul.f32 %v4868, %v4897
  %v4939 = vmul.f32 %v4888, %v4901
  %v4940 = vmul.f32 %v4869, %v4897
  %v4941 = vmul.f32 %v4889, %v4901
  %v4942 = vmul.f32 %v4870, %v4897
  %v4943 = vmul.f32 %v4890, %v4901
  %v4944 = vadd.f32 %v4730, %v4904
  %v4945 = vadd.f32 %v4731, %v4905
  %v4946 = vadd.f32 %v4732, %v4906
  %v4947 = vadd.f32 %v4733, %v4907
  %v4948 = vadd.f32 %v4734, %v4908
  %v4949 = vadd.f32 %v4735, %v4909
  %v4950 = vadd.f32 %v4736, %v4910
  %v4951 = vadd.f32 %v4737, %v4911
  %v4952 = vadd.f32 %v4738, %v4912
  %v4953 = vadd.f32 %v4739, %v4913
  %v4954 = vadd.f32 %v4740, %v4914
  %v4955 = vadd.f32 %v4741, %v4915
  %v4956 = vadd.f32 %v4742, %v4916
  %v4957 = vadd.f32 %v4743, %v4917
  %v4958 = vadd.f32 %v4744, %v4918
  %v4959 = vadd.f32 %v4745, %v4919
  %v4960 = vadd.f32 %v4746, %v4920
  %v4961 = vadd.f32 %v4747, %v4921
  %v4962 = vadd.f32 %v4748, %v4922
  %v4963 = vadd.f32 %v4749, %v4923
  %v4964 = vadd.f32 %v4750, %v4924
  %v4965 = vadd.f32 %v4751, %v4925
  %v4966 = vadd.f32 %v4752, %v4926
  %v4967 = vadd.f32 %v4753, %v4927
  %v4968 = vadd.f32 %v4754, %v4928
  %v4969 = vadd.f32 %v4755, %v4929
  %v4970 = vadd.f32 %v4756, %v4930
  %v4971 = vadd.f32 %v4757, %v4931
  %v4972 = vadd.f32 %v4758, %v4932
  %v4973 = vadd.f32 %v4759, %v4933
  %v4974 = vadd.f32 %v4760, %v4934
  %v4975 = vadd.f32 %v4761, %v4935
  %v4976 = vadd.f32 %v4762, %v4936
  %v4977 = vadd.f32 %v4763, %v4937
  %v4978 = vadd.f32 %v4764, %v4938
  %v4979 = vadd.f32 %v4765, %v4939
  %v4980 = vadd.f32 %v4766, %v4940
  %v4981 = vadd.f32 %v4767, %v4941
  %v4982 = vadd.f32 %v4768, %v4942
  %v4983 = vadd.f32 %v4769, %v4943
  %4984 = vrot.lane.b32.xlu0 %v3762, 125
  %v4985 = vpop.permute.xlu0 %4984
  %4986 = vrot.lane.b32.xlu0 %v3766, 125
  %v4987 = vpop.permute.xlu0 %4986
  %4988 = vrot.lane.b32.xlu0 %v3772, 125
  %v4989 = vpop.permute.xlu0 %4988
  %4990 = vrot.lane.b32.xlu0 %v3776, 125
  %v4991 = vpop.permute.xlu0 %4990
  %4992 = vrot.lane.b32.xlu0 %v3782, 125
  %v4993 = vpop.permute.xlu0 %4992
  %4994 = vrot.lane.b32.xlu0 %v3786, 125
  %v4995 = vpop.permute.xlu0 %4994
  %4996 = vrot.lane.b32.xlu0 %v3792, 125
  %v4997 = vpop.permute.xlu0 %4996
  %4998 = vrot.lane.b32.xlu0 %v3796, 125
  %v4999 = vpop.permute.xlu0 %4998
  %5000 = vrot.lane.b32.xlu0 %v3802, 125
  %v5001 = vpop.permute.xlu0 %5000
  %5002 = vrot.lane.b32.xlu0 %v3806, 125
  %v5003 = vpop.permute.xlu0 %5002
  %5004 = vrot.lane.b32.xlu0 %v3812, 125
  %v5005 = vpop.permute.xlu0 %5004
  %5006 = vrot.lane.b32.xlu0 %v3816, 125
  %v5007 = vpop.permute.xlu0 %5006
  %5008 = vrot.lane.b32.xlu0 %v3822, 125
  %v5009 = vpop.permute.xlu0 %5008
  %5010 = vrot.lane.b32.xlu0 %v3826, 125
  %v5011 = vpop.permute.xlu0 %5010
  %5012 = vrot.lane.b32.xlu0 %v3832, 125
  %v5013 = vpop.permute.xlu0 %5012
  %5014 = vrot.lane.b32.xlu0 %v3836, 125
  %v5015 = vpop.permute.xlu0 %5014
  %5016 = vrot.lane.b32.xlu0 %v3842, 125
  %v5017 = vpop.permute.xlu0 %5016
  %5018 = vrot.lane.b32.xlu0 %v3846, 125
  %v5019 = vpop.permute.xlu0 %5018
  %5020 = vrot.lane.b32.xlu0 %v3852, 125
  %v5021 = vpop.permute.xlu0 %5020
  %5022 = vrot.lane.b32.xlu0 %v3856, 125
  %v5023 = vpop.permute.xlu0 %5022
  %5024 = vrot.lane.b32.xlu0 %v3764, 125
  %v5025 = vpop.permute.xlu0 %5024
  %5026 = vrot.lane.b32.xlu0 %v3768, 125
  %v5027 = vpop.permute.xlu0 %5026
  %5028 = vrot.lane.b32.xlu0 %v3774, 125
  %v5029 = vpop.permute.xlu0 %5028
  %5030 = vrot.lane.b32.xlu0 %v3778, 125
  %v5031 = vpop.permute.xlu0 %5030
  %5032 = vrot.lane.b32.xlu0 %v3784, 125
  %v5033 = vpop.permute.xlu0 %5032
  %5034 = vrot.lane.b32.xlu0 %v3788, 125
  %v5035 = vpop.permute.xlu0 %5034
  %5036 = vrot.lane.b32.xlu0 %v3794, 125
  %v5037 = vpop.permute.xlu0 %5036
  %5038 = vrot.lane.b32.xlu0 %v3798, 125
  %v5039 = vpop.permute.xlu0 %5038
  %5040 = vrot.lane.b32.xlu0 %v3804, 125
  %v5041 = vpop.permute.xlu0 %5040
  %5042 = vrot.lane.b32.xlu0 %v3808, 125
  %v5043 = vpop.permute.xlu0 %5042
  %5044 = vrot.lane.b32.xlu0 %v3814, 125
  %v5045 = vpop.permute.xlu0 %5044
  %5046 = vrot.lane.b32.xlu0 %v3818, 125
  %v5047 = vpop.permute.xlu0 %5046
  %5048 = vrot.lane.b32.xlu0 %v3824, 125
  %v5049 = vpop.permute.xlu0 %5048
  %5050 = vrot.lane.b32.xlu0 %v3828, 125
  %v5051 = vpop.permute.xlu0 %5050
  %5052 = vrot.lane.b32.xlu0 %v3834, 125
  %v5053 = vpop.permute.xlu0 %5052
  %5054 = vrot.lane.b32.xlu0 %v3838, 125
  %v5055 = vpop.permute.xlu0 %5054
  %5056 = vrot.lane.b32.xlu0 %v3844, 125
  %v5057 = vpop.permute.xlu0 %5056
  %5058 = vrot.lane.b32.xlu0 %v3848, 125
  %v5059 = vpop.permute.xlu0 %5058
  %5060 = vrot.lane.b32.xlu0 %v3854, 125
  %v5061 = vpop.permute.xlu0 %5060
  %5062 = vrot.lane.b32.xlu0 %v3858, 125
  %v5063 = vpop.permute.xlu0 %5062
  %vm5064 = vcmp.lt.s32.totalorder %v3994, 125
  %v5065 = vsel %vm5064, %v4985, %v5025
  %v5066 = vsel %vm5064, %v4987, %v5027
  %v5067 = vsel %vm5064, %v4989, %v5029
  %v5068 = vsel %vm5064, %v4991, %v5031
  %v5069 = vsel %vm5064, %v4993, %v5033
  %v5070 = vsel %vm5064, %v4995, %v5035
  %v5071 = vsel %vm5064, %v4997, %v5037
  %v5072 = vsel %vm5064, %v4999, %v5039
  %v5073 = vsel %vm5064, %v5001, %v5041
  %v5074 = vsel %vm5064, %v5003, %v5043
  %v5075 = vsel %vm5064, %v5005, %v5045
  %v5076 = vsel %vm5064, %v5007, %v5047
  %v5077 = vsel %vm5064, %v5009, %v5049
  %v5078 = vsel %vm5064, %v5011, %v5051
  %v5079 = vsel %vm5064, %v5013, %v5053
  %v5080 = vsel %vm5064, %v5015, %v5055
  %v5081 = vsel %vm5064, %v5017, %v5057
  %v5082 = vsel %vm5064, %v5019, %v5059
  %v5083 = vsel %vm5064, %v5021, %v5061
  %v5084 = vsel %vm5064, %v5023, %v5063
  %v5085 = vsel %vm5064, %v5025, %v4985
  %v5086 = vsel %vm5064, %v5027, %v4987
  %v5087 = vsel %vm5064, %v5029, %v4989
  %v5088 = vsel %vm5064, %v5031, %v4991
  %v5089 = vsel %vm5064, %v5033, %v4993
  %v5090 = vsel %vm5064, %v5035, %v4995
  %v5091 = vsel %vm5064, %v5037, %v4997
  %v5092 = vsel %vm5064, %v5039, %v4999
  %v5093 = vsel %vm5064, %v5041, %v5001
  %v5094 = vsel %vm5064, %v5043, %v5003
  %v5095 = vsel %vm5064, %v5045, %v5005
  %v5096 = vsel %vm5064, %v5047, %v5007
  %v5097 = vsel %vm5064, %v5049, %v5009
  %v5098 = vsel %vm5064, %v5051, %v5011
  %v5099 = vsel %vm5064, %v5053, %v5013
  %v5100 = vsel %vm5064, %v5055, %v5015
  %v5101 = vsel %vm5064, %v5057, %v5017
  %v5102 = vsel %vm5064, %v5059, %v5019
  %v5103 = vsel %vm5064, %v5061, %v5021
  %v5104 = vsel %vm5064, %v5063, %v5023
  %s5105 = scalar_lea.vmem %s7, 6
  %v5106 = vld [vmem:[%s5105] ss:$8 sm:$0x3]
  %v5108 = vlaneseq
  %v5109 = vshrl.u32 %v5108, 7
  %v5110 = vsub.s32 0, %v5109
  %v5111 = vrot.slane %v5106, %v5110
  %v5112 = vlaneseq
  %v5113 = vshrl.u32 %v5112, 7
  %v5114 = vsub.s32 1, %v5113
  %v5115 = vrot.slane %v5106, %v5114
  %v5118 = vmul.f32 %v5065, %v5111
  %v5119 = vmul.f32 %v5085, %v5115
  %v5120 = vmul.f32 %v5066, %v5111
  %v5121 = vmul.f32 %v5086, %v5115
  %v5122 = vmul.f32 %v5067, %v5111
  %v5123 = vmul.f32 %v5087, %v5115
  %v5124 = vmul.f32 %v5068, %v5111
  %v5125 = vmul.f32 %v5088, %v5115
  %v5126 = vmul.f32 %v5069, %v5111
  %v5127 = vmul.f32 %v5089, %v5115
  %v5128 = vmul.f32 %v5070, %v5111
  %v5129 = vmul.f32 %v5090, %v5115
  %v5130 = vmul.f32 %v5071, %v5111
  %v5131 = vmul.f32 %v5091, %v5115
  %v5132 = vmul.f32 %v5072, %v5111
  %v5133 = vmul.f32 %v5092, %v5115
  %v5134 = vmul.f32 %v5073, %v5111
  %v5135 = vmul.f32 %v5093, %v5115
  %v5136 = vmul.f32 %v5074, %v5111
  %v5137 = vmul.f32 %v5094, %v5115
  %v5138 = vmul.f32 %v5075, %v5111
  %v5139 = vmul.f32 %v5095, %v5115
  %v5140 = vmul.f32 %v5076, %v5111
  %v5141 = vmul.f32 %v5096, %v5115
  %v5142 = vmul.f32 %v5077, %v5111
  %v5143 = vmul.f32 %v5097, %v5115
  %v5144 = vmul.f32 %v5078, %v5111
  %v5145 = vmul.f32 %v5098, %v5115
  %v5146 = vmul.f32 %v5079, %v5111
  %v5147 = vmul.f32 %v5099, %v5115
  %v5148 = vmul.f32 %v5080, %v5111
  %v5149 = vmul.f32 %v5100, %v5115
  %v5150 = vmul.f32 %v5081, %v5111
  %v5151 = vmul.f32 %v5101, %v5115
  %v5152 = vmul.f32 %v5082, %v5111
  %v5153 = vmul.f32 %v5102, %v5115
  %v5154 = vmul.f32 %v5083, %v5111
  %v5155 = vmul.f32 %v5103, %v5115
  %v5156 = vmul.f32 %v5084, %v5111
  %v5157 = vmul.f32 %v5104, %v5115
  %v5158 = vadd.f32 %v4944, %v5118
  %v5159 = vadd.f32 %v4945, %v5119
  %v5160 = vadd.f32 %v4946, %v5120
  %v5161 = vadd.f32 %v4947, %v5121
  %v5162 = vadd.f32 %v4948, %v5122
  %v5163 = vadd.f32 %v4949, %v5123
  %v5164 = vadd.f32 %v4950, %v5124
  %v5165 = vadd.f32 %v4951, %v5125
  %v5166 = vadd.f32 %v4952, %v5126
  %v5167 = vadd.f32 %v4953, %v5127
  %v5168 = vadd.f32 %v4954, %v5128
  %v5169 = vadd.f32 %v4955, %v5129
  %v5170 = vadd.f32 %v4956, %v5130
  %v5171 = vadd.f32 %v4957, %v5131
  %v5172 = vadd.f32 %v4958, %v5132
  %v5173 = vadd.f32 %v4959, %v5133
  %v5174 = vadd.f32 %v4960, %v5134
  %v5175 = vadd.f32 %v4961, %v5135
  %v5176 = vadd.f32 %v4962, %v5136
  %v5177 = vadd.f32 %v4963, %v5137
  %v5178 = vadd.f32 %v4964, %v5138
  %v5179 = vadd.f32 %v4965, %v5139
  %v5180 = vadd.f32 %v4966, %v5140
  %v5181 = vadd.f32 %v4967, %v5141
  %v5182 = vadd.f32 %v4968, %v5142
  %v5183 = vadd.f32 %v4969, %v5143
  %v5184 = vadd.f32 %v4970, %v5144
  %v5185 = vadd.f32 %v4971, %v5145
  %v5186 = vadd.f32 %v4972, %v5146
  %v5187 = vadd.f32 %v4973, %v5147
  %v5188 = vadd.f32 %v4974, %v5148
  %v5189 = vadd.f32 %v4975, %v5149
  %v5190 = vadd.f32 %v4976, %v5150
  %v5191 = vadd.f32 %v4977, %v5151
  %v5192 = vadd.f32 %v4978, %v5152
  %v5193 = vadd.f32 %v4979, %v5153
  %v5194 = vadd.f32 %v4980, %v5154
  %v5195 = vadd.f32 %v4981, %v5155
  %v5196 = vadd.f32 %v4982, %v5156
  %v5197 = vadd.f32 %v4983, %v5157
  %v5198 = vadd.f32 %v5158, %v5159
  %5199 = vadd.xlane.f32.xlu0 %v5198
  %v5200 = vpop.xlane.xlu0 %5199
  %v5201 = vadd.f32 %v5160, %v5161
  %5202 = vadd.xlane.f32.xlu0 %v5201
  %v5203 = vpop.xlane.xlu0 %5202
  %v5204 = vadd.f32 %v5162, %v5163
  %5205 = vadd.xlane.f32.xlu0 %v5204
  %v5206 = vpop.xlane.xlu0 %5205
  %v5207 = vadd.f32 %v5164, %v5165
  %5208 = vadd.xlane.f32.xlu0 %v5207
  %v5209 = vpop.xlane.xlu0 %5208
  %v5210 = vadd.f32 %v5166, %v5167
  %5211 = vadd.xlane.f32.xlu0 %v5210
  %v5212 = vpop.xlane.xlu0 %5211
  %v5213 = vadd.f32 %v5168, %v5169
  %5214 = vadd.xlane.f32.xlu0 %v5213
  %v5215 = vpop.xlane.xlu0 %5214
  %v5216 = vadd.f32 %v5170, %v5171
  %5217 = vadd.xlane.f32.xlu0 %v5216
  %v5218 = vpop.xlane.xlu0 %5217
  %v5219 = vadd.f32 %v5172, %v5173
  %5220 = vadd.xlane.f32.xlu0 %v5219
  %v5221 = vpop.xlane.xlu0 %5220
  %v5222 = vadd.f32 %v5174, %v5175
  %5223 = vadd.xlane.f32.xlu0 %v5222
  %v5224 = vpop.xlane.xlu0 %5223
  %v5225 = vadd.f32 %v5176, %v5177
  %5226 = vadd.xlane.f32.xlu0 %v5225
  %v5227 = vpop.xlane.xlu0 %5226
  %v5228 = vadd.f32 %v5178, %v5179
  %5229 = vadd.xlane.f32.xlu0 %v5228
  %v5230 = vpop.xlane.xlu0 %5229
  %v5231 = vadd.f32 %v5180, %v5181
  %5232 = vadd.xlane.f32.xlu0 %v5231
  %v5233 = vpop.xlane.xlu0 %5232
  %v5234 = vadd.f32 %v5182, %v5183
  %5235 = vadd.xlane.f32.xlu0 %v5234
  %v5236 = vpop.xlane.xlu0 %5235
  %v5237 = vadd.f32 %v5184, %v5185
  %5238 = vadd.xlane.f32.xlu0 %v5237
  %v5239 = vpop.xlane.xlu0 %5238
  %v5240 = vadd.f32 %v5186, %v5187
  %5241 = vadd.xlane.f32.xlu0 %v5240
  %v5242 = vpop.xlane.xlu0 %5241
  %v5243 = vadd.f32 %v5188, %v5189
  %5244 = vadd.xlane.f32.xlu0 %v5243
  %v5245 = vpop.xlane.xlu0 %5244
  %v5246 = vadd.f32 %v5190, %v5191
  %5247 = vadd.xlane.f32.xlu0 %v5246
  %v5248 = vpop.xlane.xlu0 %5247
  %v5249 = vadd.f32 %v5192, %v5193
  %5250 = vadd.xlane.f32.xlu0 %v5249
  %v5251 = vpop.xlane.xlu0 %5250
  %v5252 = vadd.f32 %v5194, %v5195
  %5253 = vadd.xlane.f32.xlu0 %v5252
  %v5254 = vpop.xlane.xlu0 %5253
  %v5255 = vadd.f32 %v5196, %v5197
  %5256 = vadd.xlane.f32.xlu0 %v5255
  %v5257 = vpop.xlane.xlu0 %5256
  %v5258 = vmul.f32 %v5200, 0.0069444445
  %v5259 = vmul.f32 %v5203, 0.0069444445
  %v5260 = vmul.f32 %v5206, 0.0069444445
  %v5261 = vmul.f32 %v5209, 0.0069444445
  %v5262 = vmul.f32 %v5212, 0.0069444445
  %v5263 = vmul.f32 %v5215, 0.0069444445
  %v5264 = vmul.f32 %v5218, 0.0069444445
  %v5265 = vmul.f32 %v5221, 0.0069444445
  %v5266 = vmul.f32 %v5224, 0.0069444445
  %v5267 = vmul.f32 %v5227, 0.0069444445
  %v5268 = vmul.f32 %v5230, 0.0069444445
  %v5269 = vmul.f32 %v5233, 0.0069444445
  %v5270 = vmul.f32 %v5236, 0.0069444445
  %v5271 = vmul.f32 %v5239, 0.0069444445
  %v5272 = vmul.f32 %v5242, 0.0069444445
  %v5273 = vmul.f32 %v5245, 0.0069444445
  %v5274 = vmul.f32 %v5248, 0.0069444445
  %v5275 = vmul.f32 %v5251, 0.0069444445
  %v5276 = vmul.f32 %v5254, 0.0069444445
  %v5277 = vmul.f32 %v5257, 0.0069444445
  %v5278 = vsub.f32 %v5158, %v5258
  %v5279 = vsub.f32 %v5159, %v5258
  %v5280 = vsub.f32 %v5160, %v5259
  %v5281 = vsub.f32 %v5161, %v5259
  %v5282 = vsub.f32 %v5162, %v5260
  %v5283 = vsub.f32 %v5163, %v5260
  %v5284 = vsub.f32 %v5164, %v5261
  %v5285 = vsub.f32 %v5165, %v5261
  %v5286 = vsub.f32 %v5166, %v5262
  %v5287 = vsub.f32 %v5167, %v5262
  %v5288 = vsub.f32 %v5168, %v5263
  %v5289 = vsub.f32 %v5169, %v5263
  %v5290 = vsub.f32 %v5170, %v5264
  %v5291 = vsub.f32 %v5171, %v5264
  %v5292 = vsub.f32 %v5172, %v5265
  %v5293 = vsub.f32 %v5173, %v5265
  %v5294 = vsub.f32 %v5174, %v5266
  %v5295 = vsub.f32 %v5175, %v5266
  %v5296 = vsub.f32 %v5176, %v5267
  %v5297 = vsub.f32 %v5177, %v5267
  %v5298 = vsub.f32 %v5178, %v5268
  %v5299 = vsub.f32 %v5179, %v5268
  %v5300 = vsub.f32 %v5180, %v5269
  %v5301 = vsub.f32 %v5181, %v5269
  %v5302 = vsub.f32 %v5182, %v5270
  %v5303 = vsub.f32 %v5183, %v5270
  %v5304 = vsub.f32 %v5184, %v5271
  %v5305 = vsub.f32 %v5185, %v5271
  %v5306 = vsub.f32 %v5186, %v5272
  %v5307 = vsub.f32 %v5187, %v5272
  %v5308 = vsub.f32 %v5188, %v5273
  %v5309 = vsub.f32 %v5189, %v5273
  %v5310 = vsub.f32 %v5190, %v5274
  %v5311 = vsub.f32 %v5191, %v5274
  %v5312 = vsub.f32 %v5192, %v5275
  %v5313 = vsub.f32 %v5193, %v5275
  %v5314 = vsub.f32 %v5194, %v5276
  %v5315 = vsub.f32 %v5195, %v5276
  %v5316 = vsub.f32 %v5196, %v5277
  %v5317 = vsub.f32 %v5197, %v5277
  %v5318 = vmul.f32 %v5278, %v3866
  %v5319 = vmul.f32 %v5279, %v3870
  %v5320 = vmul.f32 %v5280, %v3866
  %v5321 = vmul.f32 %v5281, %v3870
  %v5322 = vmul.f32 %v5282, %v3866
  %v5323 = vmul.f32 %v5283, %v3870
  %v5324 = vmul.f32 %v5284, %v3866
  %v5325 = vmul.f32 %v5285, %v3870
  %v5326 = vmul.f32 %v5286, %v3866
  %v5327 = vmul.f32 %v5287, %v3870
  %v5328 = vmul.f32 %v5288, %v3866
  %v5329 = vmul.f32 %v5289, %v3870
  %v5330 = vmul.f32 %v5290, %v3866
  %v5331 = vmul.f32 %v5291, %v3870
  %v5332 = vmul.f32 %v5292, %v3866
  %v5333 = vmul.f32 %v5293, %v3870
  %v5334 = vmul.f32 %v5294, %v3866
  %v5335 = vmul.f32 %v5295, %v3870
  %v5336 = vmul.f32 %v5296, %v3866
  %v5337 = vmul.f32 %v5297, %v3870
  %v5338 = vmul.f32 %v5298, %v3866
  %v5339 = vmul.f32 %v5299, %v3870
  %v5340 = vmul.f32 %v5300, %v3866
  %v5341 = vmul.f32 %v5301, %v3870
  %v5342 = vmul.f32 %v5302, %v3866
  %v5343 = vmul.f32 %v5303, %v3870
  %v5344 = vmul.f32 %v5304, %v3866
  %v5345 = vmul.f32 %v5305, %v3870
  %v5346 = vmul.f32 %v5306, %v3866
  %v5347 = vmul.f32 %v5307, %v3870
  %v5348 = vmul.f32 %v5308, %v3866
  %v5349 = vmul.f32 %v5309, %v3870
  %v5350 = vmul.f32 %v5310, %v3866
  %v5351 = vmul.f32 %v5311, %v3870
  %v5352 = vmul.f32 %v5312, %v3866
  %v5353 = vmul.f32 %v5313, %v3870
  %v5354 = vmul.f32 %v5314, %v3866
  %v5355 = vmul.f32 %v5315, %v3870
  %v5356 = vmul.f32 %v5316, %v3866
  %v5357 = vmul.f32 %v5317, %v3870
  %v5358 = vmul.f32 %v5318, %v5318
  %v5359 = vmul.f32 %v5319, %v5319
  %v5360 = vmul.f32 %v5320, %v5320
  %v5361 = vmul.f32 %v5321, %v5321
  %v5362 = vmul.f32 %v5322, %v5322
  %v5363 = vmul.f32 %v5323, %v5323
  %v5364 = vmul.f32 %v5324, %v5324
  %v5365 = vmul.f32 %v5325, %v5325
  %v5366 = vmul.f32 %v5326, %v5326
  %v5367 = vmul.f32 %v5327, %v5327
  %v5368 = vmul.f32 %v5328, %v5328
  %v5369 = vmul.f32 %v5329, %v5329
  %v5370 = vmul.f32 %v5330, %v5330
  %v5371 = vmul.f32 %v5331, %v5331
  %v5372 = vmul.f32 %v5332, %v5332
  %v5373 = vmul.f32 %v5333, %v5333
  %v5374 = vmul.f32 %v5334, %v5334
  %v5375 = vmul.f32 %v5335, %v5335
  %v5376 = vmul.f32 %v5336, %v5336
  %v5377 = vmul.f32 %v5337, %v5337
  %v5378 = vmul.f32 %v5338, %v5338
  %v5379 = vmul.f32 %v5339, %v5339
  %v5380 = vmul.f32 %v5340, %v5340
  %v5381 = vmul.f32 %v5341, %v5341
  %v5382 = vmul.f32 %v5342, %v5342
  %v5383 = vmul.f32 %v5343, %v5343
  %v5384 = vmul.f32 %v5344, %v5344
  %v5385 = vmul.f32 %v5345, %v5345
  %v5386 = vmul.f32 %v5346, %v5346
  %v5387 = vmul.f32 %v5347, %v5347
  %v5388 = vmul.f32 %v5348, %v5348
  %v5389 = vmul.f32 %v5349, %v5349
  %v5390 = vmul.f32 %v5350, %v5350
  %v5391 = vmul.f32 %v5351, %v5351
  %v5392 = vmul.f32 %v5352, %v5352
  %v5393 = vmul.f32 %v5353, %v5353
  %v5394 = vmul.f32 %v5354, %v5354
  %v5395 = vmul.f32 %v5355, %v5355
  %v5396 = vmul.f32 %v5356, %v5356
  %v5397 = vmul.f32 %v5357, %v5357
  %v5398 = vadd.f32 %v5358, %v5359
  %5399 = vadd.xlane.f32.xlu0 %v5398
  %v5400 = vpop.xlane.xlu0 %5399
  %v5401 = vadd.f32 %v5360, %v5361
  %5402 = vadd.xlane.f32.xlu0 %v5401
  %v5403 = vpop.xlane.xlu0 %5402
  %v5404 = vadd.f32 %v5362, %v5363
  %5405 = vadd.xlane.f32.xlu0 %v5404
  %v5406 = vpop.xlane.xlu0 %5405
  %v5407 = vadd.f32 %v5364, %v5365
  %5408 = vadd.xlane.f32.xlu0 %v5407
  %v5409 = vpop.xlane.xlu0 %5408
  %v5410 = vadd.f32 %v5366, %v5367
  %5411 = vadd.xlane.f32.xlu0 %v5410
  %v5412 = vpop.xlane.xlu0 %5411
  %v5413 = vadd.f32 %v5368, %v5369
  %5414 = vadd.xlane.f32.xlu0 %v5413
  %v5415 = vpop.xlane.xlu0 %5414
  %v5416 = vadd.f32 %v5370, %v5371
  %5417 = vadd.xlane.f32.xlu0 %v5416
  %v5418 = vpop.xlane.xlu0 %5417
  %v5419 = vadd.f32 %v5372, %v5373
  %5420 = vadd.xlane.f32.xlu0 %v5419
  %v5421 = vpop.xlane.xlu0 %5420
  %v5422 = vadd.f32 %v5374, %v5375
  %5423 = vadd.xlane.f32.xlu0 %v5422
  %v5424 = vpop.xlane.xlu0 %5423
  %v5425 = vadd.f32 %v5376, %v5377
  %5426 = vadd.xlane.f32.xlu0 %v5425
  %v5427 = vpop.xlane.xlu0 %5426
  %v5428 = vadd.f32 %v5378, %v5379
  %5429 = vadd.xlane.f32.xlu0 %v5428
  %v5430 = vpop.xlane.xlu0 %5429
  %v5431 = vadd.f32 %v5380, %v5381
  %5432 = vadd.xlane.f32.xlu0 %v5431
  %v5433 = vpop.xlane.xlu0 %5432
  %v5434 = vadd.f32 %v5382, %v5383
  %5435 = vadd.xlane.f32.xlu0 %v5434
  %v5436 = vpop.xlane.xlu0 %5435
  %v5437 = vadd.f32 %v5384, %v5385
  %5438 = vadd.xlane.f32.xlu0 %v5437
  %v5439 = vpop.xlane.xlu0 %5438
  %v5440 = vadd.f32 %v5386, %v5387
  %5441 = vadd.xlane.f32.xlu0 %v5440
  %v5442 = vpop.xlane.xlu0 %5441
  %v5443 = vadd.f32 %v5388, %v5389
  %5444 = vadd.xlane.f32.xlu0 %v5443
  %v5445 = vpop.xlane.xlu0 %5444
  %v5446 = vadd.f32 %v5390, %v5391
  %5447 = vadd.xlane.f32.xlu0 %v5446
  %v5448 = vpop.xlane.xlu0 %5447
  %v5449 = vadd.f32 %v5392, %v5393
  %5450 = vadd.xlane.f32.xlu0 %v5449
  %v5451 = vpop.xlane.xlu0 %5450
  %v5452 = vadd.f32 %v5394, %v5395
  %5453 = vadd.xlane.f32.xlu0 %v5452
  %v5454 = vpop.xlane.xlu0 %5453
  %v5455 = vadd.f32 %v5396, %v5397
  %5456 = vadd.xlane.f32.xlu0 %v5455
  %v5457 = vpop.xlane.xlu0 %5456
  %v5458 = vmul.f32 %v5400, 0.0069444445
  %v5459 = vmul.f32 %v5403, 0.0069444445
  %v5460 = vmul.f32 %v5406, 0.0069444445
  %v5461 = vmul.f32 %v5409, 0.0069444445
  %v5462 = vmul.f32 %v5412, 0.0069444445
  %v5463 = vmul.f32 %v5415, 0.0069444445
  %v5464 = vmul.f32 %v5418, 0.0069444445
  %v5465 = vmul.f32 %v5421, 0.0069444445
  %v5466 = vmul.f32 %v5424, 0.0069444445
  %v5467 = vmul.f32 %v5427, 0.0069444445
  %v5468 = vmul.f32 %v5430, 0.0069444445
  %v5469 = vmul.f32 %v5433, 0.0069444445
  %v5470 = vmul.f32 %v5436, 0.0069444445
  %v5471 = vmul.f32 %v5439, 0.0069444445
  %v5472 = vmul.f32 %v5442, 0.0069444445
  %v5473 = vmul.f32 %v5445, 0.0069444445
  %v5474 = vmul.f32 %v5448, 0.0069444445
  %v5475 = vmul.f32 %v5451, 0.0069444445
  %v5476 = vmul.f32 %v5454, 0.0069444445
  %v5477 = vmul.f32 %v5457, 0.0069444445
  %v5478 = vld [vmem:[%s5] sm:$0xff]
  %v5479 = vld [vmem:[%s5 + $0x8] sm:$0xff]
  %v5480 = vld [vmem:[%s5 + $0x10] sm:$0xff]
  %v5481 = vld [vmem:[%s5 + $0x18] sm:$0xff]
  %v5482 = vld [vmem:[%s5 + $0x20] sm:$0xff]
  %v5483 = vld [vmem:[%s5 + $0x28] sm:$0xff]
  %v5484 = vld [vmem:[%s5 + $0x30] sm:$0xff]
  %v5485 = vld [vmem:[%s5 + $0x38] sm:$0xff]
  %v5486 = vld [vmem:[%s5 + $0x40] sm:$0xff]
  %v5487 = vld [vmem:[%s5 + $0x48] sm:$0xff]
  %v5488 = vld [vmem:[%s5 + $0x50] sm:$0xff]
  %v5489 = vld [vmem:[%s5 + $0x58] sm:$0xff]
  %v5490 = vld [vmem:[%s5 + $0x60] sm:$0xff]
  %v5491 = vld [vmem:[%s5 + $0x68] sm:$0xff]
  %v5492 = vld [vmem:[%s5 + $0x70] sm:$0xff]
  %v5493 = vld [vmem:[%s5 + $0x78] sm:$0xff]
  %v5494 = vld [vmem:[%s5 + $0x80] sm:$0xff]
  %v5495 = vld [vmem:[%s5 + $0x88] sm:$0xff]
  %v5496 = vld [vmem:[%s5 + $0x90] sm:$0xff]
  %v5497 = vld [vmem:[%s5 + $0x98] sm:$0xff]
  %v5498 = vadd.f32 %v5458, 0.001
  %v5499 = vadd.f32 %v5459, 0.001
  %v5500 = vadd.f32 %v5460, 0.001
  %v5501 = vadd.f32 %v5461, 0.001
  %v5502 = vadd.f32 %v5462, 0.001
  %v5503 = vadd.f32 %v5463, 0.001
  %v5504 = vadd.f32 %v5464, 0.001
  %v5505 = vadd.f32 %v5465, 0.001
  %v5506 = vadd.f32 %v5466, 0.001
  %v5507 = vadd.f32 %v5467, 0.001
  %v5508 = vadd.f32 %v5468, 0.001
  %v5509 = vadd.f32 %v5469, 0.001
  %v5510 = vadd.f32 %v5470, 0.001
  %v5511 = vadd.f32 %v5471, 0.001
  %v5512 = vadd.f32 %v5472, 0.001
  %v5513 = vadd.f32 %v5473, 0.001
  %v5514 = vadd.f32 %v5474, 0.001
  %v5515 = vadd.f32 %v5475, 0.001
  %v5516 = vadd.f32 %v5476, 0.001
  %v5517 = vadd.f32 %v5477, 0.001
  %v5518 = vrsqrt.pop %v5498
  %v5519 = vrsqrt.pop %v5499
  %v5520 = vrsqrt.pop %v5500
  %v5521 = vrsqrt.pop %v5501
  %v5522 = vrsqrt.pop %v5502
  %v5523 = vrsqrt.pop %v5503
  %v5524 = vrsqrt.pop %v5504
  %v5525 = vrsqrt.pop %v5505
  %v5526 = vrsqrt.pop %v5506
  %v5527 = vrsqrt.pop %v5507
  %v5528 = vrsqrt.pop %v5508
  %v5529 = vrsqrt.pop %v5509
  %v5530 = vrsqrt.pop %v5510
  %v5531 = vrsqrt.pop %v5511
  %v5532 = vrsqrt.pop %v5512
  %v5533 = vrsqrt.pop %v5513
  %v5534 = vrsqrt.pop %v5514
  %v5535 = vrsqrt.pop %v5515
  %v5536 = vrsqrt.pop %v5516
  %v5537 = vrsqrt.pop %v5517
  %v5538 = vmul.f32 %v5478, %v5518
  %v5539 = vmul.f32 %v5479, %v5519
  %v5540 = vmul.f32 %v5480, %v5520
  %v5541 = vmul.f32 %v5481, %v5521
  %v5542 = vmul.f32 %v5482, %v5522
  %v5543 = vmul.f32 %v5483, %v5523
  %v5544 = vmul.f32 %v5484, %v5524
  %v5545 = vmul.f32 %v5485, %v5525
  %v5546 = vmul.f32 %v5486, %v5526
  %v5547 = vmul.f32 %v5487, %v5527
  %v5548 = vmul.f32 %v5488, %v5528
  %v5549 = vmul.f32 %v5489, %v5529
  %v5550 = vmul.f32 %v5490, %v5530
  %v5551 = vmul.f32 %v5491, %v5531
  %v5552 = vmul.f32 %v5492, %v5532
  %v5553 = vmul.f32 %v5493, %v5533
  %v5554 = vmul.f32 %v5494, %v5534
  %v5555 = vmul.f32 %v5495, %v5535
  %v5556 = vmul.f32 %v5496, %v5536
  %v5557 = vmul.f32 %v5497, %v5537
  %5559 = vset.pattern.permute.xlu0 0
  %5560 = vperm.xlu0 %5559, %v5538
  %v5561 = vpop.permute.xlu0 %5560
  %5564 = vset.pattern.permute.xlu0 0
  %5565 = vperm.xlu0 %5564, %v5539
  %v5566 = vpop.permute.xlu0 %5565
  %5569 = vset.pattern.permute.xlu0 0
  %5570 = vperm.xlu0 %5569, %v5540
  %v5571 = vpop.permute.xlu0 %5570
  %5574 = vset.pattern.permute.xlu0 0
  %5575 = vperm.xlu0 %5574, %v5541
  %v5576 = vpop.permute.xlu0 %5575
  %5579 = vset.pattern.permute.xlu0 0
  %5580 = vperm.xlu0 %5579, %v5542
  %v5581 = vpop.permute.xlu0 %5580
  %5584 = vset.pattern.permute.xlu0 0
  %5585 = vperm.xlu0 %5584, %v5543
  %v5586 = vpop.permute.xlu0 %5585
  %5589 = vset.pattern.permute.xlu0 0
  %5590 = vperm.xlu0 %5589, %v5544
  %v5591 = vpop.permute.xlu0 %5590
  %5594 = vset.pattern.permute.xlu0 0
  %5595 = vperm.xlu0 %5594, %v5545
  %v5596 = vpop.permute.xlu0 %5595
  %5599 = vset.pattern.permute.xlu0 0
  %5600 = vperm.xlu0 %5599, %v5546
  %v5601 = vpop.permute.xlu0 %5600
  %5604 = vset.pattern.permute.xlu0 0
  %5605 = vperm.xlu0 %5604, %v5547
  %v5606 = vpop.permute.xlu0 %5605
  %5609 = vset.pattern.permute.xlu0 0
  %5610 = vperm.xlu0 %5609, %v5548
  %v5611 = vpop.permute.xlu0 %5610
  %5614 = vset.pattern.permute.xlu0 0
  %5615 = vperm.xlu0 %5614, %v5549
  %v5616 = vpop.permute.xlu0 %5615
  %5619 = vset.pattern.permute.xlu0 0
  %5620 = vperm.xlu0 %5619, %v5550
  %v5621 = vpop.permute.xlu0 %5620
  %5624 = vset.pattern.permute.xlu0 0
  %5625 = vperm.xlu0 %5624, %v5551
  %v5626 = vpop.permute.xlu0 %5625
  %5629 = vset.pattern.permute.xlu0 0
  %5630 = vperm.xlu0 %5629, %v5552
  %v5631 = vpop.permute.xlu0 %5630
  %5634 = vset.pattern.permute.xlu0 0
  %5635 = vperm.xlu0 %5634, %v5553
  %v5636 = vpop.permute.xlu0 %5635
  %5639 = vset.pattern.permute.xlu0 0
  %5640 = vperm.xlu0 %5639, %v5554
  %v5641 = vpop.permute.xlu0 %5640
  %5644 = vset.pattern.permute.xlu0 0
  %5645 = vperm.xlu0 %5644, %v5555
  %v5646 = vpop.permute.xlu0 %5645
  %5649 = vset.pattern.permute.xlu0 0
  %5650 = vperm.xlu0 %5649, %v5556
  %v5651 = vpop.permute.xlu0 %5650
  %5654 = vset.pattern.permute.xlu0 0
  %5655 = vperm.xlu0 %5654, %v5557
  %v5656 = vpop.permute.xlu0 %5655
  %v5658 = vmul.f32 %v5318, %v5561
  %v5659 = vmul.f32 %v5319, %v5561
  %v5660 = vmul.f32 %v5320, %v5566
  %v5661 = vmul.f32 %v5321, %v5566
  %v5662 = vmul.f32 %v5322, %v5571
  %v5663 = vmul.f32 %v5323, %v5571
  %v5664 = vmul.f32 %v5324, %v5576
  %v5665 = vmul.f32 %v5325, %v5576
  %v5666 = vmul.f32 %v5326, %v5581
  %v5667 = vmul.f32 %v5327, %v5581
  %v5668 = vmul.f32 %v5328, %v5586
  %v5669 = vmul.f32 %v5329, %v5586
  %v5670 = vmul.f32 %v5330, %v5591
  %v5671 = vmul.f32 %v5331, %v5591
  %v5672 = vmul.f32 %v5332, %v5596
  %v5673 = vmul.f32 %v5333, %v5596
  %v5674 = vmul.f32 %v5334, %v5601
  %v5675 = vmul.f32 %v5335, %v5601
  %v5676 = vmul.f32 %v5336, %v5606
  %v5677 = vmul.f32 %v5337, %v5606
  %v5678 = vmul.f32 %v5338, %v5611
  %v5679 = vmul.f32 %v5339, %v5611
  %v5680 = vmul.f32 %v5340, %v5616
  %v5681 = vmul.f32 %v5341, %v5616
  %v5682 = vmul.f32 %v5342, %v5621
  %v5683 = vmul.f32 %v5343, %v5621
  %v5684 = vmul.f32 %v5344, %v5626
  %v5685 = vmul.f32 %v5345, %v5626
  %v5686 = vmul.f32 %v5346, %v5631
  %v5687 = vmul.f32 %v5347, %v5631
  %v5688 = vmul.f32 %v5348, %v5636
  %v5689 = vmul.f32 %v5349, %v5636
  %v5690 = vmul.f32 %v5350, %v5641
  %v5691 = vmul.f32 %v5351, %v5641
  %v5692 = vmul.f32 %v5352, %v5646
  %v5693 = vmul.f32 %v5353, %v5646
  %v5694 = vmul.f32 %v5354, %v5651
  %v5695 = vmul.f32 %v5355, %v5651
  %v5696 = vmul.f32 %v5356, %v5656
  %v5697 = vmul.f32 %v5357, %v5656
  %v5698 = vld [vmem:[%s6] sm:$0xff]
  %v5699 = vld [vmem:[%s6 + $0x8] sm:$0xff]
  %v5700 = vld [vmem:[%s6 + $0x10] sm:$0xff]
  %v5701 = vld [vmem:[%s6 + $0x18] sm:$0xff]
  %v5702 = vld [vmem:[%s6 + $0x20] sm:$0xff]
  %v5703 = vld [vmem:[%s6 + $0x28] sm:$0xff]
  %v5704 = vld [vmem:[%s6 + $0x30] sm:$0xff]
  %v5705 = vld [vmem:[%s6 + $0x38] sm:$0xff]
  %v5706 = vld [vmem:[%s6 + $0x40] sm:$0xff]
  %v5707 = vld [vmem:[%s6 + $0x48] sm:$0xff]
  %v5708 = vld [vmem:[%s6 + $0x50] sm:$0xff]
  %v5709 = vld [vmem:[%s6 + $0x58] sm:$0xff]
  %v5710 = vld [vmem:[%s6 + $0x60] sm:$0xff]
  %v5711 = vld [vmem:[%s6 + $0x68] sm:$0xff]
  %v5712 = vld [vmem:[%s6 + $0x70] sm:$0xff]
  %v5713 = vld [vmem:[%s6 + $0x78] sm:$0xff]
  %v5714 = vld [vmem:[%s6 + $0x80] sm:$0xff]
  %v5715 = vld [vmem:[%s6 + $0x88] sm:$0xff]
  %v5716 = vld [vmem:[%s6 + $0x90] sm:$0xff]
  %v5717 = vld [vmem:[%s6 + $0x98] sm:$0xff]
  %5719 = vset.pattern.permute.xlu0 0
  %5720 = vperm.xlu0 %5719, %v5698
  %v5721 = vpop.permute.xlu0 %5720
  %5724 = vset.pattern.permute.xlu0 0
  %5725 = vperm.xlu0 %5724, %v5699
  %v5726 = vpop.permute.xlu0 %5725
  %5729 = vset.pattern.permute.xlu0 0
  %5730 = vperm.xlu0 %5729, %v5700
  %v5731 = vpop.permute.xlu0 %5730
  %5734 = vset.pattern.permute.xlu0 0
  %5735 = vperm.xlu0 %5734, %v5701
  %v5736 = vpop.permute.xlu0 %5735
  %5739 = vset.pattern.permute.xlu0 0
  %5740 = vperm.xlu0 %5739, %v5702
  %v5741 = vpop.permute.xlu0 %5740
  %5744 = vset.pattern.permute.xlu0 0
  %5745 = vperm.xlu0 %5744, %v5703
  %v5746 = vpop.permute.xlu0 %5745
  %5749 = vset.pattern.permute.xlu0 0
  %5750 = vperm.xlu0 %5749, %v5704
  %v5751 = vpop.permute.xlu0 %5750
  %5754 = vset.pattern.permute.xlu0 0
  %5755 = vperm.xlu0 %5754, %v5705
  %v5756 = vpop.permute.xlu0 %5755
  %5759 = vset.pattern.permute.xlu0 0
  %5760 = vperm.xlu0 %5759, %v5706
  %v5761 = vpop.permute.xlu0 %5760
  %5764 = vset.pattern.permute.xlu0 0
  %5765 = vperm.xlu0 %5764, %v5707
  %v5766 = vpop.permute.xlu0 %5765
  %5769 = vset.pattern.permute.xlu0 0
  %5770 = vperm.xlu0 %5769, %v5708
  %v5771 = vpop.permute.xlu0 %5770
  %5774 = vset.pattern.permute.xlu0 0
  %5775 = vperm.xlu0 %5774, %v5709
  %v5776 = vpop.permute.xlu0 %5775
  %5779 = vset.pattern.permute.xlu0 0
  %5780 = vperm.xlu0 %5779, %v5710
  %v5781 = vpop.permute.xlu0 %5780
  %5784 = vset.pattern.permute.xlu0 0
  %5785 = vperm.xlu0 %5784, %v5711
  %v5786 = vpop.permute.xlu0 %5785
  %5789 = vset.pattern.permute.xlu0 0
  %5790 = vperm.xlu0 %5789, %v5712
  %v5791 = vpop.permute.xlu0 %5790
  %5794 = vset.pattern.permute.xlu0 0
  %5795 = vperm.xlu0 %5794, %v5713
  %v5796 = vpop.permute.xlu0 %5795
  %5799 = vset.pattern.permute.xlu0 0
  %5800 = vperm.xlu0 %5799, %v5714
  %v5801 = vpop.permute.xlu0 %5800
  %5804 = vset.pattern.permute.xlu0 0
  %5805 = vperm.xlu0 %5804, %v5715
  %v5806 = vpop.permute.xlu0 %5805
  %5809 = vset.pattern.permute.xlu0 0
  %5810 = vperm.xlu0 %5809, %v5716
  %v5811 = vpop.permute.xlu0 %5810
  %5814 = vset.pattern.permute.xlu0 0
  %5815 = vperm.xlu0 %5814, %v5717
  %v5816 = vpop.permute.xlu0 %5815
  %v5818 = vadd.f32 %v5658, %v5721
  %v5819 = vadd.f32 %v5659, %v5721
  %v5820 = vadd.f32 %v5660, %v5726
  %v5821 = vadd.f32 %v5661, %v5726
  %v5822 = vadd.f32 %v5662, %v5731
  %v5823 = vadd.f32 %v5663, %v5731
  %v5824 = vadd.f32 %v5664, %v5736
  %v5825 = vadd.f32 %v5665, %v5736
  %v5826 = vadd.f32 %v5666, %v5741
  %v5827 = vadd.f32 %v5667, %v5741
  %v5828 = vadd.f32 %v5668, %v5746
  %v5829 = vadd.f32 %v5669, %v5746
  %v5830 = vadd.f32 %v5670, %v5751
  %v5831 = vadd.f32 %v5671, %v5751
  %v5832 = vadd.f32 %v5672, %v5756
  %v5833 = vadd.f32 %v5673, %v5756
  %v5834 = vadd.f32 %v5674, %v5761
  %v5835 = vadd.f32 %v5675, %v5761
  %v5836 = vadd.f32 %v5676, %v5766
  %v5837 = vadd.f32 %v5677, %v5766
  %v5838 = vadd.f32 %v5678, %v5771
  %v5839 = vadd.f32 %v5679, %v5771
  %v5840 = vadd.f32 %v5680, %v5776
  %v5841 = vadd.f32 %v5681, %v5776
  %v5842 = vadd.f32 %v5682, %v5781
  %v5843 = vadd.f32 %v5683, %v5781
  %v5844 = vadd.f32 %v5684, %v5786
  %v5845 = vadd.f32 %v5685, %v5786
  %v5846 = vadd.f32 %v5686, %v5791
  %v5847 = vadd.f32 %v5687, %v5791
  %v5848 = vadd.f32 %v5688, %v5796
  %v5849 = vadd.f32 %v5689, %v5796
  %v5850 = vadd.f32 %v5690, %v5801
  %v5851 = vadd.f32 %v5691, %v5801
  %v5852 = vadd.f32 %v5692, %v5806
  %v5853 = vadd.f32 %v5693, %v5806
  %v5854 = vadd.f32 %v5694, %v5811
  %v5855 = vadd.f32 %v5695, %v5811
  %v5856 = vadd.f32 %v5696, %v5816
  %v5857 = vadd.f32 %v5697, %v5816
  %5858 = vst [vmem:[%s8] sm:$0xff] %v5818
  %5859 = vst.msk [vmem:[%s8 + $0x8] sm:$0xff] %vm1365, %v5819
  %5860 = vst [vmem:[%s8 + $0x10] sm:$0xff] %v5820
  %5861 = vst.msk [vmem:[%s8 + $0x18] sm:$0xff] %vm1365, %v5821
  %5862 = vst [vmem:[%s8 + $0x20] sm:$0xff] %v5822
  %5863 = vst.msk [vmem:[%s8 + $0x28] sm:$0xff] %vm1365, %v5823
  %5864 = vst [vmem:[%s8 + $0x30] sm:$0xff] %v5824
  %5865 = vst.msk [vmem:[%s8 + $0x38] sm:$0xff] %vm1365, %v5825
  %5866 = vst [vmem:[%s8 + $0x40] sm:$0xff] %v5826
  %5867 = vst.msk [vmem:[%s8 + $0x48] sm:$0xff] %vm1365, %v5827
  %5868 = vst [vmem:[%s8 + $0x50] sm:$0xff] %v5828
  %5869 = vst.msk [vmem:[%s8 + $0x58] sm:$0xff] %vm1365, %v5829
  %5870 = vst [vmem:[%s8 + $0x60] sm:$0xff] %v5830
  %5871 = vst.msk [vmem:[%s8 + $0x68] sm:$0xff] %vm1365, %v5831
  %5872 = vst [vmem:[%s8 + $0x70] sm:$0xff] %v5832
  %5873 = vst.msk [vmem:[%s8 + $0x78] sm:$0xff] %vm1365, %v5833
  %5874 = vst [vmem:[%s8 + $0x80] sm:$0xff] %v5834
  %5875 = vst.msk [vmem:[%s8 + $0x88] sm:$0xff] %vm1365, %v5835
  %5876 = vst [vmem:[%s8 + $0x90] sm:$0xff] %v5836
  %5877 = vst.msk [vmem:[%s8 + $0x98] sm:$0xff] %vm1365, %v5837
  %5878 = vst [vmem:[%s8 + $0xa0] sm:$0xff] %v5838
  %5879 = vst.msk [vmem:[%s8 + $0xa8] sm:$0xff] %vm1365, %v5839
  %5880 = vst [vmem:[%s8 + $0xb0] sm:$0xff] %v5840
  %5881 = vst.msk [vmem:[%s8 + $0xb8] sm:$0xff] %vm1365, %v5841
  %5882 = vst [vmem:[%s8 + $0xc0] sm:$0xff] %v5842
  %5883 = vst.msk [vmem:[%s8 + $0xc8] sm:$0xff] %vm1365, %v5843
  %5884 = vst [vmem:[%s8 + $0xd0] sm:$0xff] %v5844
  %5885 = vst.msk [vmem:[%s8 + $0xd8] sm:$0xff] %vm1365, %v5845
  %5886 = vst [vmem:[%s8 + $0xe0] sm:$0xff] %v5846
  %5887 = vst.msk [vmem:[%s8 + $0xe8] sm:$0xff] %vm1365, %v5847
  %5888 = vst [vmem:[%s8 + $0xf0] sm:$0xff] %v5848
  %5889 = vst.msk [vmem:[%s8 + $0xf8] sm:$0xff] %vm1365, %v5849
  %5890 = vst [vmem:[%s8 + $0x100] sm:$0xff] %v5850
  %5891 = vst.msk [vmem:[%s8 + $0x108] sm:$0xff] %vm1365, %v5851
  %5892 = vst [vmem:[%s8 + $0x110] sm:$0xff] %v5852
  %5893 = vst.msk [vmem:[%s8 + $0x118] sm:$0xff] %vm1365, %v5853
  %5894 = vst [vmem:[%s8 + $0x120] sm:$0xff] %v5854
  %5895 = vst.msk [vmem:[%s8 + $0x128] sm:$0xff] %vm1365, %v5855
  %5896 = vst [vmem:[%s8 + $0x130] sm:$0xff] %v5856
  %5897 = vst.msk [vmem:[%s8 + $0x138] sm:$0xff] %vm1365, %v5857
  // Predicated region
  $region34: #{forward.1} parent=0 // pred_check
    _
  $region35: #{forward.1} parent=0 // pred_check_branch
    %5899 = sbr.rel (0) target = $region37
  $region36: #{forward.1} parent=0 // pred_region
    _
  $region37: #{forward.1} parent=0 // pred_fallthru
    _
  // Predicated region
  $region38: #{forward.1} parent=0 // pred_check
    _
  $region39: #{forward.1} parent=0 // pred_check_branch
    %5901 = sbr.rel (0) target = $region41
  $region40: #{forward.1} parent=0 // pred_region
    _
  $region41: #{forward.1} parent=0 // pred_fallthru
    _

</llo_original>
